<compile_context>
chip_gen: v7x
topology: tpu7x:2x2x1
jax: 0.10.0
libtpu: 0.0.40
codegen_flags: <defaults>
</compile_context>

<pallas_src>
import jax
import jax.numpy as jnp
import numpy as np
from jax.experimental import pallas as pl
from jax.experimental.pallas import tpu as pltpu


def _lstm_layer_kernel(x_ref, wx_ref, wh_ref, b_ref, h0_ref, c0_ref,
                       out_ref, h_ref, c_ref, proj_ref):
    """One LSTM layer over a chunk of T timesteps.

    x_ref   : (T*B, Din)  compute dtype (bf16)  -- this chunk of the input sequence
    wx_ref  : (Din, 4H)   compute dtype
    wh_ref  : (H, 4H)     compute dtype
    b_ref   : (1, 4H)     f32  (i2h bias + h2h bias)
    h0_ref  : (B, H)      f32  initial hidden state
    c0_ref  : (B, H)      f32  initial cell state
    out_ref : (T*B, H)    out dtype -- this chunk of the layer's output sequence
    h_ref   : (B, H)      f32  final hidden state (doubles as carried recurrent state)
    c_ref   : (B, H)      f32  final cell state   (doubles as carried recurrent state)
    proj_ref: (T*B, 4H)   f32  scratch holding the hoisted input projection
    """
    TB, _ = x_ref.shape
    B, H = h_ref.shape
    T = TB // B
    chunk = pl.program_id(0)

    # Load the initial recurrent state once. h_ref / c_ref have a constant block
    # index, so they stay resident in VMEM across grid steps and are written back
    # to HBM only after the last chunk.
    @pl.when(chunk == 0)
    def _():
        h_ref[...] = h0_ref[...]
        c_ref[...] = c0_ref[...]

    # Hoisted input projection for the whole chunk: one large bf16 MXU matmul with
    # fp32 accumulation; the (1, 4H) bias broadcast happens once per chunk, not
    # once per timestep.
    proj_ref[...] = (
        jnp.dot(x_ref[...], wx_ref[...], preferred_element_type=jnp.float32)
        + b_ref[...]
    )

    h = h_ref[...]            # (B, H) f32
    c = c_ref[...]            # (B, H) f32
    mm_dtype = wh_ref.dtype   # bf16 operands for the recurrent matmul

    # Short static inner loop over the chunk: one fused recurrent matmul plus
    # VPU/EUP elementwise work per step.
    for t in range(T):
        row = t * B
        gates = proj_ref[row:row + B, :] + jnp.dot(
            h.astype(mm_dtype), wh_ref[...], preferred_element_type=jnp.float32)
        i_gate = jax.nn.sigmoid(gates[:, 0 * H:1 * H])
        f_gate = jax.nn.sigmoid(gates[:, 1 * H:2 * H])
        o_gate = jax.nn.sigmoid(gates[:, 2 * H:3 * H])
        c_gate = jnp.tanh(gates[:, 3 * H:4 * H])
        c = f_gate * c + i_gate * c_gate
        h = o_gate * jnp.tanh(c)
        out_ref[row:row + B, :] = h.astype(out_ref.dtype)

    # Carry the state to the next chunk (and, after the last chunk, to HBM).
    h_ref[...] = h
    c_ref[...] = c


def _lstm_single_layer(x2, wx, wh, b, h0, c0, *, chunk_steps, out_dtype):
    """Run one LSTM layer over the whole sequence.

    x2: (S*B, Din); returns (out2 (S*B, H), h_final (B, H), c_final (B, H)).
    """
    B, H = h0.shape
    SB, Din = x2.shape
    S = SB // B
    T = chunk_steps
    n_chunks = S // T
    G = 4 * H

    grid_spec = pltpu.PrefetchScalarGridSpec(
        num_scalar_prefetch=0,
        grid=(n_chunks,),
        in_specs=[
            pl.BlockSpec((T * B, Din), lambda i: (i, 0)),   # x chunk
            pl.BlockSpec((Din, G), lambda i: (0, 0)),       # Wx (grid-invariant)
            pl.BlockSpec((H, G), lambda i: (0, 0)),         # Wh (grid-invariant)
            pl.BlockSpec((1, G), lambda i: (0, 0)),         # bias (grid-invariant)
            pl.BlockSpec((B, H), lambda i: (0, 0)),         # h0 (grid-invariant)
            pl.BlockSpec((B, H), lambda i: (0, 0)),         # c0 (grid-invariant)
        ],
        out_specs=[
            pl.BlockSpec((T * B, H), lambda i: (i, 0)),     # output sequence chunk
            pl.BlockSpec((B, H), lambda i: (0, 0)),         # h_final (VMEM-resident)
            pl.BlockSpec((B, H), lambda i: (0, 0)),         # c_final (VMEM-resident)
        ],
        scratch_shapes=[pltpu.VMEM((T * B, G), jnp.float32)],  # hoisted x-projection
    )

    out_shapes = (
        jax.ShapeDtypeStruct((SB, H), out_dtype),
        jax.ShapeDtypeStruct((B, H), h0.dtype),
        jax.ShapeDtypeStruct((B, H), c0.dtype),
    )

    # Explicit VMEM budget (scales with the actual block footprint).
    w_itemsize = jnp.dtype(wx.dtype).itemsize
    x_itemsize = jnp.dtype(x2.dtype).itemsize
    out_itemsize = jnp.dtype(out_dtype).itemsize
    block_bytes = (
        2 * T * B * Din * x_itemsize        # x chunk (double-buffered)
        + 2 * T * B * H * out_itemsize      # out chunk (double-buffered)
        + 2 * (Din + H) * G * w_itemsize    # weights
        + 2 * G * 4                         # bias
        + 8 * B * H * 4                     # h0 / c0 / h_final / c_final
        + T * B * G * 4                     # projection scratch
    )
    vmem_limit = int(min(64 * 2 ** 20, max(16 * 2 ** 20, 2 * block_bytes)))

    return pl.pallas_call(
        _lstm_layer_kernel,
        out_shape=out_shapes,
        grid_spec=grid_spec,
        input_output_aliases={4: 1, 5: 2},   # h0 -> h_final, c0 -> c_final
        compiler_params=pltpu.CompilerParams(
            dimension_semantics=("arbitrary",),   # time recurrence is sequential
            vmem_limit_bytes=vmem_limit,
        ),
    )(x2, wx, wh, b, h0, c0)


def lstm_layer_forward(x, h0, c0, params, *, chunk_steps=8,
                       compute_dtype=jnp.bfloat16):
    """x: (S, B, D), h0/c0: (L, B, H), params: list of (Wx, Wh, b) per layer.

    Returns (outputs (S, B, H), h_final (L, B, H), c_final (L, B, H)).
    """
    S, B, D = x.shape
    L, _, H = h0.shape

    # Timesteps per grid step (amortizes the fixed per-grid-step overhead).
    T = min(S, chunk_steps)
    while S % T != 0:
        T -= 1

    # Keep the sequence activations as a lane-dense 2D (S*B, feature) slab between
    # layers; intermediate layers emit bf16 to halve HBM traffic, the last layer
    # emits the caller's dtype.
    inp = x.reshape(S * B, D).astype(compute_dtype)

    h_finals, c_finals = [], []
    for l, (wx, wh, b) in enumerate(params):
        out_dtype = x.dtype if l == L - 1 else compute_dtype
        out2, h_f, c_f = _lstm_single_layer(
            inp,
            wx.astype(compute_dtype),
            wh.astype(compute_dtype),
            b.astype(jnp.float32),
            h0[l].astype(jnp.float32),
            c0[l].astype(jnp.float32),
            chunk_steps=T,
            out_dtype=out_dtype,
        )
        h_finals.append(h_f)
        c_finals.append(c_f)
        inp = out2

    outputs = inp.reshape(S, B, H)
    h_final = jnp.stack(h_finals).astype(x.dtype)
    c_final = jnp.stack(c_finals).astype(x.dtype)
    return outputs, h_final, c_final


def lstm_layer_reference(x, h0, c0, params):
    """Pure-JAX fp32 reference mirroring the PyTorch module exactly."""
    S, B, D = x.shape
    L, _, H = h0.shape
    h = [h0[i] for i in range(L)]
    c = [c0[i] for i in range(L)]
    outs = []
    for t in range(S):
        inp = x[t]
        for i, (wx, wh, b) in enumerate(params):
            gates = inp @ wx + h[i] @ wh + b
            ig = jax.nn.sigmoid(gates[:, 0 * H:1 * H])
            fg = jax.nn.sigmoid(gates[:, 1 * H:2 * H])
            og = jax.nn.sigmoid(gates[:, 2 * H:3 * H])
            cg = jnp.tanh(gates[:, 3 * H:4 * H])
            c[i] = fg * c[i] + ig * cg
            h[i] = og * jnp.tanh(c[i])
            inp = h[i]
        outs.append(inp)
    return jnp.stack(outs), (jnp.stack(h), jnp.stack(c))


def init_params(key, d_model, hidden_size, num_layers):
    params = []
    for i in range(num_layers):
        in_dim = d_model if i == 0 else hidden_size
        key, k1, k2, k3, k4 = jax.random.split(key, 5)
        bound_x = 1.0 / np.sqrt(in_dim)
        bound_h = 1.0 / np.sqrt(hidden_size)
        wx = jax.random.uniform(k1, (in_dim, 4 * hidden_size), jnp.float32,
                                -bound_x, bound_x)
        wh = jax.random.uniform(k2, (hidden_size, 4 * hidden_size), jnp.float32,
                                -bound_h, bound_h)
        # Combined i2h + h2h biases (PyTorch Linear has a bias in each).
        bx = jax.random.uniform(k3, (1, 4 * hidden_size), jnp.float32, -bound_x, bound_x)
        bh = jax.random.uniform(k4, (1, 4 * hidden_size), jnp.float32, -bound_h, bound_h)
        params.append((wx, wh, bx + bh))
    return params


if __name__ == "__main__":
    # Small but lane-friendly shapes: B multiple of 8, H multiple of 128.
    seq_len, batch, d_model, hidden_size, num_layers = 16, 8, 32, 128, 2

    key = jax.random.PRNGKey(0)
    kx, kh, kc, kp = jax.random.split(key, 4)
    x = jax.random.normal(kx, (seq_len, batch, d_model), jnp.float32)
    h0 = jax.random.normal(kh, (num_layers, batch, hidden_size), jnp.float32)
    c0 = jax.random.normal(kc, (num_layers, batch, hidden_size), jnp.float32)
    params = init_params(kp, d_model, hidden_size, num_layers)

    outputs, h_final, c_final = lstm_layer_forward(x, h0, c0, params, chunk_steps=8)
    jax.block_until_ready((outputs, h_final, c_final))

    ref_out, (ref_h, ref_c) = lstm_layer_reference(x, h0, c0, params)
    # bf16 matmul operands / inter-layer activations (fp32 accumulation and gate
    # math) -> compare with mixed-precision tolerances.
    np.testing.assert_allclose(np.asarray(outputs), np.asarray(ref_out),
                               rtol=2e-2, atol=2e-2)
    np.testing.assert_allclose(np.asarray(h_final), np.asarray(ref_h),
                               rtol=2e-2, atol=2e-2)
    np.testing.assert_allclose(np.asarray(c_final), np.asarray(ref_c),
                               rtol=2e-2, atol=2e-2)

    print("KERNEL_OK")
</pallas_src>

<mosaic_0001>
module attributes {stable_mosaic.version = 11 : i64} {
  func.func @_lstm_layer_kernel(%arg0: i32, %arg1: memref<64x32xbf16, #tpu.memory_space<vmem>>, %arg2: memref<32x512xbf16, #tpu.memory_space<vmem>>, %arg3: memref<128x512xbf16, #tpu.memory_space<vmem>>, %arg4: memref<1x512xf32, #tpu.memory_space<vmem>>, %arg5: memref<8x128xf32, #tpu.memory_space<vmem>>, %arg6: memref<8x128xf32, #tpu.memory_space<vmem>>, %arg7: memref<64x128xbf16, #tpu.memory_space<vmem>>, %arg8: memref<8x128xf32, #tpu.memory_space<vmem>>, %arg9: memref<8x128xf32, #tpu.memory_space<vmem>>, %arg10: memref<64x512xf32, #tpu.memory_space<vmem>>) attributes {dimension_semantics = [#tpu.dimension_semantics<arbitrary>], iteration_bounds = array<i64: 2>, scalar_prefetch = 0 : i64, scratch_operands = 1 : i64, tpu.core_type = #tpu.core_type<tc>, window_params = [{transform_indices = @transform_0, window_bounds = array<i64: 64, 32>}, {pipeline_mode = #tpu.pipeline_mode<synchronous>, transform_indices = @transform_1, window_bounds = array<i64: 32, 512>}, {pipeline_mode = #tpu.pipeline_mode<synchronous>, transform_indices = @transform_2, window_bounds = array<i64: 128, 512>}, {pipeline_mode = #tpu.pipeline_mode<synchronous>, transform_indices = @transform_3, window_bounds = array<i64: 1, 512>}, {pipeline_mode = #tpu.pipeline_mode<synchronous>, transform_indices = @transform_4, window_bounds = array<i64: 8, 128>}, {pipeline_mode = #tpu.pipeline_mode<synchronous>, transform_indices = @transform_5, window_bounds = array<i64: 8, 128>}, {transform_indices = @transform_6, window_bounds = array<i64: 64, 128>}, {pipeline_mode = #tpu.pipeline_mode<synchronous>, transform_indices = @transform_7, window_bounds = array<i64: 8, 128>}, {pipeline_mode = #tpu.pipeline_mode<synchronous>, transform_indices = @transform_8, window_bounds = array<i64: 8, 128>}]} {
    %c0_i32 = arith.constant 0 : i32
    %0 = arith.cmpi eq, %arg0, %c0_i32 : i32
    %1 = arith.extui %0 : i1 to i32
    %c0_i32_0 = arith.constant 0 : i32
    %2 = arith.cmpi ne, %1, %c0_i32_0 : i32
    scf.if %2 {
      %c0_89 = arith.constant 0 : index
      %c0_90 = arith.constant 0 : index
      %270 = vector.load %arg5[%c0_89, %c0_90] : memref<8x128xf32, #tpu.memory_space<vmem>>, vector<8x128xf32>
      %c0_91 = arith.constant 0 : index
      %c0_92 = arith.constant 0 : index
      %271 = vector.load %arg8[%c0_91, %c0_92] : memref<8x128xf32, #tpu.memory_space<vmem>>, vector<8x128xf32>
      tpu.vector_store %arg8[%c0_91, %c0_92], %270 {strides = array<i32>} : memref<8x128xf32, #tpu.memory_space<vmem>>, vector<8x128xf32>,
      %c0_93 = arith.constant 0 : index
      %c0_94 = arith.constant 0 : index
      %272 = vector.load %arg6[%c0_93, %c0_94] : memref<8x128xf32, #tpu.memory_space<vmem>>, vector<8x128xf32>
      %c0_95 = arith.constant 0 : index
      %c0_96 = arith.constant 0 : index
      %273 = vector.load %arg9[%c0_95, %c0_96] : memref<8x128xf32, #tpu.memory_space<vmem>>, vector<8x128xf32>
      tpu.vector_store %arg9[%c0_95, %c0_96], %272 {strides = array<i32>} : memref<8x128xf32, #tpu.memory_space<vmem>>, vector<8x128xf32>,
    } else {
    }
    %c0 = arith.constant 0 : index
    %c0_1 = arith.constant 0 : index
    %3 = vector.load %arg1[%c0, %c0_1] : memref<64x32xbf16, #tpu.memory_space<vmem>>, vector<64x32xbf16>
    %c0_2 = arith.constant 0 : index
    %c0_3 = arith.constant 0 : index
    %4 = vector.load %arg2[%c0_2, %c0_3] : memref<32x512xbf16, #tpu.memory_space<vmem>>, vector<32x512xbf16>
    %cst = arith.constant dense<0.000000e+00> : vector<64x512xf32>
    %5 = tpu.matmul %3, %4, %cst {dimension_numbers = #tpu.dot_dimension_numbers<[1], [0], [0], [1], [0, 0, 1, 1], [], []>} : vector<64x32xbf16>, vector<32x512xbf16>, vector<64x512xf32> -> vector<64x512xf32>
    %c0_4 = arith.constant 0 : index
    %c0_5 = arith.constant 0 : index
    %6 = vector.load %arg4[%c0_4, %c0_5] : memref<1x512xf32, #tpu.memory_space<vmem>>, vector<1x512xf32>
    %7 = vector.broadcast %6 : vector<1x512xf32> to vector<64x512xf32>
    %8 = arith.addf %5, %7 : vector<64x512xf32>
    %c0_6 = arith.constant 0 : index
    %c0_7 = arith.constant 0 : index
    %9 = vector.load %arg10[%c0_6, %c0_7] : memref<64x512xf32, #tpu.memory_space<vmem>>, vector<64x512xf32>
    tpu.vector_store %arg10[%c0_6, %c0_7], %8 {strides = array<i32>} : memref<64x512xf32, #tpu.memory_space<vmem>>, vector<64x512xf32>,
    %c0_8 = arith.constant 0 : index
    %c0_9 = arith.constant 0 : index
    %10 = vector.load %arg8[%c0_8, %c0_9] : memref<8x128xf32, #tpu.memory_space<vmem>>, vector<8x128xf32>
    %c0_10 = arith.constant 0 : index
    %c0_11 = arith.constant 0 : index
    %11 = vector.load %arg9[%c0_10, %c0_11] : memref<8x128xf32, #tpu.memory_space<vmem>>, vector<8x128xf32>
    %c0_12 = arith.constant 0 : index
    %c0_13 = arith.constant 0 : index
    %12 = vector.load %arg10[%c0_12, %c0_13] : memref<64x512xf32, #tpu.memory_space<vmem>>, vector<8x512xf32>
    %13 = arith.truncf %10 : vector<8x128xf32> to vector<8x128xbf16>
    %c0_14 = arith.constant 0 : index
    %c0_15 = arith.constant 0 : index
    %14 = vector.load %arg3[%c0_14, %c0_15] : memref<128x512xbf16, #tpu.memory_space<vmem>>, vector<128x512xbf16>
    %cst_16 = arith.constant dense<0.000000e+00> : vector<8x512xf32>
    %15 = tpu.matmul %13, %14, %cst_16 {dimension_numbers = #tpu.dot_dimension_numbers<[1], [0], [0], [1], [0, 0, 1, 1], [], []>} : vector<8x128xbf16>, vector<128x512xbf16>, vector<8x512xf32> -> vector<8x512xf32>
    %16 = arith.addf %12, %15 : vector<8x512xf32>
    %17 = vector.extract_strided_slice %16 {offsets = [0, 0], sizes = [8, 128], strides = [1, 1]} : vector<8x512xf32> to vector<8x128xf32>
    %18 = arith.negf %17 : vector<8x128xf32>
    %19 = math.exp %18 : vector<8x128xf32>
    %cst_17 = arith.constant 1.000000e+00 : f32
    %20 = vector.broadcast %cst_17 : f32 to vector<8x128xf32>
    %21 = arith.addf %20, %19 : vector<8x128xf32>
    %22 = arith.divf %20, %21 : vector<8x128xf32>
    %23 = vector.extract_strided_slice %16 {offsets = [0, 128], sizes = [8, 128], strides = [1, 1]} : vector<8x512xf32> to vector<8x128xf32>
    %24 = arith.negf %23 : vector<8x128xf32>
    %25 = math.exp %24 : vector<8x128xf32>
    %cst_18 = arith.constant 1.000000e+00 : f32
    %26 = vector.broadcast %cst_18 : f32 to vector<8x128xf32>
    %27 = arith.addf %26, %25 : vector<8x128xf32>
    %28 = arith.divf %26, %27 : vector<8x128xf32>
    %29 = vector.extract_strided_slice %16 {offsets = [0, 256], sizes = [8, 128], strides = [1, 1]} : vector<8x512xf32> to vector<8x128xf32>
    %30 = arith.negf %29 : vector<8x128xf32>
    %31 = math.exp %30 : vector<8x128xf32>
    %cst_19 = arith.constant 1.000000e+00 : f32
    %32 = vector.broadcast %cst_19 : f32 to vector<8x128xf32>
    %33 = arith.addf %32, %31 : vector<8x128xf32>
    %34 = arith.divf %32, %33 : vector<8x128xf32>
    %35 = vector.extract_strided_slice %16 {offsets = [0, 384], sizes = [8, 128], strides = [1, 1]} : vector<8x512xf32> to vector<8x128xf32>
    %36 = math.tanh %35 : vector<8x128xf32>
    %37 = arith.mulf %28, %11 : vector<8x128xf32>
    %38 = arith.mulf %22, %36 : vector<8x128xf32>
    %39 = arith.addf %37, %38 : vector<8x128xf32>
    %40 = math.tanh %39 : vector<8x128xf32>
    %41 = arith.mulf %34, %40 : vector<8x128xf32>
    %42 = arith.truncf %41 : vector<8x128xf32> to vector<8x128xbf16>
    %c0_20 = arith.constant 0 : index
    %c0_21 = arith.constant 0 : index
    %43 = vector.load %arg7[%c0_20, %c0_21] : memref<64x128xbf16, #tpu.memory_space<vmem>>, vector<8x128xbf16>
    tpu.vector_store %arg7[%c0_20, %c0_21], %42 {strides = array<i32>} : memref<64x128xbf16, #tpu.memory_space<vmem>>, vector<8x128xbf16>,
    %c8 = arith.constant 8 : index
    %c0_22 = arith.constant 0 : index
    %44 = vector.load %arg10[%c8, %c0_22] : memref<64x512xf32, #tpu.memory_space<vmem>>, vector<8x512xf32>
    %45 = arith.truncf %41 : vector<8x128xf32> to vector<8x128xbf16>
    %c0_23 = arith.constant 0 : index
    %c0_24 = arith.constant 0 : index
    %46 = vector.load %arg3[%c0_23, %c0_24] : memref<128x512xbf16, #tpu.memory_space<vmem>>, vector<128x512xbf16>
    %cst_25 = arith.constant dense<0.000000e+00> : vector<8x512xf32>
    %47 = tpu.matmul %45, %46, %cst_25 {dimension_numbers = #tpu.dot_dimension_numbers<[1], [0], [0], [1], [0, 0, 1, 1], [], []>} : vector<8x128xbf16>, vector<128x512xbf16>, vector<8x512xf32> -> vector<8x512xf32>
    %48 = arith.addf %44, %47 : vector<8x512xf32>
    %49 = vector.extract_strided_slice %48 {offsets = [0, 0], sizes = [8, 128], strides = [1, 1]} : vector<8x512xf32> to vector<8x128xf32>
    %50 = arith.negf %49 : vector<8x128xf32>
    %51 = math.exp %50 : vector<8x128xf32>
    %cst_26 = arith.constant 1.000000e+00 : f32
    %52 = vector.broadcast %cst_26 : f32 to vector<8x128xf32>
    %53 = arith.addf %52, %51 : vector<8x128xf32>
    %54 = arith.divf %52, %53 : vector<8x128xf32>
    %55 = vector.extract_strided_slice %48 {offsets = [0, 128], sizes = [8, 128], strides = [1, 1]} : vector<8x512xf32> to vector<8x128xf32>
    %56 = arith.negf %55 : vector<8x128xf32>
    %57 = math.exp %56 : vector<8x128xf32>
    %cst_27 = arith.constant 1.000000e+00 : f32
    %58 = vector.broadcast %cst_27 : f32 to vector<8x128xf32>
    %59 = arith.addf %58, %57 : vector<8x128xf32>
    %60 = arith.divf %58, %59 : vector<8x128xf32>
    %61 = vector.extract_strided_slice %48 {offsets = [0, 256], sizes = [8, 128], strides = [1, 1]} : vector<8x512xf32> to vector<8x128xf32>
    %62 = arith.negf %61 : vector<8x128xf32>
    %63 = math.exp %62 : vector<8x128xf32>
    %cst_28 = arith.constant 1.000000e+00 : f32
    %64 = vector.broadcast %cst_28 : f32 to vector<8x128xf32>
    %65 = arith.addf %64, %63 : vector<8x128xf32>
    %66 = arith.divf %64, %65 : vector<8x128xf32>
    %67 = vector.extract_strided_slice %48 {offsets = [0, 384], sizes = [8, 128], strides = [1, 1]} : vector<8x512xf32> to vector<8x128xf32>
    %68 = math.tanh %67 : vector<8x128xf32>
    %69 = arith.mulf %60, %39 : vector<8x128xf32>
    %70 = arith.mulf %54, %68 : vector<8x128xf32>
    %71 = arith.addf %69, %70 : vector<8x128xf32>
    %72 = math.tanh %71 : vector<8x128xf32>
    %73 = arith.mulf %66, %72 : vector<8x128xf32>
    %74 = arith.truncf %73 : vector<8x128xf32> to vector<8x128xbf16>
    %c8_29 = arith.constant 8 : index
    %c0_30 = arith.constant 0 : index
    %75 = vector.load %arg7[%c8_29, %c0_30] : memref<64x128xbf16, #tpu.memory_space<vmem>>, vector<8x128xbf16>
    tpu.vector_store %arg7[%c8_29, %c0_30], %74 {strides = array<i32>} : memref<64x128xbf16, #tpu.memory_space<vmem>>, vector<8x128xbf16>,
    %c16 = arith.constant 16 : index
    %c0_31 = arith.constant 0 : index
    %76 = vector.load %arg10[%c16, %c0_31] : memref<64x512xf32, #tpu.memory_space<vmem>>, vector<8x512xf32>
    %77 = arith.truncf %73 : vector<8x128xf32> to vector<8x128xbf16>
    %c0_32 = arith.constant 0 : index
    %c0_33 = arith.constant 0 : index
    %78 = vector.load %arg3[%c0_32, %c0_33] : memref<128x512xbf16, #tpu.memory_space<vmem>>, vector<128x512xbf16>
    %cst_34 = arith.constant dense<0.000000e+00> : vector<8x512xf32>
    %79 = tpu.matmul %77, %78, %cst_34 {dimension_numbers = #tpu.dot_dimension_numbers<[1], [0], [0], [1], [0, 0, 1, 1], [], []>} : vector<8x128xbf16>, vector<128x512xbf16>, vector<8x512xf32> -> vector<8x512xf32>
    %80 = arith.addf %76, %79 : vector<8x512xf32>
    %81 = vector.extract_strided_slice %80 {offsets = [0, 0], sizes = [8, 128], strides = [1, 1]} : vector<8x512xf32> to vector<8x128xf32>
    %82 = arith.negf %81 : vector<8x128xf32>
    %83 = math.exp %82 : vector<8x128xf32>
    %cst_35 = arith.constant 1.000000e+00 : f32
    %84 = vector.broadcast %cst_35 : f32 to vector<8x128xf32>
    %85 = arith.addf %84, %83 : vector<8x128xf32>
    %86 = arith.divf %84, %85 : vector<8x128xf32>
    %87 = vector.extract_strided_slice %80 {offsets = [0, 128], sizes = [8, 128], strides = [1, 1]} : vector<8x512xf32> to vector<8x128xf32>
    %88 = arith.negf %87 : vector<8x128xf32>
    %89 = math.exp %88 : vector<8x128xf32>
    %cst_36 = arith.constant 1.000000e+00 : f32
    %90 = vector.broadcast %cst_36 : f32 to vector<8x128xf32>
    %91 = arith.addf %90, %89 : vector<8x128xf32>
    %92 = arith.divf %90, %91 : vector<8x128xf32>
    %93 = vector.extract_strided_slice %80 {offsets = [0, 256], sizes = [8, 128], strides = [1, 1]} : vector<8x512xf32> to vector<8x128xf32>
    %94 = arith.negf %93 : vector<8x128xf32>
    %95 = math.exp %94 : vector<8x128xf32>
    %cst_37 = arith.constant 1.000000e+00 : f32
    %96 = vector.broadcast %cst_37 : f32 to vector<8x128xf32>
    %97 = arith.addf %96, %95 : vector<8x128xf32>
    %98 = arith.divf %96, %97 : vector<8x128xf32>
    %99 = vector.extract_strided_slice %80 {offsets = [0, 384], sizes = [8, 128], strides = [1, 1]} : vector<8x512xf32> to vector<8x128xf32>
    %100 = math.tanh %99 : vector<8x128xf32>
    %101 = arith.mulf %92, %71 : vector<8x128xf32>
    %102 = arith.mulf %86, %100 : vector<8x128xf32>
    %103 = arith.addf %101, %102 : vector<8x128xf32>
    %104 = math.tanh %103 : vector<8x128xf32>
    %105 = arith.mulf %98, %104 : vector<8x128xf32>
    %106 = arith.truncf %105 : vector<8x128xf32> to vector<8x128xbf16>
    %c16_38 = arith.constant 16 : index
    %c0_39 = arith.constant 0 : index
    %107 = vector.load %arg7[%c16_38, %c0_39] : memref<64x128xbf16, #tpu.memory_space<vmem>>, vector<8x128xbf16>
    tpu.vector_store %arg7[%c16_38, %c0_39], %106 {strides = array<i32>} : memref<64x128xbf16, #tpu.memory_space<vmem>>, vector<8x128xbf16>,
    %c24 = arith.constant 24 : index
    %c0_40 = arith.constant 0 : index
    %108 = vector.load %arg10[%c24, %c0_40] : memref<64x512xf32, #tpu.memory_space<vmem>>, vector<8x512xf32>
    %109 = arith.truncf %105 : vector<8x128xf32> to vector<8x128xbf16>
    %c0_41 = arith.constant 0 : index
    %c0_42 = arith.constant 0 : index
    %110 = vector.load %arg3[%c0_41, %c0_42] : memref<128x512xbf16, #tpu.memory_space<vmem>>, vector<128x512xbf16>
    %cst_43 = arith.constant dense<0.000000e+00> : vector<8x512xf32>
    %111 = tpu.matmul %109, %110, %cst_43 {dimension_numbers = #tpu.dot_dimension_numbers<[1], [0], [0], [1], [0, 0, 1, 1], [], []>} : vector<8x128xbf16>, vector<128x512xbf16>, vector<8x512xf32> -> vector<8x512xf32>
    %112 = arith.addf %108, %111 : vector<8x512xf32>
    %113 = vector.extract_strided_slice %112 {offsets = [0, 0], sizes = [8, 128], strides = [1, 1]} : vector<8x512xf32> to vector<8x128xf32>
    %114 = arith.negf %113 : vector<8x128xf32>
    %115 = math.exp %114 : vector<8x128xf32>
    %cst_44 = arith.constant 1.000000e+00 : f32
    %116 = vector.broadcast %cst_44 : f32 to vector<8x128xf32>
    %117 = arith.addf %116, %115 : vector<8x128xf32>
    %118 = arith.divf %116, %117 : vector<8x128xf32>
    %119 = vector.extract_strided_slice %112 {offsets = [0, 128], sizes = [8, 128], strides = [1, 1]} : vector<8x512xf32> to vector<8x128xf32>
    %120 = arith.negf %119 : vector<8x128xf32>
    %121 = math.exp %120 : vector<8x128xf32>
    %cst_45 = arith.constant 1.000000e+00 : f32
    %122 = vector.broadcast %cst_45 : f32 to vector<8x128xf32>
    %123 = arith.addf %122, %121 : vector<8x128xf32>
    %124 = arith.divf %122, %123 : vector<8x128xf32>
    %125 = vector.extract_strided_slice %112 {offsets = [0, 256], sizes = [8, 128], strides = [1, 1]} : vector<8x512xf32> to vector<8x128xf32>
    %126 = arith.negf %125 : vector<8x128xf32>
    %127 = math.exp %126 : vector<8x128xf32>
    %cst_46 = arith.constant 1.000000e+00 : f32
    %128 = vector.broadcast %cst_46 : f32 to vector<8x128xf32>
    %129 = arith.addf %128, %127 : vector<8x128xf32>
    %130 = arith.divf %128, %129 : vector<8x128xf32>
    %131 = vector.extract_strided_slice %112 {offsets = [0, 384], sizes = [8, 128], strides = [1, 1]} : vector<8x512xf32> to vector<8x128xf32>
    %132 = math.tanh %131 : vector<8x128xf32>
    %133 = arith.mulf %124, %103 : vector<8x128xf32>
    %134 = arith.mulf %118, %132 : vector<8x128xf32>
    %135 = arith.addf %133, %134 : vector<8x128xf32>
    %136 = math.tanh %135 : vector<8x128xf32>
    %137 = arith.mulf %130, %136 : vector<8x128xf32>
    %138 = arith.truncf %137 : vector<8x128xf32> to vector<8x128xbf16>
    %c24_47 = arith.constant 24 : index
    %c0_48 = arith.constant 0 : index
    %139 = vector.load %arg7[%c24_47, %c0_48] : memref<64x128xbf16, #tpu.memory_space<vmem>>, vector<8x128xbf16>
    tpu.vector_store %arg7[%c24_47, %c0_48], %138 {strides = array<i32>} : memref<64x128xbf16, #tpu.memory_space<vmem>>, vector<8x128xbf16>,
    %c32 = arith.constant 32 : index
    %c0_49 = arith.constant 0 : index
    %140 = vector.load %arg10[%c32, %c0_49] : memref<64x512xf32, #tpu.memory_space<vmem>>, vector<8x512xf32>
    %141 = arith.truncf %137 : vector<8x128xf32> to vector<8x128xbf16>
    %c0_50 = arith.constant 0 : index
    %c0_51 = arith.constant 0 : index
    %142 = vector.load %arg3[%c0_50, %c0_51] : memref<128x512xbf16, #tpu.memory_space<vmem>>, vector<128x512xbf16>
    %cst_52 = arith.constant dense<0.000000e+00> : vector<8x512xf32>
    %143 = tpu.matmul %141, %142, %cst_52 {dimension_numbers = #tpu.dot_dimension_numbers<[1], [0], [0], [1], [0, 0, 1, 1], [], []>} : vector<8x128xbf16>, vector<128x512xbf16>, vector<8x512xf32> -> vector<8x512xf32>
    %144 = arith.addf %140, %143 : vector<8x512xf32>
    %145 = vector.extract_strided_slice %144 {offsets = [0, 0], sizes = [8, 128], strides = [1, 1]} : vector<8x512xf32> to vector<8x128xf32>
    %146 = arith.negf %145 : vector<8x128xf32>
    %147 = math.exp %146 : vector<8x128xf32>
    %cst_53 = arith.constant 1.000000e+00 : f32
    %148 = vector.broadcast %cst_53 : f32 to vector<8x128xf32>
    %149 = arith.addf %148, %147 : vector<8x128xf32>
    %150 = arith.divf %148, %149 : vector<8x128xf32>
    %151 = vector.extract_strided_slice %144 {offsets = [0, 128], sizes = [8, 128], strides = [1, 1]} : vector<8x512xf32> to vector<8x128xf32>
    %152 = arith.negf %151 : vector<8x128xf32>
    %153 = math.exp %152 : vector<8x128xf32>
    %cst_54 = arith.constant 1.000000e+00 : f32
    %154 = vector.broadcast %cst_54 : f32 to vector<8x128xf32>
    %155 = arith.addf %154, %153 : vector<8x128xf32>
    %156 = arith.divf %154, %155 : vector<8x128xf32>
    %157 = vector.extract_strided_slice %144 {offsets = [0, 256], sizes = [8, 128], strides = [1, 1]} : vector<8x512xf32> to vector<8x128xf32>
    %158 = arith.negf %157 : vector<8x128xf32>
    %159 = math.exp %158 : vector<8x128xf32>
    %cst_55 = arith.constant 1.000000e+00 : f32
    %160 = vector.broadcast %cst_55 : f32 to vector<8x128xf32>
    %161 = arith.addf %160, %159 : vector<8x128xf32>
    %162 = arith.divf %160, %161 : vector<8x128xf32>
    %163 = vector.extract_strided_slice %144 {offsets = [0, 384], sizes = [8, 128], strides = [1, 1]} : vector<8x512xf32> to vector<8x128xf32>
    %164 = math.tanh %163 : vector<8x128xf32>
    %165 = arith.mulf %156, %135 : vector<8x128xf32>
    %166 = arith.mulf %150, %164 : vector<8x128xf32>
    %167 = arith.addf %165, %166 : vector<8x128xf32>
    %168 = math.tanh %167 : vector<8x128xf32>
    %169 = arith.mulf %162, %168 : vector<8x128xf32>
    %170 = arith.truncf %169 : vector<8x128xf32> to vector<8x128xbf16>
    %c32_56 = arith.constant 32 : index
    %c0_57 = arith.constant 0 : index
    %171 = vector.load %arg7[%c32_56, %c0_57] : memref<64x128xbf16, #tpu.memory_space<vmem>>, vector<8x128xbf16>
    tpu.vector_store %arg7[%c32_56, %c0_57], %170 {strides = array<i32>} : memref<64x128xbf16, #tpu.memory_space<vmem>>, vector<8x128xbf16>,
    %c40 = arith.constant 40 : index
    %c0_58 = arith.constant 0 : index
    %172 = vector.load %arg10[%c40, %c0_58] : memref<64x512xf32, #tpu.memory_space<vmem>>, vector<8x512xf32>
    %173 = arith.truncf %169 : vector<8x128xf32> to vector<8x128xbf16>
    %c0_59 = arith.constant 0 : index
    %c0_60 = arith.constant 0 : index
    %174 = vector.load %arg3[%c0_59, %c0_60] : memref<128x512xbf16, #tpu.memory_space<vmem>>, vector<128x512xbf16>
    %cst_61 = arith.constant dense<0.000000e+00> : vector<8x512xf32>
    %175 = tpu.matmul %173, %174, %cst_61 {dimension_numbers = #tpu.dot_dimension_numbers<[1], [0], [0], [1], [0, 0, 1, 1], [], []>} : vector<8x128xbf16>, vector<128x512xbf16>, vector<8x512xf32> -> vector<8x512xf32>
    %176 = arith.addf %172, %175 : vector<8x512xf32>
    %177 = vector.extract_strided_slice %176 {offsets = [0, 0], sizes = [8, 128], strides = [1, 1]} : vector<8x512xf32> to vector<8x128xf32>
    %178 = arith.negf %177 : vector<8x128xf32>
    %179 = math.exp %178 : vector<8x128xf32>
    %cst_62 = arith.constant 1.000000e+00 : f32
    %180 = vector.broadcast %cst_62 : f32 to vector<8x128xf32>
    %181 = arith.addf %180, %179 : vector<8x128xf32>
    %182 = arith.divf %180, %181 : vector<8x128xf32>
    %183 = vector.extract_strided_slice %176 {offsets = [0, 128], sizes = [8, 128], strides = [1, 1]} : vector<8x512xf32> to vector<8x128xf32>
    %184 = arith.negf %183 : vector<8x128xf32>
    %185 = math.exp %184 : vector<8x128xf32>
    %cst_63 = arith.constant 1.000000e+00 : f32
    %186 = vector.broadcast %cst_63 : f32 to vector<8x128xf32>
    %187 = arith.addf %186, %185 : vector<8x128xf32>
    %188 = arith.divf %186, %187 : vector<8x128xf32>
    %189 = vector.extract_strided_slice %176 {offsets = [0, 256], sizes = [8, 128], strides = [1, 1]} : vector<8x512xf32> to vector<8x128xf32>
    %190 = arith.negf %189 : vector<8x128xf32>
    %191 = math.exp %190 : vector<8x128xf32>
    %cst_64 = arith.constant 1.000000e+00 : f32
    %192 = vector.broadcast %cst_64 : f32 to vector<8x128xf32>
    %193 = arith.addf %192, %191 : vector<8x128xf32>
    %194 = arith.divf %192, %193 : vector<8x128xf32>
    %195 = vector.extract_strided_slice %176 {offsets = [0, 384], sizes = [8, 128], strides = [1, 1]} : vector<8x512xf32> to vector<8x128xf32>
    %196 = math.tanh %195 : vector<8x128xf32>
    %197 = arith.mulf %188, %167 : vector<8x128xf32>
    %198 = arith.mulf %182, %196 : vector<8x128xf32>
    %199 = arith.addf %197, %198 : vector<8x128xf32>
    %200 = math.tanh %199 : vector<8x128xf32>
    %201 = arith.mulf %194, %200 : vector<8x128xf32>
    %202 = arith.truncf %201 : vector<8x128xf32> to vector<8x128xbf16>
    %c40_65 = arith.constant 40 : index
    %c0_66 = arith.constant 0 : index
    %203 = vector.load %arg7[%c40_65, %c0_66] : memref<64x128xbf16, #tpu.memory_space<vmem>>, vector<8x128xbf16>
    tpu.vector_store %arg7[%c40_65, %c0_66], %202 {strides = array<i32>} : memref<64x128xbf16, #tpu.memory_space<vmem>>, vector<8x128xbf16>,
    %c48 = arith.constant 48 : index
    %c0_67 = arith.constant 0 : index
    %204 = vector.load %arg10[%c48, %c0_67] : memref<64x512xf32, #tpu.memory_space<vmem>>, vector<8x512xf32>
    %205 = arith.truncf %201 : vector<8x128xf32> to vector<8x128xbf16>
    %c0_68 = arith.constant 0 : index
    %c0_69 = arith.constant 0 : index
    %206 = vector.load %arg3[%c0_68, %c0_69] : memref<128x512xbf16, #tpu.memory_space<vmem>>, vector<128x512xbf16>
    %cst_70 = arith.constant dense<0.000000e+00> : vector<8x512xf32>
    %207 = tpu.matmul %205, %206, %cst_70 {dimension_numbers = #tpu.dot_dimension_numbers<[1], [0], [0], [1], [0, 0, 1, 1], [], []>} : vector<8x128xbf16>, vector<128x512xbf16>, vector<8x512xf32> -> vector<8x512xf32>
    %208 = arith.addf %204, %207 : vector<8x512xf32>
    %209 = vector.extract_strided_slice %208 {offsets = [0, 0], sizes = [8, 128], strides = [1, 1]} : vector<8x512xf32> to vector<8x128xf32>
    %210 = arith.negf %209 : vector<8x128xf32>
    %211 = math.exp %210 : vector<8x128xf32>
    %cst_71 = arith.constant 1.000000e+00 : f32
    %212 = vector.broadcast %cst_71 : f32 to vector<8x128xf32>
    %213 = arith.addf %212, %211 : vector<8x128xf32>
    %214 = arith.divf %212, %213 : vector<8x128xf32>
    %215 = vector.extract_strided_slice %208 {offsets = [0, 128], sizes = [8, 128], strides = [1, 1]} : vector<8x512xf32> to vector<8x128xf32>
    %216 = arith.negf %215 : vector<8x128xf32>
    %217 = math.exp %216 : vector<8x128xf32>
    %cst_72 = arith.constant 1.000000e+00 : f32
    %218 = vector.broadcast %cst_72 : f32 to vector<8x128xf32>
    %219 = arith.addf %218, %217 : vector<8x128xf32>
    %220 = arith.divf %218, %219 : vector<8x128xf32>
    %221 = vector.extract_strided_slice %208 {offsets = [0, 256], sizes = [8, 128], strides = [1, 1]} : vector<8x512xf32> to vector<8x128xf32>
    %222 = arith.negf %221 : vector<8x128xf32>
    %223 = math.exp %222 : vector<8x128xf32>
    %cst_73 = arith.constant 1.000000e+00 : f32
    %224 = vector.broadcast %cst_73 : f32 to vector<8x128xf32>
    %225 = arith.addf %224, %223 : vector<8x128xf32>
    %226 = arith.divf %224, %225 : vector<8x128xf32>
    %227 = vector.extract_strided_slice %208 {offsets = [0, 384], sizes = [8, 128], strides = [1, 1]} : vector<8x512xf32> to vector<8x128xf32>
    %228 = math.tanh %227 : vector<8x128xf32>
    %229 = arith.mulf %220, %199 : vector<8x128xf32>
    %230 = arith.mulf %214, %228 : vector<8x128xf32>
    %231 = arith.addf %229, %230 : vector<8x128xf32>
    %232 = math.tanh %231 : vector<8x128xf32>
    %233 = arith.mulf %226, %232 : vector<8x128xf32>
    %234 = arith.truncf %233 : vector<8x128xf32> to vector<8x128xbf16>
    %c48_74 = arith.constant 48 : index
    %c0_75 = arith.constant 0 : index
    %235 = vector.load %arg7[%c48_74, %c0_75] : memref<64x128xbf16, #tpu.memory_space<vmem>>, vector<8x128xbf16>
    tpu.vector_store %arg7[%c48_74, %c0_75], %234 {strides = array<i32>} : memref<64x128xbf16, #tpu.memory_space<vmem>>, vector<8x128xbf16>,
    %c56 = arith.constant 56 : index
    %c0_76 = arith.constant 0 : index
    %236 = vector.load %arg10[%c56, %c0_76] : memref<64x512xf32, #tpu.memory_space<vmem>>, vector<8x512xf32>
    %237 = arith.truncf %233 : vector<8x128xf32> to vector<8x128xbf16>
    %c0_77 = arith.constant 0 : index
    %c0_78 = arith.constant 0 : index
    %238 = vector.load %arg3[%c0_77, %c0_78] : memref<128x512xbf16, #tpu.memory_space<vmem>>, vector<128x512xbf16>
    %cst_79 = arith.constant dense<0.000000e+00> : vector<8x512xf32>
    %239 = tpu.matmul %237, %238, %cst_79 {dimension_numbers = #tpu.dot_dimension_numbers<[1], [0], [0], [1], [0, 0, 1, 1], [], []>} : vector<8x128xbf16>, vector<128x512xbf16>, vector<8x512xf32> -> vector<8x512xf32>
    %240 = arith.addf %236, %239 : vector<8x512xf32>
    %241 = vector.extract_strided_slice %240 {offsets = [0, 0], sizes = [8, 128], strides = [1, 1]} : vector<8x512xf32> to vector<8x128xf32>
    %242 = arith.negf %241 : vector<8x128xf32>
    %243 = math.exp %242 : vector<8x128xf32>
    %cst_80 = arith.constant 1.000000e+00 : f32
    %244 = vector.broadcast %cst_80 : f32 to vector<8x128xf32>
    %245 = arith.addf %244, %243 : vector<8x128xf32>
    %246 = arith.divf %244, %245 : vector<8x128xf32>
    %247 = vector.extract_strided_slice %240 {offsets = [0, 128], sizes = [8, 128], strides = [1, 1]} : vector<8x512xf32> to vector<8x128xf32>
    %248 = arith.negf %247 : vector<8x128xf32>
    %249 = math.exp %248 : vector<8x128xf32>
    %cst_81 = arith.constant 1.000000e+00 : f32
    %250 = vector.broadcast %cst_81 : f32 to vector<8x128xf32>
    %251 = arith.addf %250, %249 : vector<8x128xf32>
    %252 = arith.divf %250, %251 : vector<8x128xf32>
    %253 = vector.extract_strided_slice %240 {offsets = [0, 256], sizes = [8, 128], strides = [1, 1]} : vector<8x512xf32> to vector<8x128xf32>
    %254 = arith.negf %253 : vector<8x128xf32>
    %255 = math.exp %254 : vector<8x128xf32>
    %cst_82 = arith.constant 1.000000e+00 : f32
    %256 = vector.broadcast %cst_82 : f32 to vector<8x128xf32>
    %257 = arith.addf %256, %255 : vector<8x128xf32>
    %258 = arith.divf %256, %257 : vector<8x128xf32>
    %259 = vector.extract_strided_slice %240 {offsets = [0, 384], sizes = [8, 128], strides = [1, 1]} : vector<8x512xf32> to vector<8x128xf32>
    %260 = math.tanh %259 : vector<8x128xf32>
    %261 = arith.mulf %252, %231 : vector<8x128xf32>
    %262 = arith.mulf %246, %260 : vector<8x128xf32>
    %263 = arith.addf %261, %262 : vector<8x128xf32>
    %264 = math.tanh %263 : vector<8x128xf32>
    %265 = arith.mulf %258, %264 : vector<8x128xf32>
    %266 = arith.truncf %265 : vector<8x128xf32> to vector<8x128xbf16>
    %c56_83 = arith.constant 56 : index
    %c0_84 = arith.constant 0 : index
    %267 = vector.load %arg7[%c56_83, %c0_84] : memref<64x128xbf16, #tpu.memory_space<vmem>>, vector<8x128xbf16>
    tpu.vector_store %arg7[%c56_83, %c0_84], %266 {strides = array<i32>} : memref<64x128xbf16, #tpu.memory_space<vmem>>, vector<8x128xbf16>,
    %c0_85 = arith.constant 0 : index
    %c0_86 = arith.constant 0 : index
    %268 = vector.load %arg8[%c0_85, %c0_86] : memref<8x128xf32, #tpu.memory_space<vmem>>, vector<8x128xf32>
    tpu.vector_store %arg8[%c0_85, %c0_86], %265 {strides = array<i32>} : memref<8x128xf32, #tpu.memory_space<vmem>>, vector<8x128xf32>,
    %c0_87 = arith.constant 0 : index
    %c0_88 = arith.constant 0 : index
    %269 = vector.load %arg9[%c0_87, %c0_88] : memref<8x128xf32, #tpu.memory_space<vmem>>, vector<8x128xf32>
    tpu.vector_store %arg9[%c0_87, %c0_88], %263 {strides = array<i32>} : memref<8x128xf32, #tpu.memory_space<vmem>>, vector<8x128xf32>,
    return
  }
  func.func @transform_0(%arg0: i32) -> (i32, i32) {
    %c0_i32 = arith.constant 0 : i32
    %c0_i32_0 = arith.constant 0 : i32
    return %arg0, %c0_i32 : i32, i32
  }
  func.func @transform_1(%arg0: i32) -> (i32, i32) {
    %c0_i32 = arith.constant 0 : i32
    %c0_i32_0 = arith.constant 0 : i32
    %c0_i32_1 = arith.constant 0 : i32
    return %c0_i32, %c0_i32_0 : i32, i32
  }
  func.func @transform_2(%arg0: i32) -> (i32, i32) {
    %c0_i32 = arith.constant 0 : i32
    %c0_i32_0 = arith.constant 0 : i32
    %c0_i32_1 = arith.constant 0 : i32
    return %c0_i32, %c0_i32_0 : i32, i32
  }
  func.func @transform_3(%arg0: i32) -> (i32, i32) {
    %c0_i32 = arith.constant 0 : i32
    %c0_i32_0 = arith.constant 0 : i32
    %c0_i32_1 = arith.constant 0 : i32
    return %c0_i32, %c0_i32_0 : i32, i32
  }
  func.func @transform_4(%arg0: i32) -> (i32, i32) {
    %c0_i32 = arith.constant 0 : i32
    %c0_i32_0 = arith.constant 0 : i32
    %c0_i32_1 = arith.constant 0 : i32
    return %c0_i32, %c0_i32_0 : i32, i32
  }
  func.func @transform_5(%arg0: i32) -> (i32, i32) {
    %c0_i32 = arith.constant 0 : i32
    %c0_i32_0 = arith.constant 0 : i32
    %c0_i32_1 = arith.constant 0 : i32
    return %c0_i32, %c0_i32_0 : i32, i32
  }
  func.func @transform_6(%arg0: i32) -> (i32, i32) {
    %c0_i32 = arith.constant 0 : i32
    %c0_i32_0 = arith.constant 0 : i32
    return %arg0, %c0_i32 : i32, i32
  }
  func.func @transform_7(%arg0: i32) -> (i32, i32) {
    %c0_i32 = arith.constant 0 : i32
    %c0_i32_0 = arith.constant 0 : i32
    %c0_i32_1 = arith.constant 0 : i32
    return %c0_i32, %c0_i32_0 : i32, i32
  }
  func.func @transform_8(%arg0: i32) -> (i32, i32) {
    %c0_i32 = arith.constant 0 : i32
    %c0_i32_0 = arith.constant 0 : i32
    %c0_i32_1 = arith.constant 0 : i32
    return %c0_i32, %c0_i32_0 : i32, i32
  }
}

</mosaic_0001>

<llo_original>
// kernel: tpu_custom_call.1
$region0: #{tpu_custom_call.1}
  #allocation0 [shape = 'u32[]', space=smem, size = 0x4, offset = 0x4, fixed_abs, tag = 'smem constant byte address 0x4 - core index']
  #allocation1 [shape = 'u32[144,128]{1,0:T(1,128)}', space=vmem, size = 0x12000, scoped, tag = 'internal scratch']
  #allocation2 [shape = 'f32[64,512]{1,0:T(8,128)}', space=vmem, size = 0x20000, scoped, tag = 'scratch operand']
  %s0 = inlined_call_operand.vmem [shape: bf16[128,32], index: 0, kind: input, shape index: {}]
  %s1 = inlined_call_operand.vmem [shape: bf16[32,512], index: 1, kind: input, shape index: {}]
  %s2 = inlined_call_operand.hbm [shape: bf16[128,512], index: 2, kind: input, shape index: {}]
  %s3 = inlined_call_operand.vmem [shape: f32[1,512], index: 3, kind: input, shape index: {}]
  %s4 = inlined_call_operand.hbm [shape: f32[8,128], index: 4, kind: input, shape index: {}, may-alias: {4,7}]
  %s5 = inlined_call_operand.hbm [shape: f32[8,128], index: 5, kind: input, shape index: {}, may-alias: {5,8}]
  %s6 = inlined_call_operand.hbm [shape: bf16[128,128], index: 6, kind: output, shape index: {0}]
  %s7 = inlined_call_operand.hbm [shape: f32[8,128], index: 7, kind: output, shape index: {1}, may-alias: {4,7}]
  %s8 = inlined_call_operand.hbm [shape: f32[8,128], index: 8, kind: output, shape index: {2}, may-alias: {5,8}]
  %9 = xla_tuple %s6, %s7, %s8
  %s10 = sld [smem:[#allocation0]]
  $region89: #{tpu_custom_call.1} parent=0
    _
  %s12 = ssub.s32 1, %s10
  %s13 = scalar_select 0, %s12, %s10
  $region1: #{tpu_custom_call.1} parent=0
    #allocation3 [shape = 'u8[131072]{0}', space=vmem, size = 0x20000, scoped, tag = 'input window, operand 2, single buffered']
    #allocation4 [shape = 's32[2]{0}', space=sflag, size = 0x8, scoped, tag = 'scoped memory for tpu_custom_call.1']
    #allocation5 [shape = 's32[2]{0}', space=sflag, size = 0x8, scoped, tag = 'scoped memory for tpu_custom_call.1']
    #allocation6 [shape = 'u8[4096]{0}', space=vmem, size = 0x1000, scoped, tag = 'input window, operand 4, single buffered']
    #allocation7 [shape = 's32[1]{0}', space=sflag, size = 0x4, scoped, tag = 'scoped memory for tpu_custom_call.1']
    #allocation8 [shape = 'u8[4096]{0}', space=vmem, size = 0x1000, scoped, tag = 'input window, operand 5, single buffered']
    #allocation9 [shape = 'u8[32768]{0}', space=vmem, size = 0x8000, scoped, tag = 'output window, operand 0']
    #allocation10 [shape = 'u8[4096]{0}', space=vmem, size = 0x1000, scoped, tag = 'output window, operand 1, single buffered']
    #allocation11 [shape = 's32[1]{0}', space=sflag, size = 0x4, scoped, tag = 'scoped memory for tpu_custom_call.1']
    #allocation12 [shape = 'u8[4096]{0}', space=vmem, size = 0x1000, scoped, tag = 'output window, operand 2, single buffered']
    %14 = vsyncpa [#allocation4], 0
    %15 = vsyncpa [#allocation7], 0
    %16 = vsyncpa [#allocation5], 0
    %s17 = scalar_lea.sflag [#allocation5], 1
    %18 = vsyncpa %s17, 0
    %19 = vsyncpa [#allocation11], 0
    loop: start=0, step=1, limit=4
    $region2: #{tpu_custom_call.1} parent=1 // loop_pre_header
      _
    $region3: #{tpu_custom_call.1} parent=1 // loop_header
      %s21 = sphi 0, %s25
      %p22 = scmp.ge.s32.totalorder %s21, 4
      %s31 = sphi 0, %s33
      %s34 = sphi 0, %s31
      %s35 = sphi 0, %s34
      %s51 = sphi 0, %s35
      %s55 = sphi 0, %s55
      %s57 = sphi 0, %s55
      %s58 = sphi 0, %s57
      %s72 = sphi 0, %s58
      %s76 = sphi 0, %s76
      %s78 = sphi 0, %s76
      %s79 = sphi 0, %s78
      %s93 = sphi 0, %s79
      %s97 = sphi 0, %s97
      %s99 = sphi 0, %s97
      %s100 = sphi 0, %s99
      %s114 = sphi 0, %s100
      %s118 = sphi 0, %s118
      %s120 = sphi 0, %s118
      %s121 = sphi 0, %s120
      %s135 = sphi 0, %s121
      %s139 = sphi 0, %s139
      %s141 = sphi 0, %s139
      %s142 = sphi 0, %s141
      %s156 = sphi 0, %s142
      %s162 = sphi 0, %s164
      %s165 = sphi 0, %s162
      %s166 = sphi 0, %s165
      %s182 = sphi 0, %s166
      %s186 = sphi 0, %s186
      %s188 = sphi 0, %s186
      %s189 = sphi 0, %s188
      %s203 = sphi 0, %s189
      %s207 = sphi 0, %s207
      %s209 = sphi 0, %s207
      %s210 = sphi 0, %s209
      %s224 = sphi 0, %s210
    $region4: #{tpu_custom_call.1} parent=1 // loop_header_branch
      %24 = sbr.rel (%p22) target = $region8
    $region5: #{tpu_custom_call.1} parent=1 // loop_body
      %s26 = ssub.s32 %s21, 1
      %s27 = ssub.s32 %s21, 2
      %s28 = sadd.s32 %s21, 1
      %s29 = ssub.s32 %s21, %s28
      %p30 = scmp.eq.s32.totalorder %s29, 0
      %s32 = sadd.s32 %s31, 1
      %s33 = scalar_select %p30, %s31, %s32
      %p36 = pneg %p30
      %p37 = scmp.eq.s32.totalorder %s21, 1
      %p38 = por %p36, %p37
      %p39 = scmp.ne.s32.totalorder %s31, %s34
      %p40 = scmp.eq.s32.totalorder %s21, 0
      %p41 = por %p39, %p40
      %p42 = scmp.ne.s32.totalorder %s31, %s34
      %p43 = scmp.eq.s32.totalorder %s26, 1
      %p44 = por %p42, %p43
      %p45 = scmp.ne.s32.totalorder %s34, %s35
      %p46 = scmp.eq.s32.totalorder %s26, 0
      %p47 = por %p45, %p46
      %p48 = scmp.ne.s32.totalorder %s34, %s35
      %p49 = scmp.eq.s32.totalorder %s27, 1
      %p50 = por %p48, %p49
      %p52 = scmp.ne.s32.totalorder %s35, %s51
      %p53 = scmp.eq.s32.totalorder %s27, 0
      %p54 = por %p52, %p53
      %s56 = sadd.s32 %s55, 1
      %p59 = scmp.eq.s32.totalorder %s21, 1
      %p60 = scmp.ne.s32.totalorder %s55, %s57
      %p61 = scmp.eq.s32.totalorder %s21, 0
      %p62 = por %p60, %p61
      %p63 = scmp.ne.s32.totalorder %s55, %s57
      %p64 = scmp.eq.s32.totalorder %s26, 1
      %p65 = por %p63, %p64
      %p66 = scmp.ne.s32.totalorder %s57, %s58
      %p67 = scmp.eq.s32.totalorder %s26, 0
      %p68 = por %p66, %p67
      %p69 = scmp.ne.s32.totalorder %s57, %s58
      %p70 = scmp.eq.s32.totalorder %s27, 1
      %p71 = por %p69, %p70
      %p73 = scmp.ne.s32.totalorder %s58, %s72
      %p74 = scmp.eq.s32.totalorder %s27, 0
      %p75 = por %p73, %p74
      %s77 = sadd.s32 %s76, 1
      %p80 = scmp.eq.s32.totalorder %s21, 1
      %p81 = scmp.ne.s32.totalorder %s76, %s78
      %p82 = scmp.eq.s32.totalorder %s21, 0
      %p83 = por %p81, %p82
      %p84 = scmp.ne.s32.totalorder %s76, %s78
      %p85 = scmp.eq.s32.totalorder %s26, 1
      %p86 = por %p84, %p85
      %p87 = scmp.ne.s32.totalorder %s78, %s79
      %p88 = scmp.eq.s32.totalorder %s26, 0
      %p89 = por %p87, %p88
      %p90 = scmp.ne.s32.totalorder %s78, %s79
      %p91 = scmp.eq.s32.totalorder %s27, 1
      %p92 = por %p90, %p91
      %p94 = scmp.ne.s32.totalorder %s79, %s93
      %p95 = scmp.eq.s32.totalorder %s27, 0
      %p96 = por %p94, %p95
      %s98 = sadd.s32 %s97, 1
      %p101 = scmp.eq.s32.totalorder %s21, 1
      %p102 = scmp.ne.s32.totalorder %s97, %s99
      %p103 = scmp.eq.s32.totalorder %s21, 0
      %p104 = por %p102, %p103
      %p105 = scmp.ne.s32.totalorder %s97, %s99
      %p106 = scmp.eq.s32.totalorder %s26, 1
      %p107 = por %p105, %p106
      %p108 = scmp.ne.s32.totalorder %s99, %s100
      %p109 = scmp.eq.s32.totalorder %s26, 0
      %p110 = por %p108, %p109
      %p111 = scmp.ne.s32.totalorder %s99, %s100
      %p112 = scmp.eq.s32.totalorder %s27, 1
      %p113 = por %p111, %p112
      %p115 = scmp.ne.s32.totalorder %s100, %s114
      %p116 = scmp.eq.s32.totalorder %s27, 0
      %p117 = por %p115, %p116
      %s119 = sadd.s32 %s118, 1
      %p122 = scmp.eq.s32.totalorder %s21, 1
      %p123 = scmp.ne.s32.totalorder %s118, %s120
      %p124 = scmp.eq.s32.totalorder %s21, 0
      %p125 = por %p123, %p124
      %p126 = scmp.ne.s32.totalorder %s118, %s120
      %p127 = scmp.eq.s32.totalorder %s26, 1
      %p128 = por %p126, %p127
      %p129 = scmp.ne.s32.totalorder %s120, %s121
      %p130 = scmp.eq.s32.totalorder %s26, 0
      %p131 = por %p129, %p130
      %p132 = scmp.ne.s32.totalorder %s120, %s121
      %p133 = scmp.eq.s32.totalorder %s27, 1
      %p134 = por %p132, %p133
      %p136 = scmp.ne.s32.totalorder %s121, %s135
      %p137 = scmp.eq.s32.totalorder %s27, 0
      %p138 = por %p136, %p137
      %s140 = sadd.s32 %s139, 1
      %p143 = scmp.eq.s32.totalorder %s21, 1
      %p144 = scmp.ne.s32.totalorder %s139, %s141
      %p145 = scmp.eq.s32.totalorder %s21, 0
      %p146 = por %p144, %p145
      %p147 = scmp.ne.s32.totalorder %s139, %s141
      %p148 = scmp.eq.s32.totalorder %s26, 1
      %p149 = por %p147, %p148
      %p150 = scmp.ne.s32.totalorder %s141, %s142
      %p151 = scmp.eq.s32.totalorder %s26, 0
      %p152 = por %p150, %p151
      %p153 = scmp.ne.s32.totalorder %s141, %s142
      %p154 = scmp.eq.s32.totalorder %s27, 1
      %p155 = por %p153, %p154
      %p157 = scmp.ne.s32.totalorder %s142, %s156
      %p158 = scmp.eq.s32.totalorder %s27, 0
      %p159 = por %p157, %p158
      %s160 = ssub.s32 %s21, %s28
      %p161 = scmp.eq.s32.totalorder %s160, 0
      %s163 = sadd.s32 %s162, 1
      %s164 = scalar_select %p161, %s162, %s163
      %p167 = pneg %p161
      %p168 = scmp.eq.s32.totalorder %s21, 1
      %p169 = por %p167, %p168
      %p170 = scmp.ne.s32.totalorder %s162, %s165
      %p171 = scmp.eq.s32.totalorder %s21, 0
      %p172 = por %p170, %p171
      %p173 = scmp.ne.s32.totalorder %s162, %s165
      %p174 = scmp.eq.s32.totalorder %s26, 1
      %p175 = por %p173, %p174
      %p176 = scmp.ne.s32.totalorder %s165, %s166
      %p177 = scmp.eq.s32.totalorder %s26, 0
      %p178 = por %p176, %p177
      %p179 = scmp.ne.s32.totalorder %s165, %s166
      %p180 = scmp.eq.s32.totalorder %s27, 1
      %p181 = por %p179, %p180
      %p183 = scmp.ne.s32.totalorder %s166, %s182
      %p184 = scmp.eq.s32.totalorder %s27, 0
      %p185 = por %p183, %p184
      %s187 = sadd.s32 %s186, 1
      %p190 = scmp.eq.s32.totalorder %s21, 1
      %p191 = scmp.ne.s32.totalorder %s186, %s188
      %p192 = scmp.eq.s32.totalorder %s21, 0
      %p193 = por %p191, %p192
      %p194 = scmp.ne.s32.totalorder %s186, %s188
      %p195 = scmp.eq.s32.totalorder %s26, 1
      %p196 = por %p194, %p195
      %p197 = scmp.ne.s32.totalorder %s188, %s189
      %p198 = scmp.eq.s32.totalorder %s26, 0
      %p199 = por %p197, %p198
      %p200 = scmp.ne.s32.totalorder %s188, %s189
      %p201 = scmp.eq.s32.totalorder %s27, 1
      %p202 = por %p200, %p201
      %p204 = scmp.ne.s32.totalorder %s189, %s203
      %p205 = scmp.eq.s32.totalorder %s27, 0
      %p206 = por %p204, %p205
      %s208 = sadd.s32 %s207, 1
      %p211 = scmp.eq.s32.totalorder %s21, 1
      %p212 = scmp.ne.s32.totalorder %s207, %s209
      %p213 = scmp.eq.s32.totalorder %s21, 0
      %p214 = por %p212, %p213
      %p215 = scmp.ne.s32.totalorder %s207, %s209
      %p216 = scmp.eq.s32.totalorder %s26, 1
      %p217 = por %p215, %p216
      %p218 = scmp.ne.s32.totalorder %s209, %s210
      %p219 = scmp.eq.s32.totalorder %s26, 0
      %p220 = por %p218, %p219
      %p221 = scmp.ne.s32.totalorder %s209, %s210
      %p222 = scmp.eq.s32.totalorder %s27, 1
      %p223 = por %p221, %p222
      %p225 = scmp.ne.s32.totalorder %s210, %s224
      %p226 = scmp.eq.s32.totalorder %s27, 0
      %p227 = por %p225, %p226
      %p228 = scmp.le.s32.totalorder 1, %s21
      %p229 = scmp.lt.s32.totalorder %s21, 3
      %p230 = pnand %p228, %p229
      %p231 = pneg %p230
      // Predicated region
      $region9: #{tpu_custom_call.1} parent=5 // pred_check
        _
      $region10: #{tpu_custom_call.1} parent=5 // pred_check_branch
        %233 = sbr.rel (%p230) target = $region12
      $region11: #{tpu_custom_call.1} parent=5 // pred_region
        %s234 = ssub.s32 %s21, 1
        // Predicated region
        $region13: #{tpu_custom_call.1} parent=11 // pred_check
          %p235 = pneg %p68
        $region14: #{tpu_custom_call.1} parent=11 // pred_check_branch
          %237 = sbr.rel (%p235) target = $region16
        $region15: #{tpu_custom_call.1} parent=11 // pred_region
          _
        $region16: #{tpu_custom_call.1} parent=11 // pred_fallthru
          _
        // Predicated region
        $region17: #{tpu_custom_call.1} parent=11 // pred_check
          %p238 = pneg %p89
        $region18: #{tpu_custom_call.1} parent=11 // pred_check_branch
          %240 = sbr.rel (%p238) target = $region20
        $region19: #{tpu_custom_call.1} parent=11 // pred_region
          %s242 = ssub.s32 4096, 4096
          %243 = vsyncadd [#allocation4], %s242
          %s244 = sshll.u32 [#allocation3], 4
          %s245 = int_to_ptr.vmem [resolvable:$true] %s244
          %250 = dma.hbm_to_vmem [thread:$0]  %s2, 4096, %s245, [#allocation4], 256, 256, 16
        $region20: #{tpu_custom_call.1} parent=11 // pred_fallthru
          _
        // Predicated region
        $region21: #{tpu_custom_call.1} parent=11 // pred_check
          %p251 = pneg %p110
        $region22: #{tpu_custom_call.1} parent=11 // pred_check_branch
          %253 = sbr.rel (%p251) target = $region24
        $region23: #{tpu_custom_call.1} parent=11 // pred_region
          _
        $region24: #{tpu_custom_call.1} parent=11 // pred_fallthru
          _
        // Predicated region
        $region25: #{tpu_custom_call.1} parent=11 // pred_check
          %p254 = pneg %p131
        $region26: #{tpu_custom_call.1} parent=11 // pred_check_branch
          %256 = sbr.rel (%p254) target = $region28
        $region27: #{tpu_custom_call.1} parent=11 // pred_region
          %s258 = ssub.s32 128, 128
          %259 = vsyncadd [#allocation7], %s258
          %s261 = sshll.u32 [#allocation6], 4
          %s262 = int_to_ptr.vmem [resolvable:$true] %s261
          %264 = dma.hbm_to_vmem [thread:$0]  %s4, 128, %s262, [#allocation7]
        $region28: #{tpu_custom_call.1} parent=11 // pred_fallthru
          _
        // Predicated region
        $region29: #{tpu_custom_call.1} parent=11 // pred_check
          %p265 = pneg %p152
        $region30: #{tpu_custom_call.1} parent=11 // pred_check_branch
          %267 = sbr.rel (%p265) target = $region32
        $region31: #{tpu_custom_call.1} parent=11 // pred_region
          %s269 = ssub.s32 128, 128
          %270 = vsyncadd [#allocation7], %s269
          %s272 = sshll.u32 [#allocation8], 4
          %s273 = int_to_ptr.vmem [resolvable:$true] %s272
          %275 = dma.hbm_to_vmem [thread:$0]  %s5, 128, %s273, [#allocation7]
        $region32: #{tpu_custom_call.1} parent=11 // pred_fallthru
          _
      $region12: #{tpu_custom_call.1} parent=5 // pred_fallthru
        _
      %p276 = scmp.lt.s32.totalorder %s21, 2
      // Predicated region
      $region33: #{tpu_custom_call.1} parent=5 // pred_check
        %p277 = pneg %p276
      $region34: #{tpu_custom_call.1} parent=5 // pred_check_branch
        %279 = sbr.rel (%p277) target = $region36
      $region35: #{tpu_custom_call.1} parent=5 // pred_region
        // Predicated region
        $region37: #{tpu_custom_call.1} parent=35 // pred_check
          %p280 = pneg %p41
        $region38: #{tpu_custom_call.1} parent=35 // pred_check_branch
          %282 = sbr.rel (%p280) target = $region40
        $region39: #{tpu_custom_call.1} parent=35 // pred_region
          %s283 = smul.u32 8, %s21
          %p284 = scmp.lt.s32.totalorder %s283, 15
          %s285 = scalar_select %p284, %s283, 15
          %s286 = smul.addr %s285, 4
          %s287 = scalar_lea.vmem %s0, %s286
          %s288 = smul.u32 8, %s21
        $region40: #{tpu_custom_call.1} parent=35 // pred_fallthru
          _
      $region36: #{tpu_custom_call.1} parent=5 // pred_fallthru
        _
      %p289 = scmp.le.s32.totalorder 1, %s21
      %p290 = scmp.lt.s32.totalorder %s21, 3
      %p291 = pnand %p289, %p290
      %p292 = pneg %p291
      // Predicated region
      $region41: #{tpu_custom_call.1} parent=5 // pred_check
        _
      $region42: #{tpu_custom_call.1} parent=5 // pred_check_branch
        %294 = sbr.rel (%p291) target = $region44
      $region43: #{tpu_custom_call.1} parent=5 // pred_region
        %s295 = ssub.s32 %s21, 1
        // Predicated region
        $region45: #{tpu_custom_call.1} parent=43 // pred_check
          %p296 = pneg %p89
        $region46: #{tpu_custom_call.1} parent=43 // pred_check_branch
          %298 = sbr.rel (%p296) target = $region48
        $region47: #{tpu_custom_call.1} parent=43 // pred_region
          %299 = dma.done [#allocation4], 4096
        $region48: #{tpu_custom_call.1} parent=43 // pred_fallthru
          _
        // Predicated region
        $region49: #{tpu_custom_call.1} parent=43 // pred_check
          %p300 = pneg %p131
        $region50: #{tpu_custom_call.1} parent=43 // pred_check_branch
          %302 = sbr.rel (%p300) target = $region52
        $region51: #{tpu_custom_call.1} parent=43 // pred_region
          %303 = dma.done [#allocation7], 128
        $region52: #{tpu_custom_call.1} parent=43 // pred_fallthru
          _
        // Predicated region
        $region53: #{tpu_custom_call.1} parent=43 // pred_check
          %p304 = pneg %p152
        $region54: #{tpu_custom_call.1} parent=43 // pred_check_branch
          %306 = sbr.rel (%p304) target = $region56
        $region55: #{tpu_custom_call.1} parent=43 // pred_region
          %307 = dma.done [#allocation7], 128
        $region56: #{tpu_custom_call.1} parent=43 // pred_fallthru
          _
        %s308 = smul.u32 8, %s26
        %p309 = scmp.lt.s32.totalorder %s308, 15
        %s310 = scalar_select %p309, %s308, 15
        %s311 = smul.addr %s310, 4
        %s312 = scalar_lea.vmem %s0, %s311
        %p313 = pneg %p47
        %p314 = pneg %p44
        %p315 = pneg %p68
        %p316 = pneg %p65
        %p317 = pneg %p89
        %p318 = pneg %p86
        %p319 = pneg %p110
        %p320 = pneg %p107
        %p321 = pneg %p131
        %p322 = pneg %p128
        %p323 = pneg %p152
        %p324 = pneg %p149
        %p325 = pneg %p178
        %p326 = pneg %p175
        %s327 = sand.u32 %s165, 1
        %s328 = scalar_lea.sflag [#allocation5], %s327
        %s329 = sand.u32 %s165, 1
        %s330 = smul.addr %s329, 32
        %s331 = scalar_lea.vmem [#allocation9], %s330
        %p332 = pneg %p199
        %p333 = pneg %p196
        %p334 = pneg %p220
        %p335 = pneg %p217
        %s336 = smul.u32 8, %s26
        %p337 = scmp.lt.s32.totalorder %s336, 15
        %s338 = scalar_select %p337, %s336, 15
        %s339 = smul.addr %s338, 4
        %s340 = scalar_lea.vmem %s0, %s339
        %s341 = smul.u32 8, %s26
        %s342 = smul.u32 8, %s26
        %p344 = scmp.eq.s32.totalorder %s26, 0
        // Predicated region
        $region57: #{tpu_custom_call.1} parent=43 // pred_check
          %p345 = pneg %p344
        $region58: #{tpu_custom_call.1} parent=43 // pred_check_branch
          %347 = sbr.rel (%p345) target = $region60
        $region59: #{tpu_custom_call.1} parent=43 // pred_region
          %v348 = vld [vmem:[#allocation6] sm:$0xff]
          %349 = vst [vmem:[#allocation10] sm:$0xff] %v348
          %v350 = vld [vmem:[#allocation8] sm:$0xff]
          %351 = vst [vmem:[#allocation12] sm:$0xff] %v350
        $region60: #{tpu_custom_call.1} parent=43 // pred_fallthru
          _
        %v352 = vld [vmem:[%s340] sm:$0xf]
        %v353 = vld [vmem:[%s340 + $0x4] sm:$0xf]
        %v354 = vld [vmem:[%s340 + $0x8] sm:$0xf]
        %v355 = vld [vmem:[%s340 + $0xc] sm:$0xf]
        %v356 = vld [vmem:[%s340 + $0x10] sm:$0xf]
        %v357 = vld [vmem:[%s340 + $0x14] sm:$0xf]
        %v358 = vld [vmem:[%s340 + $0x18] sm:$0xf]
        %v359 = vld [vmem:[%s340 + $0x1c] sm:$0xf]
        %v360 = vld [vmem:[%s1] sm:$0xff]
        %v361 = vld [vmem:[%s1 + $0x8] sm:$0xff]
        %v362 = vld [vmem:[%s1 + $0x10] sm:$0xff]
        %v363 = vld [vmem:[%s1 + $0x18] sm:$0xff]
        %v364 = vld [vmem:[%s1 + $0x20] sm:$0xff]
        %v365 = vld [vmem:[%s1 + $0x28] sm:$0xff]
        %v366 = vld [vmem:[%s1 + $0x30] sm:$0xff]
        %v367 = vld [vmem:[%s1 + $0x38] sm:$0xff]
        %v368 = vld [vmem:[%s3] sm:$0xf]
        %v370 = vlaneseq
        %v371 = vshrl.u32 %v370, 7
        %v372 = vsub.s32 0, %v371
        %v373 = vrot.slane %v368, %v372
        %v374 = vlaneseq
        %v375 = vshrl.u32 %v374, 7
        %v376 = vsub.s32 1, %v375
        %v377 = vrot.slane %v368, %v376
        %v378 = vlaneseq
        %v379 = vshrl.u32 %v378, 7
        %v380 = vsub.s32 2, %v379
        %v381 = vrot.slane %v368, %v380
        %v382 = vlaneseq
        %v383 = vshrl.u32 %v382, 7
        %v384 = vsub.s32 3, %v383
        %v385 = vrot.slane %v368, %v384
        %v398 = vunpack.c.l.b16 %v352
        %v399 = vunpack.c.l.b16 %v353
        %v400 = vunpack.c.l.b16 %v354
        %v401 = vunpack.c.l.b16 %v355
        %v402 = vunpack.c.l.b16 %v356
        %v403 = vunpack.c.l.b16 %v357
        %v404 = vunpack.c.l.b16 %v358
        %v405 = vunpack.c.l.b16 %v359
        %v406 = vpack.c.b16 %v399, %v398
        %v407 = vpack.c.b16 %v401, %v400
        %v408 = vpack.c.b16 %v403, %v402
        %v409 = vpack.c.b16 %v405, %v404
        %v418 = vunpack.c.l.b16 %v360
        %v419 = vunpack.c.h.b16 %v360
        %v420 = vunpack.c.l.b16 %v361
        %v421 = vunpack.c.h.b16 %v361
        %v422 = vunpack.c.l.b16 %v362
        %v423 = vunpack.c.h.b16 %v362
        %v424 = vunpack.c.l.b16 %v363
        %v425 = vunpack.c.h.b16 %v363
        %v426 = vunpack.c.l.b16 %v364
        %v427 = vunpack.c.h.b16 %v364
        %v428 = vunpack.c.l.b16 %v365
        %v429 = vunpack.c.h.b16 %v365
        %v430 = vunpack.c.l.b16 %v366
        %v431 = vunpack.c.h.b16 %v366
        %v432 = vunpack.c.l.b16 %v367
        %v433 = vunpack.c.h.b16 %v367
        %v434 = vpack.c.b16 %v422, %v418
        %v435 = vpack.c.b16 %v423, %v419
        %v436 = vpack.c.b16 %v424, %v420
        %v437 = vpack.c.b16 %v425, %v421
        %v438 = vpack.c.b16 %v430, %v426
        %v439 = vpack.c.b16 %v431, %v427
        %v440 = vpack.c.b16 %v432, %v428
        %v441 = vpack.c.b16 %v433, %v429
        %vm450 = vcmask 261120
        %v452 = vsel %vm450, %v406, 0
        %v455 = vsel %vm450, %v407, 0
        %v458 = vsel %vm450, %v408, 0
        %v461 = vsel %vm450, %v409, 0
        %463 = vmatprep.subr.bf16.mxu0 %v435
        %464 = vmatpush1.bf16.msra.mxu0 %v434
        %465 = vmatprep.subr.bf16.mxu0 %v439
        %466 = vmatpush1.bf16.msra.mxu0 %v438
        %467 = vmatprep.subr.bf16.mxu0 0
        %468 = vmatpush1.bf16.msra.mxu0 0
        %469 = vmatprep.subr.bf16.mxu0 0
        %470 = vmatpush1.bf16.msra.mxu0 0
        %471 = vmatprep.subr.bf16.mxu0 0
        %472 = vmatpush1.bf16.msra.mxu0 0
        %473 = vmatprep.subr.bf16.mxu0 0
        %474 = vmatpush1.bf16.msra.mxu0 0
        %475 = vmatprep.subr.bf16.mxu0 0
        %476 = vmatpush1.bf16.msra.mxu0 0
        %477 = vmatprep.subr.bf16.mxu0 0
        %478 = vmatpush1.bf16.msra.mxu0 0
        %479 = vmatprep.subr.bf16.mxu0 0
        %480 = vmatpush1.bf16.msra.mxu0 0
        %481 = vmatprep.subr.bf16.mxu0 0
        %482 = vmatpush1.bf16.msra.mxu0 0
        %483 = vmatprep.subr.bf16.mxu0 0
        %484 = vmatpush1.bf16.msra.mxu0 0
        %485 = vmatprep.subr.bf16.mxu0 0
        %486 = vmatpush1.bf16.msra.mxu0 0
        %487 = vmatprep.subr.bf16.mxu0 0
        %488 = vmatpush1.bf16.msra.mxu0 0
        %489 = vmatprep.subr.bf16.mxu0 0
        %490 = vmatpush1.bf16.msra.mxu0 0
        %491 = vmatprep.subr.bf16.mxu0 0
        %492 = vmatpush1.bf16.msra.mxu0 0
        %493 = vmatprep.subr.bf16.mxu0 0
        %494 = vmatpush1.bf16.msra.mxu0 0
        %495 = vmatprep.mubr.bf16.mxu0 0
        %496 = vmatmul.mubr.bf16.gmra.mrb[0].mxu0 %v452
        %v497 = vpop.f32.mrb[0].mxu0
        %v498 = vadd.f32 %v373, %v497
        %v499 = vpop.f32.mrb[0].mxu0
        %v500 = vadd.f32 %v377, %v499
        %v501 = vpop.f32.mrb[0].mxu0
        %v502 = vadd.f32 %v373, %v501
        %v503 = vpop.f32.mrb[0].mxu0
        %v504 = vadd.f32 %v377, %v503
        %505 = vmatprep.mubr.bf16.mxu0 0
        %506 = vmatmul.mubr.bf16.gmra.mrb[0].mxu0 %v455
        %v507 = vpop.f32.mrb[0].mxu0
        %v508 = vadd.f32 %v373, %v507
        %v509 = vpop.f32.mrb[0].mxu0
        %v510 = vadd.f32 %v377, %v509
        %v511 = vpop.f32.mrb[0].mxu0
        %v512 = vadd.f32 %v373, %v511
        %v513 = vpop.f32.mrb[0].mxu0
        %v514 = vadd.f32 %v377, %v513
        %515 = vmatprep.mubr.bf16.mxu0 0
        %516 = vmatmul.mubr.bf16.gmra.mrb[0].mxu0 %v458
        %v517 = vpop.f32.mrb[0].mxu0
        %v518 = vadd.f32 %v373, %v517
        %v519 = vpop.f32.mrb[0].mxu0
        %v520 = vadd.f32 %v377, %v519
        %v521 = vpop.f32.mrb[0].mxu0
        %v522 = vadd.f32 %v373, %v521
        %v523 = vpop.f32.mrb[0].mxu0
        %v524 = vadd.f32 %v377, %v523
        %525 = vmatprep.mubr.bf16.mxu0 0
        %526 = vmatmul.mubr.bf16.gmra.mrb[0].mxu0 %v461
        %v527 = vpop.f32.mrb[0].mxu0
        %v528 = vadd.f32 %v373, %v527
        %v529 = vpop.f32.mrb[0].mxu0
        %v530 = vadd.f32 %v377, %v529
        %v531 = vpop.f32.mrb[0].mxu0
        %v532 = vadd.f32 %v373, %v531
        %v533 = vpop.f32.mrb[0].mxu0
        %v534 = vadd.f32 %v377, %v533
        %535 = vdwg.mxu0
        %536 = vmatprep.subr.bf16.mxu0 %v437
        %537 = vmatpush1.bf16.msra.mxu0 %v436
        %538 = vmatprep.subr.bf16.mxu0 %v441
        %539 = vmatpush1.bf16.msra.mxu0 %v440
        %540 = vmatprep.subr.bf16.mxu0 0
        %541 = vmatpush1.bf16.msra.mxu0 0
        %542 = vmatprep.subr.bf16.mxu0 0
        %543 = vmatpush1.bf16.msra.mxu0 0
        %544 = vmatprep.subr.bf16.mxu0 0
        %545 = vmatpush1.bf16.msra.mxu0 0
        %546 = vmatprep.subr.bf16.mxu0 0
        %547 = vmatpush1.bf16.msra.mxu0 0
        %548 = vmatprep.subr.bf16.mxu0 0
        %549 = vmatpush1.bf16.msra.mxu0 0
        %550 = vmatprep.subr.bf16.mxu0 0
        %551 = vmatpush1.bf16.msra.mxu0 0
        %552 = vmatprep.subr.bf16.mxu0 0
        %553 = vmatpush1.bf16.msra.mxu0 0
        %554 = vmatprep.subr.bf16.mxu0 0
        %555 = vmatpush1.bf16.msra.mxu0 0
        %556 = vmatprep.subr.bf16.mxu0 0
        %557 = vmatpush1.bf16.msra.mxu0 0
        %558 = vmatprep.subr.bf16.mxu0 0
        %559 = vmatpush1.bf16.msra.mxu0 0
        %560 = vmatprep.subr.bf16.mxu0 0
        %561 = vmatpush1.bf16.msra.mxu0 0
        %562 = vmatprep.subr.bf16.mxu0 0
        %563 = vmatpush1.bf16.msra.mxu0 0
        %564 = vmatprep.subr.bf16.mxu0 0
        %565 = vmatpush1.bf16.msra.mxu0 0
        %566 = vmatprep.subr.bf16.mxu0 0
        %567 = vmatpush1.bf16.msra.mxu0 0
        %568 = vmatprep.mubr.bf16.mxu0 0
        %569 = vmatmul.mubr.bf16.gmra.mrb[0].mxu0 %v452
        %v570 = vpop.f32.mrb[0].mxu0
        %v571 = vadd.f32 %v381, %v570
        %v572 = vpop.f32.mrb[0].mxu0
        %v573 = vadd.f32 %v385, %v572
        %v574 = vpop.f32.mrb[0].mxu0
        %v575 = vadd.f32 %v381, %v574
        %v576 = vpop.f32.mrb[0].mxu0
        %v577 = vadd.f32 %v385, %v576
        %578 = vmatprep.mubr.bf16.mxu0 0
        %579 = vmatmul.mubr.bf16.gmra.mrb[0].mxu0 %v455
        %v580 = vpop.f32.mrb[0].mxu0
        %v581 = vadd.f32 %v381, %v580
        %v582 = vpop.f32.mrb[0].mxu0
        %v583 = vadd.f32 %v385, %v582
        %v584 = vpop.f32.mrb[0].mxu0
        %v585 = vadd.f32 %v381, %v584
        %v586 = vpop.f32.mrb[0].mxu0
        %v587 = vadd.f32 %v385, %v586
        %588 = vmatprep.mubr.bf16.mxu0 0
        %589 = vmatmul.mubr.bf16.gmra.mrb[0].mxu0 %v458
        %v590 = vpop.f32.mrb[0].mxu0
        %v591 = vadd.f32 %v381, %v590
        %v592 = vpop.f32.mrb[0].mxu0
        %v593 = vadd.f32 %v385, %v592
        %v594 = vpop.f32.mrb[0].mxu0
        %v595 = vadd.f32 %v381, %v594
        %v596 = vpop.f32.mrb[0].mxu0
        %v597 = vadd.f32 %v385, %v596
        %598 = vmatprep.mubr.bf16.mxu0 0
        %599 = vmatmul.mubr.bf16.gmra.mrb[0].mxu0 %v461
        %v600 = vpop.f32.mrb[0].mxu0
        %v601 = vadd.f32 %v381, %v600
        %v602 = vpop.f32.mrb[0].mxu0
        %v603 = vadd.f32 %v385, %v602
        %v604 = vpop.f32.mrb[0].mxu0
        %v605 = vadd.f32 %v381, %v604
        %v606 = vpop.f32.mrb[0].mxu0
        %v607 = vadd.f32 %v385, %v606
        %608 = vdwg.mxu0
        %609 = vst [vmem:[#allocation2] sm:$0xff] %v498
        %610 = vst [vmem:[#allocation2 + $0x8] sm:$0xff] %v500
        %611 = vst [vmem:[#allocation2 + $0x10] sm:$0xff] %v571
        %612 = vst [vmem:[#allocation2 + $0x18] sm:$0xff] %v573
        %613 = vst [vmem:[#allocation2 + $0x20] sm:$0xff] %v502
        %614 = vst [vmem:[#allocation2 + $0x28] sm:$0xff] %v504
        %615 = vst [vmem:[#allocation2 + $0x30] sm:$0xff] %v575
        %616 = vst [vmem:[#allocation2 + $0x38] sm:$0xff] %v577
        %617 = vst [vmem:[#allocation2 + $0x40] sm:$0xff] %v508
        %618 = vst [vmem:[#allocation2 + $0x48] sm:$0xff] %v510
        %619 = vst [vmem:[#allocation2 + $0x50] sm:$0xff] %v581
        %620 = vst [vmem:[#allocation2 + $0x58] sm:$0xff] %v583
        %621 = vst [vmem:[#allocation2 + $0x60] sm:$0xff] %v512
        %622 = vst [vmem:[#allocation2 + $0x68] sm:$0xff] %v514
        %623 = vst [vmem:[#allocation2 + $0x70] sm:$0xff] %v585
        %624 = vst [vmem:[#allocation2 + $0x78] sm:$0xff] %v587
        %625 = vst [vmem:[#allocation2 + $0x80] sm:$0xff] %v518
        %626 = vst [vmem:[#allocation2 + $0x88] sm:$0xff] %v520
        %627 = vst [vmem:[#allocation2 + $0x90] sm:$0xff] %v591
        %628 = vst [vmem:[#allocation2 + $0x98] sm:$0xff] %v593
        %629 = vst [vmem:[#allocation2 + $0xa0] sm:$0xff] %v522
        %630 = vst [vmem:[#allocation2 + $0xa8] sm:$0xff] %v524
        %631 = vst [vmem:[#allocation2 + $0xb0] sm:$0xff] %v595
        %632 = vst [vmem:[#allocation2 + $0xb8] sm:$0xff] %v597
        %633 = vst [vmem:[#allocation2 + $0xc0] sm:$0xff] %v528
        %634 = vst [vmem:[#allocation2 + $0xc8] sm:$0xff] %v530
        %635 = vst [vmem:[#allocation2 + $0xd0] sm:$0xff] %v601
        %636 = vst [vmem:[#allocation2 + $0xd8] sm:$0xff] %v603
        %637 = vst [vmem:[#allocation2 + $0xe0] sm:$0xff] %v532
        %638 = vst [vmem:[#allocation2 + $0xe8] sm:$0xff] %v534
        %639 = vst [vmem:[#allocation2 + $0xf0] sm:$0xff] %v605
        %640 = vst [vmem:[#allocation2 + $0xf8] sm:$0xff] %v607
        %v641 = vld [vmem:[#allocation10] sm:$0xff]
        %v642 = vld [vmem:[#allocation12] sm:$0xff]
        %v643 = vld [vmem:[#allocation2] sm:$0xff]
        %v644 = vld [vmem:[#allocation2 + $0x8] sm:$0xff]
        %v645 = vld [vmem:[#allocation2 + $0x10] sm:$0xff]
        %v646 = vld [vmem:[#allocation2 + $0x18] sm:$0xff]
        %v647 = vpack.c.bf16 %v641, %v641
        %v648 = vld [vmem:[#allocation3] sm:$0xff]
        %v649 = vld [vmem:[#allocation3 + $0x8] sm:$0xff]
        %v650 = vld [vmem:[#allocation3 + $0x10] sm:$0xff]
        %v651 = vld [vmem:[#allocation3 + $0x18] sm:$0xff]
        %v652 = vld [vmem:[#allocation3 + $0x20] sm:$0xff]
        %v653 = vld [vmem:[#allocation3 + $0x28] sm:$0xff]
        %v654 = vld [vmem:[#allocation3 + $0x30] sm:$0xff]
        %v655 = vld [vmem:[#allocation3 + $0x38] sm:$0xff]
        %v656 = vld [vmem:[#allocation3 + $0x40] sm:$0xff]
        %v657 = vld [vmem:[#allocation3 + $0x48] sm:$0xff]
        %v658 = vld [vmem:[#allocation3 + $0x50] sm:$0xff]
        %v659 = vld [vmem:[#allocation3 + $0x58] sm:$0xff]
        %v660 = vld [vmem:[#allocation3 + $0x60] sm:$0xff]
        %v661 = vld [vmem:[#allocation3 + $0x68] sm:$0xff]
        %v662 = vld [vmem:[#allocation3 + $0x70] sm:$0xff]
        %v663 = vld [vmem:[#allocation3 + $0x78] sm:$0xff]
        %v664 = vld [vmem:[#allocation3 + $0x80] sm:$0xff]
        %v665 = vld [vmem:[#allocation3 + $0x88] sm:$0xff]
        %v666 = vld [vmem:[#allocation3 + $0x90] sm:$0xff]
        %v667 = vld [vmem:[#allocation3 + $0x98] sm:$0xff]
        %v668 = vld [vmem:[#allocation3 + $0xa0] sm:$0xff]
        %v669 = vld [vmem:[#allocation3 + $0xa8] sm:$0xff]
        %v670 = vld [vmem:[#allocation3 + $0xb0] sm:$0xff]
        %v671 = vld [vmem:[#allocation3 + $0xb8] sm:$0xff]
        %v672 = vld [vmem:[#allocation3 + $0xc0] sm:$0xff]
        %v673 = vld [vmem:[#allocation3 + $0xc8] sm:$0xff]
        %v674 = vld [vmem:[#allocation3 + $0xd0] sm:$0xff]
        %v675 = vld [vmem:[#allocation3 + $0xd8] sm:$0xff]
        %v676 = vld [vmem:[#allocation3 + $0xe0] sm:$0xff]
        %v677 = vld [vmem:[#allocation3 + $0xe8] sm:$0xff]
        %v678 = vld [vmem:[#allocation3 + $0xf0] sm:$0xff]
        %v679 = vld [vmem:[#allocation3 + $0xf8] sm:$0xff]
        %v712 = vunpack.c.l.b16 %v648
        %v713 = vunpack.c.h.b16 %v648
        %v714 = vunpack.c.l.b16 %v649
        %v715 = vunpack.c.h.b16 %v649
        %v716 = vunpack.c.l.b16 %v650
        %v717 = vunpack.c.h.b16 %v650
        %v718 = vunpack.c.l.b16 %v651
        %v719 = vunpack.c.h.b16 %v651
        %v720 = vunpack.c.l.b16 %v652
        %v721 = vunpack.c.h.b16 %v652
        %v722 = vunpack.c.l.b16 %v653
        %v723 = vunpack.c.h.b16 %v653
        %v724 = vunpack.c.l.b16 %v654
        %v725 = vunpack.c.h.b16 %v654
        %v726 = vunpack.c.l.b16 %v655
        %v727 = vunpack.c.h.b16 %v655
        %v728 = vunpack.c.l.b16 %v656
        %v729 = vunpack.c.h.b16 %v656
        %v730 = vunpack.c.l.b16 %v657
        %v731 = vunpack.c.h.b16 %v657
        %v732 = vunpack.c.l.b16 %v658
        %v733 = vunpack.c.h.b16 %v658
        %v734 = vunpack.c.l.b16 %v659
        %v735 = vunpack.c.h.b16 %v659
        %v736 = vunpack.c.l.b16 %v660
        %v737 = vunpack.c.h.b16 %v660
        %v738 = vunpack.c.l.b16 %v661
        %v739 = vunpack.c.h.b16 %v661
        %v740 = vunpack.c.l.b16 %v662
        %v741 = vunpack.c.h.b16 %v662
        %v742 = vunpack.c.l.b16 %v663
        %v743 = vunpack.c.h.b16 %v663
        %v744 = vunpack.c.l.b16 %v664
        %v745 = vunpack.c.h.b16 %v664
        %v746 = vunpack.c.l.b16 %v665
        %v747 = vunpack.c.h.b16 %v665
        %v748 = vunpack.c.l.b16 %v666
        %v749 = vunpack.c.h.b16 %v666
        %v750 = vunpack.c.l.b16 %v667
        %v751 = vunpack.c.h.b16 %v667
        %v752 = vunpack.c.l.b16 %v668
        %v753 = vunpack.c.h.b16 %v668
        %v754 = vunpack.c.l.b16 %v669
        %v755 = vunpack.c.h.b16 %v669
        %v756 = vunpack.c.l.b16 %v670
        %v757 = vunpack.c.h.b16 %v670
        %v758 = vunpack.c.l.b16 %v671
        %v759 = vunpack.c.h.b16 %v671
        %v760 = vunpack.c.l.b16 %v672
        %v761 = vunpack.c.h.b16 %v672
        %v762 = vunpack.c.l.b16 %v673
        %v763 = vunpack.c.h.b16 %v673
        %v764 = vunpack.c.l.b16 %v674
        %v765 = vunpack.c.h.b16 %v674
        %v766 = vunpack.c.l.b16 %v675
        %v767 = vunpack.c.h.b16 %v675
        %v768 = vunpack.c.l.b16 %v676
        %v769 = vunpack.c.h.b16 %v676
        %v770 = vunpack.c.l.b16 %v677
        %v771 = vunpack.c.h.b16 %v677
        %v772 = vunpack.c.l.b16 %v678
        %v773 = vunpack.c.h.b16 %v678
        %v774 = vunpack.c.l.b16 %v679
        %v775 = vunpack.c.h.b16 %v679
        %v776 = vpack.c.b16 %v716, %v712
        %v777 = vpack.c.b16 %v717, %v713
        %v778 = vpack.c.b16 %v718, %v714
        %v779 = vpack.c.b16 %v719, %v715
        %v780 = vpack.c.b16 %v724, %v720
        %v781 = vpack.c.b16 %v725, %v721
        %v782 = vpack.c.b16 %v726, %v722
        %v783 = vpack.c.b16 %v727, %v723
        %v784 = vpack.c.b16 %v732, %v728
        %v785 = vpack.c.b16 %v733, %v729
        %v786 = vpack.c.b16 %v734, %v730
        %v787 = vpack.c.b16 %v735, %v731
        %v788 = vpack.c.b16 %v740, %v736
        %v789 = vpack.c.b16 %v741, %v737
        %v790 = vpack.c.b16 %v742, %v738
        %v791 = vpack.c.b16 %v743, %v739
        %v792 = vpack.c.b16 %v748, %v744
        %v793 = vpack.c.b16 %v749, %v745
        %v794 = vpack.c.b16 %v750, %v746
        %v795 = vpack.c.b16 %v751, %v747
        %v796 = vpack.c.b16 %v756, %v752
        %v797 = vpack.c.b16 %v757, %v753
        %v798 = vpack.c.b16 %v758, %v754
        %v799 = vpack.c.b16 %v759, %v755
        %v800 = vpack.c.b16 %v764, %v760
        %v801 = vpack.c.b16 %v765, %v761
        %v802 = vpack.c.b16 %v766, %v762
        %v803 = vpack.c.b16 %v767, %v763
        %v804 = vpack.c.b16 %v772, %v768
        %v805 = vpack.c.b16 %v773, %v769
        %v806 = vpack.c.b16 %v774, %v770
        %v807 = vpack.c.b16 %v775, %v771
        %840 = vmatprep.subr.bf16.mxu0 %v777
        %841 = vmatpush1.bf16.msra.mxu0 %v776
        %842 = vmatprep.subr.bf16.mxu0 %v781
        %843 = vmatpush1.bf16.msra.mxu0 %v780
        %844 = vmatprep.subr.bf16.mxu0 %v785
        %845 = vmatpush1.bf16.msra.mxu0 %v784
        %846 = vmatprep.subr.bf16.mxu0 %v789
        %847 = vmatpush1.bf16.msra.mxu0 %v788
        %848 = vmatprep.subr.bf16.mxu0 %v793
        %849 = vmatpush1.bf16.msra.mxu0 %v792
        %850 = vmatprep.subr.bf16.mxu0 %v797
        %851 = vmatpush1.bf16.msra.mxu0 %v796
        %852 = vmatprep.subr.bf16.mxu0 %v801
        %853 = vmatpush1.bf16.msra.mxu0 %v800
        %854 = vmatprep.subr.bf16.mxu0 %v805
        %855 = vmatpush1.bf16.msra.mxu0 %v804
        %856 = vmatprep.subr.bf16.mxu0 0
        %857 = vmatpush1.bf16.msra.mxu0 0
        %858 = vmatprep.subr.bf16.mxu0 0
        %859 = vmatpush1.bf16.msra.mxu0 0
        %860 = vmatprep.subr.bf16.mxu0 0
        %861 = vmatpush1.bf16.msra.mxu0 0
        %862 = vmatprep.subr.bf16.mxu0 0
        %863 = vmatpush1.bf16.msra.mxu0 0
        %864 = vmatprep.subr.bf16.mxu0 0
        %865 = vmatpush1.bf16.msra.mxu0 0
        %866 = vmatprep.subr.bf16.mxu0 0
        %867 = vmatpush1.bf16.msra.mxu0 0
        %868 = vmatprep.subr.bf16.mxu0 0
        %869 = vmatpush1.bf16.msra.mxu0 0
        %870 = vmatprep.subr.bf16.mxu0 0
        %871 = vmatpush1.bf16.msra.mxu0 0
        %872 = vmatprep.mubr.bf16.mxu0 0
        %873 = vmatmul.mubr.bf16.gmra.mrb[0].mxu0 %v647
        %v874 = vpop.f32.mrb[0].mxu0
        %v875 = vadd.f32 0.0, %v874
        %v876 = vpop.f32.mrb[0].mxu0
        %v877 = vadd.f32 0.0, %v876
        %v878 = vpop.f32.mrb[0].mxu0
        %v879 = vpop.f32.mrb[0].mxu0
        %880 = vdwg.mxu0
        %881 = vmatprep.subr.bf16.mxu0 %v779
        %882 = vmatpush1.bf16.msra.mxu0 %v778
        %883 = vmatprep.subr.bf16.mxu0 %v783
        %884 = vmatpush1.bf16.msra.mxu0 %v782
        %885 = vmatprep.subr.bf16.mxu0 %v787
        %886 = vmatpush1.bf16.msra.mxu0 %v786
        %887 = vmatprep.subr.bf16.mxu0 %v791
        %888 = vmatpush1.bf16.msra.mxu0 %v790
        %889 = vmatprep.subr.bf16.mxu0 %v795
        %890 = vmatpush1.bf16.msra.mxu0 %v794
        %891 = vmatprep.subr.bf16.mxu0 %v799
        %892 = vmatpush1.bf16.msra.mxu0 %v798
        %893 = vmatprep.subr.bf16.mxu0 %v803
        %894 = vmatpush1.bf16.msra.mxu0 %v802
        %895 = vmatprep.subr.bf16.mxu0 %v807
        %896 = vmatpush1.bf16.msra.mxu0 %v806
        %897 = vmatprep.subr.bf16.mxu0 0
        %898 = vmatpush1.bf16.msra.mxu0 0
        %899 = vmatprep.subr.bf16.mxu0 0
        %900 = vmatpush1.bf16.msra.mxu0 0
        %901 = vmatprep.subr.bf16.mxu0 0
        %902 = vmatpush1.bf16.msra.mxu0 0
        %903 = vmatprep.subr.bf16.mxu0 0
        %904 = vmatpush1.bf16.msra.mxu0 0
        %905 = vmatprep.subr.bf16.mxu0 0
        %906 = vmatpush1.bf16.msra.mxu0 0
        %907 = vmatprep.subr.bf16.mxu0 0
        %908 = vmatpush1.bf16.msra.mxu0 0
        %909 = vmatprep.subr.bf16.mxu0 0
        %910 = vmatpush1.bf16.msra.mxu0 0
        %911 = vmatprep.subr.bf16.mxu0 0
        %912 = vmatpush1.bf16.msra.mxu0 0
        %913 = vmatprep.mubr.bf16.mxu0 0
        %914 = vmatmul.mubr.bf16.gmra.mrb[0].mxu0 %v647
        %v915 = vpop.f32.mrb[0].mxu0
        %v916 = vadd.f32 0.0, %v915
        %v917 = vpop.f32.mrb[0].mxu0
        %v918 = vadd.f32 0.0, %v917
        %v919 = vpop.f32.mrb[0].mxu0
        %v920 = vpop.f32.mrb[0].mxu0
        %921 = vdwg.mxu0
        %v922 = vadd.f32 %v643, %v875
        %v923 = vadd.f32 %v644, %v877
        %v924 = vadd.f32 %v645, %v916
        %v925 = vadd.f32 %v646, %v918
        %v926 = vxor.u32 %v922, 2147483648
        %v927 = vmul.f32 %v926, 1.442695
        %v928 = vpow.pop %v927
        %v929 = vadd.f32 %v928, 1.0
        %v930 = vrcp.pop %v929
        %v931 = vmul.f32 1.0, %v930
        %v932 = vxor.u32 %v923, 2147483648
        %v933 = vmul.f32 %v932, 1.442695
        %v934 = vpow.pop %v933
        %v935 = vadd.f32 %v934, 1.0
        %v936 = vrcp.pop %v935
        %v937 = vmul.f32 1.0, %v936
        %v938 = vxor.u32 %v924, 2147483648
        %v939 = vmul.f32 %v938, 1.442695
        %v940 = vpow.pop %v939
        %v941 = vadd.f32 %v940, 1.0
        %v942 = vrcp.pop %v941
        %v943 = vmul.f32 1.0, %v942
        %v944 = vtanh.pop %v925
        %v945 = vmul.f32 %v937, %v642
        %v946 = vmul.f32 %v931, %v944
        %v947 = vadd.f32 %v945, %v946
        %v948 = vtanh.pop %v947
        %v949 = vmul.f32 %v943, %v948
        %v950 = vpack.c.bf16 %v949, %v949
        %951 = vst [vmem:[%s331] sm:$0xf] %v950
        %v952 = vld [vmem:[#allocation2 + $0x20] sm:$0xff]
        %v953 = vld [vmem:[#allocation2 + $0x28] sm:$0xff]
        %v954 = vld [vmem:[#allocation2 + $0x30] sm:$0xff]
        %v955 = vld [vmem:[#allocation2 + $0x38] sm:$0xff]
        %v956 = vld [vmem:[#allocation3] sm:$0xff]
        %v957 = vld [vmem:[#allocation3 + $0x8] sm:$0xff]
        %v958 = vld [vmem:[#allocation3 + $0x10] sm:$0xff]
        %v959 = vld [vmem:[#allocation3 + $0x18] sm:$0xff]
        %v960 = vld [vmem:[#allocation3 + $0x20] sm:$0xff]
        %v961 = vld [vmem:[#allocation3 + $0x28] sm:$0xff]
        %v962 = vld [vmem:[#allocation3 + $0x30] sm:$0xff]
        %v963 = vld [vmem:[#allocation3 + $0x38] sm:$0xff]
        %v964 = vld [vmem:[#allocation3 + $0x40] sm:$0xff]
        %v965 = vld [vmem:[#allocation3 + $0x48] sm:$0xff]
        %v966 = vld [vmem:[#allocation3 + $0x50] sm:$0xff]
        %v967 = vld [vmem:[#allocation3 + $0x58] sm:$0xff]
        %v968 = vld [vmem:[#allocation3 + $0x60] sm:$0xff]
        %v969 = vld [vmem:[#allocation3 + $0x68] sm:$0xff]
        %v970 = vld [vmem:[#allocation3 + $0x70] sm:$0xff]
        %v971 = vld [vmem:[#allocation3 + $0x78] sm:$0xff]
        %v972 = vld [vmem:[#allocation3 + $0x80] sm:$0xff]
        %v973 = vld [vmem:[#allocation3 + $0x88] sm:$0xff]
        %v974 = vld [vmem:[#allocation3 + $0x90] sm:$0xff]
        %v975 = vld [vmem:[#allocation3 + $0x98] sm:$0xff]
        %v976 = vld [vmem:[#allocation3 + $0xa0] sm:$0xff]
        %v977 = vld [vmem:[#allocation3 + $0xa8] sm:$0xff]
        %v978 = vld [vmem:[#allocation3 + $0xb0] sm:$0xff]
        %v979 = vld [vmem:[#allocation3 + $0xb8] sm:$0xff]
        %v980 = vld [vmem:[#allocation3 + $0xc0] sm:$0xff]
        %v981 = vld [vmem:[#allocation3 + $0xc8] sm:$0xff]
        %v982 = vld [vmem:[#allocation3 + $0xd0] sm:$0xff]
        %v983 = vld [vmem:[#allocation3 + $0xd8] sm:$0xff]
        %v984 = vld [vmem:[#allocation3 + $0xe0] sm:$0xff]
        %v985 = vld [vmem:[#allocation3 + $0xe8] sm:$0xff]
        %v986 = vld [vmem:[#allocation3 + $0xf0] sm:$0xff]
        %v987 = vld [vmem:[#allocation3 + $0xf8] sm:$0xff]
        %v1020 = vunpack.c.l.b16 %v956
        %v1021 = vunpack.c.h.b16 %v956
        %v1022 = vunpack.c.l.b16 %v957
        %v1023 = vunpack.c.h.b16 %v957
        %v1024 = vunpack.c.l.b16 %v958
        %v1025 = vunpack.c.h.b16 %v958
        %v1026 = vunpack.c.l.b16 %v959
        %v1027 = vunpack.c.h.b16 %v959
        %v1028 = vunpack.c.l.b16 %v960
        %v1029 = vunpack.c.h.b16 %v960
        %v1030 = vunpack.c.l.b16 %v961
        %v1031 = vunpack.c.h.b16 %v961
        %v1032 = vunpack.c.l.b16 %v962
        %v1033 = vunpack.c.h.b16 %v962
        %v1034 = vunpack.c.l.b16 %v963
        %v1035 = vunpack.c.h.b16 %v963
        %v1036 = vunpack.c.l.b16 %v964
        %v1037 = vunpack.c.h.b16 %v964
        %v1038 = vunpack.c.l.b16 %v965
        %v1039 = vunpack.c.h.b16 %v965
        %v1040 = vunpack.c.l.b16 %v966
        %v1041 = vunpack.c.h.b16 %v966
        %v1042 = vunpack.c.l.b16 %v967
        %v1043 = vunpack.c.h.b16 %v967
        %v1044 = vunpack.c.l.b16 %v968
        %v1045 = vunpack.c.h.b16 %v968
        %v1046 = vunpack.c.l.b16 %v969
        %v1047 = vunpack.c.h.b16 %v969
        %v1048 = vunpack.c.l.b16 %v970
        %v1049 = vunpack.c.h.b16 %v970
        %v1050 = vunpack.c.l.b16 %v971
        %v1051 = vunpack.c.h.b16 %v971
        %v1052 = vunpack.c.l.b16 %v972
        %v1053 = vunpack.c.h.b16 %v972
        %v1054 = vunpack.c.l.b16 %v973
        %v1055 = vunpack.c.h.b16 %v973
        %v1056 = vunpack.c.l.b16 %v974
        %v1057 = vunpack.c.h.b16 %v974
        %v1058 = vunpack.c.l.b16 %v975
        %v1059 = vunpack.c.h.b16 %v975
        %v1060 = vunpack.c.l.b16 %v976
        %v1061 = vunpack.c.h.b16 %v976
        %v1062 = vunpack.c.l.b16 %v977
        %v1063 = vunpack.c.h.b16 %v977
        %v1064 = vunpack.c.l.b16 %v978
        %v1065 = vunpack.c.h.b16 %v978
        %v1066 = vunpack.c.l.b16 %v979
        %v1067 = vunpack.c.h.b16 %v979
        %v1068 = vunpack.c.l.b16 %v980
        %v1069 = vunpack.c.h.b16 %v980
        %v1070 = vunpack.c.l.b16 %v981
        %v1071 = vunpack.c.h.b16 %v981
        %v1072 = vunpack.c.l.b16 %v982
        %v1073 = vunpack.c.h.b16 %v982
        %v1074 = vunpack.c.l.b16 %v983
        %v1075 = vunpack.c.h.b16 %v983
        %v1076 = vunpack.c.l.b16 %v984
        %v1077 = vunpack.c.h.b16 %v984
        %v1078 = vunpack.c.l.b16 %v985
        %v1079 = vunpack.c.h.b16 %v985
        %v1080 = vunpack.c.l.b16 %v986
        %v1081 = vunpack.c.h.b16 %v986
        %v1082 = vunpack.c.l.b16 %v987
        %v1083 = vunpack.c.h.b16 %v987
        %v1084 = vpack.c.b16 %v1024, %v1020
        %v1085 = vpack.c.b16 %v1025, %v1021
        %v1086 = vpack.c.b16 %v1026, %v1022
        %v1087 = vpack.c.b16 %v1027, %v1023
        %v1088 = vpack.c.b16 %v1032, %v1028
        %v1089 = vpack.c.b16 %v1033, %v1029
        %v1090 = vpack.c.b16 %v1034, %v1030
        %v1091 = vpack.c.b16 %v1035, %v1031
        %v1092 = vpack.c.b16 %v1040, %v1036
        %v1093 = vpack.c.b16 %v1041, %v1037
        %v1094 = vpack.c.b16 %v1042, %v1038
        %v1095 = vpack.c.b16 %v1043, %v1039
        %v1096 = vpack.c.b16 %v1048, %v1044
        %v1097 = vpack.c.b16 %v1049, %v1045
        %v1098 = vpack.c.b16 %v1050, %v1046
        %v1099 = vpack.c.b16 %v1051, %v1047
        %v1100 = vpack.c.b16 %v1056, %v1052
        %v1101 = vpack.c.b16 %v1057, %v1053
        %v1102 = vpack.c.b16 %v1058, %v1054
        %v1103 = vpack.c.b16 %v1059, %v1055
        %v1104 = vpack.c.b16 %v1064, %v1060
        %v1105 = vpack.c.b16 %v1065, %v1061
        %v1106 = vpack.c.b16 %v1066, %v1062
        %v1107 = vpack.c.b16 %v1067, %v1063
        %v1108 = vpack.c.b16 %v1072, %v1068
        %v1109 = vpack.c.b16 %v1073, %v1069
        %v1110 = vpack.c.b16 %v1074, %v1070
        %v1111 = vpack.c.b16 %v1075, %v1071
        %v1112 = vpack.c.b16 %v1080, %v1076
        %v1113 = vpack.c.b16 %v1081, %v1077
        %v1114 = vpack.c.b16 %v1082, %v1078
        %v1115 = vpack.c.b16 %v1083, %v1079
        %1148 = vmatprep.subr.bf16.mxu0 %v1085
        %1149 = vmatpush1.bf16.msra.mxu0 %v1084
        %1150 = vmatprep.subr.bf16.mxu0 %v1089
        %1151 = vmatpush1.bf16.msra.mxu0 %v1088
        %1152 = vmatprep.subr.bf16.mxu0 %v1093
        %1153 = vmatpush1.bf16.msra.mxu0 %v1092
        %1154 = vmatprep.subr.bf16.mxu0 %v1097
        %1155 = vmatpush1.bf16.msra.mxu0 %v1096
        %1156 = vmatprep.subr.bf16.mxu0 %v1101
        %1157 = vmatpush1.bf16.msra.mxu0 %v1100
        %1158 = vmatprep.subr.bf16.mxu0 %v1105
        %1159 = vmatpush1.bf16.msra.mxu0 %v1104
        %1160 = vmatprep.subr.bf16.mxu0 %v1109
        %1161 = vmatpush1.bf16.msra.mxu0 %v1108
        %1162 = vmatprep.subr.bf16.mxu0 %v1113
        %1163 = vmatpush1.bf16.msra.mxu0 %v1112
        %1164 = vmatprep.subr.bf16.mxu0 0
        %1165 = vmatpush1.bf16.msra.mxu0 0
        %1166 = vmatprep.subr.bf16.mxu0 0
        %1167 = vmatpush1.bf16.msra.mxu0 0
        %1168 = vmatprep.subr.bf16.mxu0 0
        %1169 = vmatpush1.bf16.msra.mxu0 0
        %1170 = vmatprep.subr.bf16.mxu0 0
        %1171 = vmatpush1.bf16.msra.mxu0 0
        %1172 = vmatprep.subr.bf16.mxu0 0
        %1173 = vmatpush1.bf16.msra.mxu0 0
        %1174 = vmatprep.subr.bf16.mxu0 0
        %1175 = vmatpush1.bf16.msra.mxu0 0
        %1176 = vmatprep.subr.bf16.mxu0 0
        %1177 = vmatpush1.bf16.msra.mxu0 0
        %1178 = vmatprep.subr.bf16.mxu0 0
        %1179 = vmatpush1.bf16.msra.mxu0 0
        %1180 = vmatprep.mubr.bf16.mxu0 0
        %1181 = vmatmul.mubr.bf16.gmra.mrb[0].mxu0 %v950
        %v1182 = vpop.f32.mrb[0].mxu0
        %v1183 = vadd.f32 0.0, %v1182
        %v1184 = vpop.f32.mrb[0].mxu0
        %v1185 = vadd.f32 0.0, %v1184
        %v1186 = vpop.f32.mrb[0].mxu0
        %v1187 = vpop.f32.mrb[0].mxu0
        %1188 = vdwg.mxu0
        %1189 = vmatprep.subr.bf16.mxu0 %v1087
        %1190 = vmatpush1.bf16.msra.mxu0 %v1086
        %1191 = vmatprep.subr.bf16.mxu0 %v1091
        %1192 = vmatpush1.bf16.msra.mxu0 %v1090
        %1193 = vmatprep.subr.bf16.mxu0 %v1095
        %1194 = vmatpush1.bf16.msra.mxu0 %v1094
        %1195 = vmatprep.subr.bf16.mxu0 %v1099
        %1196 = vmatpush1.bf16.msra.mxu0 %v1098
        %1197 = vmatprep.subr.bf16.mxu0 %v1103
        %1198 = vmatpush1.bf16.msra.mxu0 %v1102
        %1199 = vmatprep.subr.bf16.mxu0 %v1107
        %1200 = vmatpush1.bf16.msra.mxu0 %v1106
        %1201 = vmatprep.subr.bf16.mxu0 %v1111
        %1202 = vmatpush1.bf16.msra.mxu0 %v1110
        %1203 = vmatprep.subr.bf16.mxu0 %v1115
        %1204 = vmatpush1.bf16.msra.mxu0 %v1114
        %1205 = vmatprep.subr.bf16.mxu0 0
        %1206 = vmatpush1.bf16.msra.mxu0 0
        %1207 = vmatprep.subr.bf16.mxu0 0
        %1208 = vmatpush1.bf16.msra.mxu0 0
        %1209 = vmatprep.subr.bf16.mxu0 0
        %1210 = vmatpush1.bf16.msra.mxu0 0
        %1211 = vmatprep.subr.bf16.mxu0 0
        %1212 = vmatpush1.bf16.msra.mxu0 0
        %1213 = vmatprep.subr.bf16.mxu0 0
        %1214 = vmatpush1.bf16.msra.mxu0 0
        %1215 = vmatprep.subr.bf16.mxu0 0
        %1216 = vmatpush1.bf16.msra.mxu0 0
        %1217 = vmatprep.subr.bf16.mxu0 0
        %1218 = vmatpush1.bf16.msra.mxu0 0
        %1219 = vmatprep.subr.bf16.mxu0 0
        %1220 = vmatpush1.bf16.msra.mxu0 0
        %1221 = vmatprep.mubr.bf16.mxu0 0
        %1222 = vmatmul.mubr.bf16.gmra.mrb[0].mxu0 %v950
        %v1223 = vpop.f32.mrb[0].mxu0
        %v1224 = vadd.f32 0.0, %v1223
        %v1225 = vpop.f32.mrb[0].mxu0
        %v1226 = vadd.f32 0.0, %v1225
        %v1227 = vpop.f32.mrb[0].mxu0
        %v1228 = vpop.f32.mrb[0].mxu0
        %1229 = vdwg.mxu0
        %v1230 = vadd.f32 %v952, %v1183
        %v1231 = vadd.f32 %v953, %v1185
        %v1232 = vadd.f32 %v954, %v1224
        %v1233 = vadd.f32 %v955, %v1226
        %v1234 = vxor.u32 %v1230, 2147483648
        %v1235 = vmul.f32 %v1234, 1.442695
        %v1236 = vpow.pop %v1235
        %v1237 = vadd.f32 %v1236, 1.0
        %v1238 = vrcp.pop %v1237
        %v1239 = vmul.f32 1.0, %v1238
        %v1240 = vxor.u32 %v1231, 2147483648
        %v1241 = vmul.f32 %v1240, 1.442695
        %v1242 = vpow.pop %v1241
        %v1243 = vadd.f32 %v1242, 1.0
        %v1244 = vrcp.pop %v1243
        %v1245 = vmul.f32 1.0, %v1244
        %v1246 = vxor.u32 %v1232, 2147483648
        %v1247 = vmul.f32 %v1246, 1.442695
        %v1248 = vpow.pop %v1247
        %v1249 = vadd.f32 %v1248, 1.0
        %v1250 = vrcp.pop %v1249
        %v1251 = vmul.f32 1.0, %v1250
        %v1252 = vtanh.pop %v1233
        %v1253 = vmul.f32 %v1245, %v947
        %v1254 = vmul.f32 %v1239, %v1252
        %v1255 = vadd.f32 %v1253, %v1254
        %v1256 = vtanh.pop %v1255
        %v1257 = vmul.f32 %v1251, %v1256
        %v1258 = vpack.c.bf16 %v1257, %v1257
        %1259 = vst [vmem:[%s331 + $0x4] sm:$0xf] %v1258
        %v1260 = vld [vmem:[#allocation2 + $0x40] sm:$0xff]
        %v1261 = vld [vmem:[#allocation2 + $0x48] sm:$0xff]
        %v1262 = vld [vmem:[#allocation2 + $0x50] sm:$0xff]
        %v1263 = vld [vmem:[#allocation2 + $0x58] sm:$0xff]
        %v1264 = vld [vmem:[#allocation3] sm:$0xff]
        %v1265 = vld [vmem:[#allocation3 + $0x8] sm:$0xff]
        %v1266 = vld [vmem:[#allocation3 + $0x10] sm:$0xff]
        %v1267 = vld [vmem:[#allocation3 + $0x18] sm:$0xff]
        %v1268 = vld [vmem:[#allocation3 + $0x20] sm:$0xff]
        %v1269 = vld [vmem:[#allocation3 + $0x28] sm:$0xff]
        %v1270 = vld [vmem:[#allocation3 + $0x30] sm:$0xff]
        %v1271 = vld [vmem:[#allocation3 + $0x38] sm:$0xff]
        %v1272 = vld [vmem:[#allocation3 + $0x40] sm:$0xff]
        %v1273 = vld [vmem:[#allocation3 + $0x48] sm:$0xff]
        %v1274 = vld [vmem:[#allocation3 + $0x50] sm:$0xff]
        %v1275 = vld [vmem:[#allocation3 + $0x58] sm:$0xff]
        %v1276 = vld [vmem:[#allocation3 + $0x60] sm:$0xff]
        %v1277 = vld [vmem:[#allocation3 + $0x68] sm:$0xff]
        %v1278 = vld [vmem:[#allocation3 + $0x70] sm:$0xff]
        %v1279 = vld [vmem:[#allocation3 + $0x78] sm:$0xff]
        %v1280 = vld [vmem:[#allocation3 + $0x80] sm:$0xff]
        %v1281 = vld [vmem:[#allocation3 + $0x88] sm:$0xff]
        %v1282 = vld [vmem:[#allocation3 + $0x90] sm:$0xff]
        %v1283 = vld [vmem:[#allocation3 + $0x98] sm:$0xff]
        %v1284 = vld [vmem:[#allocation3 + $0xa0] sm:$0xff]
        %v1285 = vld [vmem:[#allocation3 + $0xa8] sm:$0xff]
        %v1286 = vld [vmem:[#allocation3 + $0xb0] sm:$0xff]
        %v1287 = vld [vmem:[#allocation3 + $0xb8] sm:$0xff]
        %v1288 = vld [vmem:[#allocation3 + $0xc0] sm:$0xff]
        %v1289 = vld [vmem:[#allocation3 + $0xc8] sm:$0xff]
        %v1290 = vld [vmem:[#allocation3 + $0xd0] sm:$0xff]
        %v1291 = vld [vmem:[#allocation3 + $0xd8] sm:$0xff]
        %v1292 = vld [vmem:[#allocation3 + $0xe0] sm:$0xff]
        %v1293 = vld [vmem:[#allocation3 + $0xe8] sm:$0xff]
        %v1294 = vld [vmem:[#allocation3 + $0xf0] sm:$0xff]
        %v1295 = vld [vmem:[#allocation3 + $0xf8] sm:$0xff]
        %v1328 = vunpack.c.l.b16 %v1264
        %v1329 = vunpack.c.h.b16 %v1264
        %v1330 = vunpack.c.l.b16 %v1265
        %v1331 = vunpack.c.h.b16 %v1265
        %v1332 = vunpack.c.l.b16 %v1266
        %v1333 = vunpack.c.h.b16 %v1266
        %v1334 = vunpack.c.l.b16 %v1267
        %v1335 = vunpack.c.h.b16 %v1267
        %v1336 = vunpack.c.l.b16 %v1268
        %v1337 = vunpack.c.h.b16 %v1268
        %v1338 = vunpack.c.l.b16 %v1269
        %v1339 = vunpack.c.h.b16 %v1269
        %v1340 = vunpack.c.l.b16 %v1270
        %v1341 = vunpack.c.h.b16 %v1270
        %v1342 = vunpack.c.l.b16 %v1271
        %v1343 = vunpack.c.h.b16 %v1271
        %v1344 = vunpack.c.l.b16 %v1272
        %v1345 = vunpack.c.h.b16 %v1272
        %v1346 = vunpack.c.l.b16 %v1273
        %v1347 = vunpack.c.h.b16 %v1273
        %v1348 = vunpack.c.l.b16 %v1274
        %v1349 = vunpack.c.h.b16 %v1274
        %v1350 = vunpack.c.l.b16 %v1275
        %v1351 = vunpack.c.h.b16 %v1275
        %v1352 = vunpack.c.l.b16 %v1276
        %v1353 = vunpack.c.h.b16 %v1276
        %v1354 = vunpack.c.l.b16 %v1277
        %v1355 = vunpack.c.h.b16 %v1277
        %v1356 = vunpack.c.l.b16 %v1278
        %v1357 = vunpack.c.h.b16 %v1278
        %v1358 = vunpack.c.l.b16 %v1279
        %v1359 = vunpack.c.h.b16 %v1279
        %v1360 = vunpack.c.l.b16 %v1280
        %v1361 = vunpack.c.h.b16 %v1280
        %v1362 = vunpack.c.l.b16 %v1281
        %v1363 = vunpack.c.h.b16 %v1281
        %v1364 = vunpack.c.l.b16 %v1282
        %v1365 = vunpack.c.h.b16 %v1282
        %v1366 = vunpack.c.l.b16 %v1283
        %v1367 = vunpack.c.h.b16 %v1283
        %v1368 = vunpack.c.l.b16 %v1284
        %v1369 = vunpack.c.h.b16 %v1284
        %v1370 = vunpack.c.l.b16 %v1285
        %v1371 = vunpack.c.h.b16 %v1285
        %v1372 = vunpack.c.l.b16 %v1286
        %v1373 = vunpack.c.h.b16 %v1286
        %v1374 = vunpack.c.l.b16 %v1287
        %v1375 = vunpack.c.h.b16 %v1287
        %v1376 = vunpack.c.l.b16 %v1288
        %v1377 = vunpack.c.h.b16 %v1288
        %v1378 = vunpack.c.l.b16 %v1289
        %v1379 = vunpack.c.h.b16 %v1289
        %v1380 = vunpack.c.l.b16 %v1290
        %v1381 = vunpack.c.h.b16 %v1290
        %v1382 = vunpack.c.l.b16 %v1291
        %v1383 = vunpack.c.h.b16 %v1291
        %v1384 = vunpack.c.l.b16 %v1292
        %v1385 = vunpack.c.h.b16 %v1292
        %v1386 = vunpack.c.l.b16 %v1293
        %v1387 = vunpack.c.h.b16 %v1293
        %v1388 = vunpack.c.l.b16 %v1294
        %v1389 = vunpack.c.h.b16 %v1294
        %v1390 = vunpack.c.l.b16 %v1295
        %v1391 = vunpack.c.h.b16 %v1295
        %v1392 = vpack.c.b16 %v1332, %v1328
        %v1393 = vpack.c.b16 %v1333, %v1329
        %v1394 = vpack.c.b16 %v1334, %v1330
        %v1395 = vpack.c.b16 %v1335, %v1331
        %v1396 = vpack.c.b16 %v1340, %v1336
        %v1397 = vpack.c.b16 %v1341, %v1337
        %v1398 = vpack.c.b16 %v1342, %v1338
        %v1399 = vpack.c.b16 %v1343, %v1339
        %v1400 = vpack.c.b16 %v1348, %v1344
        %v1401 = vpack.c.b16 %v1349, %v1345
        %v1402 = vpack.c.b16 %v1350, %v1346
        %v1403 = vpack.c.b16 %v1351, %v1347
        %v1404 = vpack.c.b16 %v1356, %v1352
        %v1405 = vpack.c.b16 %v1357, %v1353
        %v1406 = vpack.c.b16 %v1358, %v1354
        %v1407 = vpack.c.b16 %v1359, %v1355
        %v1408 = vpack.c.b16 %v1364, %v1360
        %v1409 = vpack.c.b16 %v1365, %v1361
        %v1410 = vpack.c.b16 %v1366, %v1362
        %v1411 = vpack.c.b16 %v1367, %v1363
        %v1412 = vpack.c.b16 %v1372, %v1368
        %v1413 = vpack.c.b16 %v1373, %v1369
        %v1414 = vpack.c.b16 %v1374, %v1370
        %v1415 = vpack.c.b16 %v1375, %v1371
        %v1416 = vpack.c.b16 %v1380, %v1376
        %v1417 = vpack.c.b16 %v1381, %v1377
        %v1418 = vpack.c.b16 %v1382, %v1378
        %v1419 = vpack.c.b16 %v1383, %v1379
        %v1420 = vpack.c.b16 %v1388, %v1384
        %v1421 = vpack.c.b16 %v1389, %v1385
        %v1422 = vpack.c.b16 %v1390, %v1386
        %v1423 = vpack.c.b16 %v1391, %v1387
        %1456 = vmatprep.subr.bf16.mxu0 %v1393
        %1457 = vmatpush1.bf16.msra.mxu0 %v1392
        %1458 = vmatprep.subr.bf16.mxu0 %v1397
        %1459 = vmatpush1.bf16.msra.mxu0 %v1396
        %1460 = vmatprep.subr.bf16.mxu0 %v1401
        %1461 = vmatpush1.bf16.msra.mxu0 %v1400
        %1462 = vmatprep.subr.bf16.mxu0 %v1405
        %1463 = vmatpush1.bf16.msra.mxu0 %v1404
        %1464 = vmatprep.subr.bf16.mxu0 %v1409
        %1465 = vmatpush1.bf16.msra.mxu0 %v1408
        %1466 = vmatprep.subr.bf16.mxu0 %v1413
        %1467 = vmatpush1.bf16.msra.mxu0 %v1412
        %1468 = vmatprep.subr.bf16.mxu0 %v1417
        %1469 = vmatpush1.bf16.msra.mxu0 %v1416
        %1470 = vmatprep.subr.bf16.mxu0 %v1421
        %1471 = vmatpush1.bf16.msra.mxu0 %v1420
        %1472 = vmatprep.subr.bf16.mxu0 0
        %1473 = vmatpush1.bf16.msra.mxu0 0
        %1474 = vmatprep.subr.bf16.mxu0 0
        %1475 = vmatpush1.bf16.msra.mxu0 0
        %1476 = vmatprep.subr.bf16.mxu0 0
        %1477 = vmatpush1.bf16.msra.mxu0 0
        %1478 = vmatprep.subr.bf16.mxu0 0
        %1479 = vmatpush1.bf16.msra.mxu0 0
        %1480 = vmatprep.subr.bf16.mxu0 0
        %1481 = vmatpush1.bf16.msra.mxu0 0
        %1482 = vmatprep.subr.bf16.mxu0 0
        %1483 = vmatpush1.bf16.msra.mxu0 0
        %1484 = vmatprep.subr.bf16.mxu0 0
        %1485 = vmatpush1.bf16.msra.mxu0 0
        %1486 = vmatprep.subr.bf16.mxu0 0
        %1487 = vmatpush1.bf16.msra.mxu0 0
        %1488 = vmatprep.mubr.bf16.mxu0 0
        %1489 = vmatmul.mubr.bf16.gmra.mrb[0].mxu0 %v1258
        %v1490 = vpop.f32.mrb[0].mxu0
        %v1491 = vadd.f32 0.0, %v1490
        %v1492 = vpop.f32.mrb[0].mxu0
        %v1493 = vadd.f32 0.0, %v1492
        %v1494 = vpop.f32.mrb[0].mxu0
        %v1495 = vpop.f32.mrb[0].mxu0
        %1496 = vdwg.mxu0
        %1497 = vmatprep.subr.bf16.mxu0 %v1395
        %1498 = vmatpush1.bf16.msra.mxu0 %v1394
        %1499 = vmatprep.subr.bf16.mxu0 %v1399
        %1500 = vmatpush1.bf16.msra.mxu0 %v1398
        %1501 = vmatprep.subr.bf16.mxu0 %v1403
        %1502 = vmatpush1.bf16.msra.mxu0 %v1402
        %1503 = vmatprep.subr.bf16.mxu0 %v1407
        %1504 = vmatpush1.bf16.msra.mxu0 %v1406
        %1505 = vmatprep.subr.bf16.mxu0 %v1411
        %1506 = vmatpush1.bf16.msra.mxu0 %v1410
        %1507 = vmatprep.subr.bf16.mxu0 %v1415
        %1508 = vmatpush1.bf16.msra.mxu0 %v1414
        %1509 = vmatprep.subr.bf16.mxu0 %v1419
        %1510 = vmatpush1.bf16.msra.mxu0 %v1418
        %1511 = vmatprep.subr.bf16.mxu0 %v1423
        %1512 = vmatpush1.bf16.msra.mxu0 %v1422
        %1513 = vmatprep.subr.bf16.mxu0 0
        %1514 = vmatpush1.bf16.msra.mxu0 0
        %1515 = vmatprep.subr.bf16.mxu0 0
        %1516 = vmatpush1.bf16.msra.mxu0 0
        %1517 = vmatprep.subr.bf16.mxu0 0
        %1518 = vmatpush1.bf16.msra.mxu0 0
        %1519 = vmatprep.subr.bf16.mxu0 0
        %1520 = vmatpush1.bf16.msra.mxu0 0
        %1521 = vmatprep.subr.bf16.mxu0 0
        %1522 = vmatpush1.bf16.msra.mxu0 0
        %1523 = vmatprep.subr.bf16.mxu0 0
        %1524 = vmatpush1.bf16.msra.mxu0 0
        %1525 = vmatprep.subr.bf16.mxu0 0
        %1526 = vmatpush1.bf16.msra.mxu0 0
        %1527 = vmatprep.subr.bf16.mxu0 0
        %1528 = vmatpush1.bf16.msra.mxu0 0
        %1529 = vmatprep.mubr.bf16.mxu0 0
        %1530 = vmatmul.mubr.bf16.gmra.mrb[0].mxu0 %v1258
        %v1531 = vpop.f32.mrb[0].mxu0
        %v1532 = vadd.f32 0.0, %v1531
        %v1533 = vpop.f32.mrb[0].mxu0
        %v1534 = vadd.f32 0.0, %v1533
        %v1535 = vpop.f32.mrb[0].mxu0
        %v1536 = vpop.f32.mrb[0].mxu0
        %1537 = vdwg.mxu0
        %v1538 = vadd.f32 %v1260, %v1491
        %v1539 = vadd.f32 %v1261, %v1493
        %v1540 = vadd.f32 %v1262, %v1532
        %v1541 = vadd.f32 %v1263, %v1534
        %v1542 = vxor.u32 %v1538, 2147483648
        %v1543 = vmul.f32 %v1542, 1.442695
        %v1544 = vpow.pop %v1543
        %v1545 = vadd.f32 %v1544, 1.0
        %v1546 = vrcp.pop %v1545
        %v1547 = vmul.f32 1.0, %v1546
        %v1548 = vxor.u32 %v1539, 2147483648
        %v1549 = vmul.f32 %v1548, 1.442695
        %v1550 = vpow.pop %v1549
        %v1551 = vadd.f32 %v1550, 1.0
        %v1552 = vrcp.pop %v1551
        %v1553 = vmul.f32 1.0, %v1552
        %v1554 = vxor.u32 %v1540, 2147483648
        %v1555 = vmul.f32 %v1554, 1.442695
        %v1556 = vpow.pop %v1555
        %v1557 = vadd.f32 %v1556, 1.0
        %v1558 = vrcp.pop %v1557
        %v1559 = vmul.f32 1.0, %v1558
        %v1560 = vtanh.pop %v1541
        %v1561 = vmul.f32 %v1553, %v1255
        %v1562 = vmul.f32 %v1547, %v1560
        %v1563 = vadd.f32 %v1561, %v1562
        %v1564 = vtanh.pop %v1563
        %v1565 = vmul.f32 %v1559, %v1564
        %v1566 = vpack.c.bf16 %v1565, %v1565
        %1567 = vst [vmem:[%s331 + $0x8] sm:$0xf] %v1566
        %v1568 = vld [vmem:[#allocation2 + $0x60] sm:$0xff]
        %v1569 = vld [vmem:[#allocation2 + $0x68] sm:$0xff]
        %v1570 = vld [vmem:[#allocation2 + $0x70] sm:$0xff]
        %v1571 = vld [vmem:[#allocation2 + $0x78] sm:$0xff]
        %v1572 = vld [vmem:[#allocation3] sm:$0xff]
        %v1573 = vld [vmem:[#allocation3 + $0x8] sm:$0xff]
        %v1574 = vld [vmem:[#allocation3 + $0x10] sm:$0xff]
        %v1575 = vld [vmem:[#allocation3 + $0x18] sm:$0xff]
        %v1576 = vld [vmem:[#allocation3 + $0x20] sm:$0xff]
        %v1577 = vld [vmem:[#allocation3 + $0x28] sm:$0xff]
        %v1578 = vld [vmem:[#allocation3 + $0x30] sm:$0xff]
        %v1579 = vld [vmem:[#allocation3 + $0x38] sm:$0xff]
        %v1580 = vld [vmem:[#allocation3 + $0x40] sm:$0xff]
        %v1581 = vld [vmem:[#allocation3 + $0x48] sm:$0xff]
        %v1582 = vld [vmem:[#allocation3 + $0x50] sm:$0xff]
        %v1583 = vld [vmem:[#allocation3 + $0x58] sm:$0xff]
        %v1584 = vld [vmem:[#allocation3 + $0x60] sm:$0xff]
        %v1585 = vld [vmem:[#allocation3 + $0x68] sm:$0xff]
        %v1586 = vld [vmem:[#allocation3 + $0x70] sm:$0xff]
        %v1587 = vld [vmem:[#allocation3 + $0x78] sm:$0xff]
        %v1588 = vld [vmem:[#allocation3 + $0x80] sm:$0xff]
        %v1589 = vld [vmem:[#allocation3 + $0x88] sm:$0xff]
        %v1590 = vld [vmem:[#allocation3 + $0x90] sm:$0xff]
        %v1591 = vld [vmem:[#allocation3 + $0x98] sm:$0xff]
        %v1592 = vld [vmem:[#allocation3 + $0xa0] sm:$0xff]
        %v1593 = vld [vmem:[#allocation3 + $0xa8] sm:$0xff]
        %v1594 = vld [vmem:[#allocation3 + $0xb0] sm:$0xff]
        %v1595 = vld [vmem:[#allocation3 + $0xb8] sm:$0xff]
        %v1596 = vld [vmem:[#allocation3 + $0xc0] sm:$0xff]
        %v1597 = vld [vmem:[#allocation3 + $0xc8] sm:$0xff]
        %v1598 = vld [vmem:[#allocation3 + $0xd0] sm:$0xff]
        %v1599 = vld [vmem:[#allocation3 + $0xd8] sm:$0xff]
        %v1600 = vld [vmem:[#allocation3 + $0xe0] sm:$0xff]
        %v1601 = vld [vmem:[#allocation3 + $0xe8] sm:$0xff]
        %v1602 = vld [vmem:[#allocation3 + $0xf0] sm:$0xff]
        %v1603 = vld [vmem:[#allocation3 + $0xf8] sm:$0xff]
        %v1636 = vunpack.c.l.b16 %v1572
        %v1637 = vunpack.c.h.b16 %v1572
        %v1638 = vunpack.c.l.b16 %v1573
        %v1639 = vunpack.c.h.b16 %v1573
        %v1640 = vunpack.c.l.b16 %v1574
        %v1641 = vunpack.c.h.b16 %v1574
        %v1642 = vunpack.c.l.b16 %v1575
        %v1643 = vunpack.c.h.b16 %v1575
        %v1644 = vunpack.c.l.b16 %v1576
        %v1645 = vunpack.c.h.b16 %v1576
        %v1646 = vunpack.c.l.b16 %v1577
        %v1647 = vunpack.c.h.b16 %v1577
        %v1648 = vunpack.c.l.b16 %v1578
        %v1649 = vunpack.c.h.b16 %v1578
        %v1650 = vunpack.c.l.b16 %v1579
        %v1651 = vunpack.c.h.b16 %v1579
        %v1652 = vunpack.c.l.b16 %v1580
        %v1653 = vunpack.c.h.b16 %v1580
        %v1654 = vunpack.c.l.b16 %v1581
        %v1655 = vunpack.c.h.b16 %v1581
        %v1656 = vunpack.c.l.b16 %v1582
        %v1657 = vunpack.c.h.b16 %v1582
        %v1658 = vunpack.c.l.b16 %v1583
        %v1659 = vunpack.c.h.b16 %v1583
        %v1660 = vunpack.c.l.b16 %v1584
        %v1661 = vunpack.c.h.b16 %v1584
        %v1662 = vunpack.c.l.b16 %v1585
        %v1663 = vunpack.c.h.b16 %v1585
        %v1664 = vunpack.c.l.b16 %v1586
        %v1665 = vunpack.c.h.b16 %v1586
        %v1666 = vunpack.c.l.b16 %v1587
        %v1667 = vunpack.c.h.b16 %v1587
        %v1668 = vunpack.c.l.b16 %v1588
        %v1669 = vunpack.c.h.b16 %v1588
        %v1670 = vunpack.c.l.b16 %v1589
        %v1671 = vunpack.c.h.b16 %v1589
        %v1672 = vunpack.c.l.b16 %v1590
        %v1673 = vunpack.c.h.b16 %v1590
        %v1674 = vunpack.c.l.b16 %v1591
        %v1675 = vunpack.c.h.b16 %v1591
        %v1676 = vunpack.c.l.b16 %v1592
        %v1677 = vunpack.c.h.b16 %v1592
        %v1678 = vunpack.c.l.b16 %v1593
        %v1679 = vunpack.c.h.b16 %v1593
        %v1680 = vunpack.c.l.b16 %v1594
        %v1681 = vunpack.c.h.b16 %v1594
        %v1682 = vunpack.c.l.b16 %v1595
        %v1683 = vunpack.c.h.b16 %v1595
        %v1684 = vunpack.c.l.b16 %v1596
        %v1685 = vunpack.c.h.b16 %v1596
        %v1686 = vunpack.c.l.b16 %v1597
        %v1687 = vunpack.c.h.b16 %v1597
        %v1688 = vunpack.c.l.b16 %v1598
        %v1689 = vunpack.c.h.b16 %v1598
        %v1690 = vunpack.c.l.b16 %v1599
        %v1691 = vunpack.c.h.b16 %v1599
        %v1692 = vunpack.c.l.b16 %v1600
        %v1693 = vunpack.c.h.b16 %v1600
        %v1694 = vunpack.c.l.b16 %v1601
        %v1695 = vunpack.c.h.b16 %v1601
        %v1696 = vunpack.c.l.b16 %v1602
        %v1697 = vunpack.c.h.b16 %v1602
        %v1698 = vunpack.c.l.b16 %v1603
        %v1699 = vunpack.c.h.b16 %v1603
        %v1700 = vpack.c.b16 %v1640, %v1636
        %v1701 = vpack.c.b16 %v1641, %v1637
        %v1702 = vpack.c.b16 %v1642, %v1638
        %v1703 = vpack.c.b16 %v1643, %v1639
        %v1704 = vpack.c.b16 %v1648, %v1644
        %v1705 = vpack.c.b16 %v1649, %v1645
        %v1706 = vpack.c.b16 %v1650, %v1646
        %v1707 = vpack.c.b16 %v1651, %v1647
        %v1708 = vpack.c.b16 %v1656, %v1652
        %v1709 = vpack.c.b16 %v1657, %v1653
        %v1710 = vpack.c.b16 %v1658, %v1654
        %v1711 = vpack.c.b16 %v1659, %v1655
        %v1712 = vpack.c.b16 %v1664, %v1660
        %v1713 = vpack.c.b16 %v1665, %v1661
        %v1714 = vpack.c.b16 %v1666, %v1662
        %v1715 = vpack.c.b16 %v1667, %v1663
        %v1716 = vpack.c.b16 %v1672, %v1668
        %v1717 = vpack.c.b16 %v1673, %v1669
        %v1718 = vpack.c.b16 %v1674, %v1670
        %v1719 = vpack.c.b16 %v1675, %v1671
        %v1720 = vpack.c.b16 %v1680, %v1676
        %v1721 = vpack.c.b16 %v1681, %v1677
        %v1722 = vpack.c.b16 %v1682, %v1678
        %v1723 = vpack.c.b16 %v1683, %v1679
        %v1724 = vpack.c.b16 %v1688, %v1684
        %v1725 = vpack.c.b16 %v1689, %v1685
        %v1726 = vpack.c.b16 %v1690, %v1686
        %v1727 = vpack.c.b16 %v1691, %v1687
        %v1728 = vpack.c.b16 %v1696, %v1692
        %v1729 = vpack.c.b16 %v1697, %v1693
        %v1730 = vpack.c.b16 %v1698, %v1694
        %v1731 = vpack.c.b16 %v1699, %v1695
        %1764 = vmatprep.subr.bf16.mxu0 %v1701
        %1765 = vmatpush1.bf16.msra.mxu0 %v1700
        %1766 = vmatprep.subr.bf16.mxu0 %v1705
        %1767 = vmatpush1.bf16.msra.mxu0 %v1704
        %1768 = vmatprep.subr.bf16.mxu0 %v1709
        %1769 = vmatpush1.bf16.msra.mxu0 %v1708
        %1770 = vmatprep.subr.bf16.mxu0 %v1713
        %1771 = vmatpush1.bf16.msra.mxu0 %v1712
        %1772 = vmatprep.subr.bf16.mxu0 %v1717
        %1773 = vmatpush1.bf16.msra.mxu0 %v1716
        %1774 = vmatprep.subr.bf16.mxu0 %v1721
        %1775 = vmatpush1.bf16.msra.mxu0 %v1720
        %1776 = vmatprep.subr.bf16.mxu0 %v1725
        %1777 = vmatpush1.bf16.msra.mxu0 %v1724
        %1778 = vmatprep.subr.bf16.mxu0 %v1729
        %1779 = vmatpush1.bf16.msra.mxu0 %v1728
        %1780 = vmatprep.subr.bf16.mxu0 0
        %1781 = vmatpush1.bf16.msra.mxu0 0
        %1782 = vmatprep.subr.bf16.mxu0 0
        %1783 = vmatpush1.bf16.msra.mxu0 0
        %1784 = vmatprep.subr.bf16.mxu0 0
        %1785 = vmatpush1.bf16.msra.mxu0 0
        %1786 = vmatprep.subr.bf16.mxu0 0
        %1787 = vmatpush1.bf16.msra.mxu0 0
        %1788 = vmatprep.subr.bf16.mxu0 0
        %1789 = vmatpush1.bf16.msra.mxu0 0
        %1790 = vmatprep.subr.bf16.mxu0 0
        %1791 = vmatpush1.bf16.msra.mxu0 0
        %1792 = vmatprep.subr.bf16.mxu0 0
        %1793 = vmatpush1.bf16.msra.mxu0 0
        %1794 = vmatprep.subr.bf16.mxu0 0
        %1795 = vmatpush1.bf16.msra.mxu0 0
        %1796 = vmatprep.mubr.bf16.mxu0 0
        %1797 = vmatmul.mubr.bf16.gmra.mrb[0].mxu0 %v1566
        %v1798 = vpop.f32.mrb[0].mxu0
        %v1799 = vadd.f32 0.0, %v1798
        %v1800 = vpop.f32.mrb[0].mxu0
        %v1801 = vadd.f32 0.0, %v1800
        %v1802 = vpop.f32.mrb[0].mxu0
        %v1803 = vpop.f32.mrb[0].mxu0
        %1804 = vdwg.mxu0
        %1805 = vmatprep.subr.bf16.mxu0 %v1703
        %1806 = vmatpush1.bf16.msra.mxu0 %v1702
        %1807 = vmatprep.subr.bf16.mxu0 %v1707
        %1808 = vmatpush1.bf16.msra.mxu0 %v1706
        %1809 = vmatprep.subr.bf16.mxu0 %v1711
        %1810 = vmatpush1.bf16.msra.mxu0 %v1710
        %1811 = vmatprep.subr.bf16.mxu0 %v1715
        %1812 = vmatpush1.bf16.msra.mxu0 %v1714
        %1813 = vmatprep.subr.bf16.mxu0 %v1719
        %1814 = vmatpush1.bf16.msra.mxu0 %v1718
        %1815 = vmatprep.subr.bf16.mxu0 %v1723
        %1816 = vmatpush1.bf16.msra.mxu0 %v1722
        %1817 = vmatprep.subr.bf16.mxu0 %v1727
        %1818 = vmatpush1.bf16.msra.mxu0 %v1726
        %1819 = vmatprep.subr.bf16.mxu0 %v1731
        %1820 = vmatpush1.bf16.msra.mxu0 %v1730
        %1821 = vmatprep.subr.bf16.mxu0 0
        %1822 = vmatpush1.bf16.msra.mxu0 0
        %1823 = vmatprep.subr.bf16.mxu0 0
        %1824 = vmatpush1.bf16.msra.mxu0 0
        %1825 = vmatprep.subr.bf16.mxu0 0
        %1826 = vmatpush1.bf16.msra.mxu0 0
        %1827 = vmatprep.subr.bf16.mxu0 0
        %1828 = vmatpush1.bf16.msra.mxu0 0
        %1829 = vmatprep.subr.bf16.mxu0 0
        %1830 = vmatpush1.bf16.msra.mxu0 0
        %1831 = vmatprep.subr.bf16.mxu0 0
        %1832 = vmatpush1.bf16.msra.mxu0 0
        %1833 = vmatprep.subr.bf16.mxu0 0
        %1834 = vmatpush1.bf16.msra.mxu0 0
        %1835 = vmatprep.subr.bf16.mxu0 0
        %1836 = vmatpush1.bf16.msra.mxu0 0
        %1837 = vmatprep.mubr.bf16.mxu0 0
        %1838 = vmatmul.mubr.bf16.gmra.mrb[0].mxu0 %v1566
        %v1839 = vpop.f32.mrb[0].mxu0
        %v1840 = vadd.f32 0.0, %v1839
        %v1841 = vpop.f32.mrb[0].mxu0
        %v1842 = vadd.f32 0.0, %v1841
        %v1843 = vpop.f32.mrb[0].mxu0
        %v1844 = vpop.f32.mrb[0].mxu0
        %1845 = vdwg.mxu0
        %v1846 = vadd.f32 %v1568, %v1799
        %v1847 = vadd.f32 %v1569, %v1801
        %v1848 = vadd.f32 %v1570, %v1840
        %v1849 = vadd.f32 %v1571, %v1842
        %v1850 = vxor.u32 %v1846, 2147483648
        %v1851 = vmul.f32 %v1850, 1.442695
        %v1852 = vpow.pop %v1851
        %v1853 = vadd.f32 %v1852, 1.0
        %v1854 = vrcp.pop %v1853
        %v1855 = vmul.f32 1.0, %v1854
        %v1856 = vxor.u32 %v1847, 2147483648
        %v1857 = vmul.f32 %v1856, 1.442695
        %v1858 = vpow.pop %v1857
        %v1859 = vadd.f32 %v1858, 1.0
        %v1860 = vrcp.pop %v1859
        %v1861 = vmul.f32 1.0, %v1860
        %v1862 = vxor.u32 %v1848, 2147483648
        %v1863 = vmul.f32 %v1862, 1.442695
        %v1864 = vpow.pop %v1863
        %v1865 = vadd.f32 %v1864, 1.0
        %v1866 = vrcp.pop %v1865
        %v1867 = vmul.f32 1.0, %v1866
        %v1868 = vtanh.pop %v1849
        %v1869 = vmul.f32 %v1861, %v1563
        %v1870 = vmul.f32 %v1855, %v1868
        %v1871 = vadd.f32 %v1869, %v1870
        %v1872 = vtanh.pop %v1871
        %v1873 = vmul.f32 %v1867, %v1872
        %v1874 = vpack.c.bf16 %v1873, %v1873
        %1875 = vst [vmem:[%s331 + $0xc] sm:$0xf] %v1874
        %v1876 = vld [vmem:[#allocation2 + $0x80] sm:$0xff]
        %v1877 = vld [vmem:[#allocation2 + $0x88] sm:$0xff]
        %v1878 = vld [vmem:[#allocation2 + $0x90] sm:$0xff]
        %v1879 = vld [vmem:[#allocation2 + $0x98] sm:$0xff]
        %v1880 = vld [vmem:[#allocation3] sm:$0xff]
        %v1881 = vld [vmem:[#allocation3 + $0x8] sm:$0xff]
        %v1882 = vld [vmem:[#allocation3 + $0x10] sm:$0xff]
        %v1883 = vld [vmem:[#allocation3 + $0x18] sm:$0xff]
        %v1884 = vld [vmem:[#allocation3 + $0x20] sm:$0xff]
        %v1885 = vld [vmem:[#allocation3 + $0x28] sm:$0xff]
        %v1886 = vld [vmem:[#allocation3 + $0x30] sm:$0xff]
        %v1887 = vld [vmem:[#allocation3 + $0x38] sm:$0xff]
        %v1888 = vld [vmem:[#allocation3 + $0x40] sm:$0xff]
        %v1889 = vld [vmem:[#allocation3 + $0x48] sm:$0xff]
        %v1890 = vld [vmem:[#allocation3 + $0x50] sm:$0xff]
        %v1891 = vld [vmem:[#allocation3 + $0x58] sm:$0xff]
        %v1892 = vld [vmem:[#allocation3 + $0x60] sm:$0xff]
        %v1893 = vld [vmem:[#allocation3 + $0x68] sm:$0xff]
        %v1894 = vld [vmem:[#allocation3 + $0x70] sm:$0xff]
        %v1895 = vld [vmem:[#allocation3 + $0x78] sm:$0xff]
        %v1896 = vld [vmem:[#allocation3 + $0x80] sm:$0xff]
        %v1897 = vld [vmem:[#allocation3 + $0x88] sm:$0xff]
        %v1898 = vld [vmem:[#allocation3 + $0x90] sm:$0xff]
        %v1899 = vld [vmem:[#allocation3 + $0x98] sm:$0xff]
        %v1900 = vld [vmem:[#allocation3 + $0xa0] sm:$0xff]
        %v1901 = vld [vmem:[#allocation3 + $0xa8] sm:$0xff]
        %v1902 = vld [vmem:[#allocation3 + $0xb0] sm:$0xff]
        %v1903 = vld [vmem:[#allocation3 + $0xb8] sm:$0xff]
        %v1904 = vld [vmem:[#allocation3 + $0xc0] sm:$0xff]
        %v1905 = vld [vmem:[#allocation3 + $0xc8] sm:$0xff]
        %v1906 = vld [vmem:[#allocation3 + $0xd0] sm:$0xff]
        %v1907 = vld [vmem:[#allocation3 + $0xd8] sm:$0xff]
        %v1908 = vld [vmem:[#allocation3 + $0xe0] sm:$0xff]
        %v1909 = vld [vmem:[#allocation3 + $0xe8] sm:$0xff]
        %v1910 = vld [vmem:[#allocation3 + $0xf0] sm:$0xff]
        %v1911 = vld [vmem:[#allocation3 + $0xf8] sm:$0xff]
        %v1944 = vunpack.c.l.b16 %v1880
        %v1945 = vunpack.c.h.b16 %v1880
        %v1946 = vunpack.c.l.b16 %v1881
        %v1947 = vunpack.c.h.b16 %v1881
        %v1948 = vunpack.c.l.b16 %v1882
        %v1949 = vunpack.c.h.b16 %v1882
        %v1950 = vunpack.c.l.b16 %v1883
        %v1951 = vunpack.c.h.b16 %v1883
        %v1952 = vunpack.c.l.b16 %v1884
        %v1953 = vunpack.c.h.b16 %v1884
        %v1954 = vunpack.c.l.b16 %v1885
        %v1955 = vunpack.c.h.b16 %v1885
        %v1956 = vunpack.c.l.b16 %v1886
        %v1957 = vunpack.c.h.b16 %v1886
        %v1958 = vunpack.c.l.b16 %v1887
        %v1959 = vunpack.c.h.b16 %v1887
        %v1960 = vunpack.c.l.b16 %v1888
        %v1961 = vunpack.c.h.b16 %v1888
        %v1962 = vunpack.c.l.b16 %v1889
        %v1963 = vunpack.c.h.b16 %v1889
        %v1964 = vunpack.c.l.b16 %v1890
        %v1965 = vunpack.c.h.b16 %v1890
        %v1966 = vunpack.c.l.b16 %v1891
        %v1967 = vunpack.c.h.b16 %v1891
        %v1968 = vunpack.c.l.b16 %v1892
        %v1969 = vunpack.c.h.b16 %v1892
        %v1970 = vunpack.c.l.b16 %v1893
        %v1971 = vunpack.c.h.b16 %v1893
        %v1972 = vunpack.c.l.b16 %v1894
        %v1973 = vunpack.c.h.b16 %v1894
        %v1974 = vunpack.c.l.b16 %v1895
        %v1975 = vunpack.c.h.b16 %v1895
        %v1976 = vunpack.c.l.b16 %v1896
        %v1977 = vunpack.c.h.b16 %v1896
        %v1978 = vunpack.c.l.b16 %v1897
        %v1979 = vunpack.c.h.b16 %v1897
        %v1980 = vunpack.c.l.b16 %v1898
        %v1981 = vunpack.c.h.b16 %v1898
        %v1982 = vunpack.c.l.b16 %v1899
        %v1983 = vunpack.c.h.b16 %v1899
        %v1984 = vunpack.c.l.b16 %v1900
        %v1985 = vunpack.c.h.b16 %v1900
        %v1986 = vunpack.c.l.b16 %v1901
        %v1987 = vunpack.c.h.b16 %v1901
        %v1988 = vunpack.c.l.b16 %v1902
        %v1989 = vunpack.c.h.b16 %v1902
        %v1990 = vunpack.c.l.b16 %v1903
        %v1991 = vunpack.c.h.b16 %v1903
        %v1992 = vunpack.c.l.b16 %v1904
        %v1993 = vunpack.c.h.b16 %v1904
        %v1994 = vunpack.c.l.b16 %v1905
        %v1995 = vunpack.c.h.b16 %v1905
        %v1996 = vunpack.c.l.b16 %v1906
        %v1997 = vunpack.c.h.b16 %v1906
        %v1998 = vunpack.c.l.b16 %v1907
        %v1999 = vunpack.c.h.b16 %v1907
        %v2000 = vunpack.c.l.b16 %v1908
        %v2001 = vunpack.c.h.b16 %v1908
        %v2002 = vunpack.c.l.b16 %v1909
        %v2003 = vunpack.c.h.b16 %v1909
        %v2004 = vunpack.c.l.b16 %v1910
        %v2005 = vunpack.c.h.b16 %v1910
        %v2006 = vunpack.c.l.b16 %v1911
        %v2007 = vunpack.c.h.b16 %v1911
        %v2008 = vpack.c.b16 %v1948, %v1944
        %v2009 = vpack.c.b16 %v1949, %v1945
        %v2010 = vpack.c.b16 %v1950, %v1946
        %v2011 = vpack.c.b16 %v1951, %v1947
        %v2012 = vpack.c.b16 %v1956, %v1952
        %v2013 = vpack.c.b16 %v1957, %v1953
        %v2014 = vpack.c.b16 %v1958, %v1954
        %v2015 = vpack.c.b16 %v1959, %v1955
        %v2016 = vpack.c.b16 %v1964, %v1960
        %v2017 = vpack.c.b16 %v1965, %v1961
        %v2018 = vpack.c.b16 %v1966, %v1962
        %v2019 = vpack.c.b16 %v1967, %v1963
        %v2020 = vpack.c.b16 %v1972, %v1968
        %v2021 = vpack.c.b16 %v1973, %v1969
        %v2022 = vpack.c.b16 %v1974, %v1970
        %v2023 = vpack.c.b16 %v1975, %v1971
        %v2024 = vpack.c.b16 %v1980, %v1976
        %v2025 = vpack.c.b16 %v1981, %v1977
        %v2026 = vpack.c.b16 %v1982, %v1978
        %v2027 = vpack.c.b16 %v1983, %v1979
        %v2028 = vpack.c.b16 %v1988, %v1984
        %v2029 = vpack.c.b16 %v1989, %v1985
        %v2030 = vpack.c.b16 %v1990, %v1986
        %v2031 = vpack.c.b16 %v1991, %v1987
        %v2032 = vpack.c.b16 %v1996, %v1992
        %v2033 = vpack.c.b16 %v1997, %v1993
        %v2034 = vpack.c.b16 %v1998, %v1994
        %v2035 = vpack.c.b16 %v1999, %v1995
        %v2036 = vpack.c.b16 %v2004, %v2000
        %v2037 = vpack.c.b16 %v2005, %v2001
        %v2038 = vpack.c.b16 %v2006, %v2002
        %v2039 = vpack.c.b16 %v2007, %v2003
        %2072 = vmatprep.subr.bf16.mxu0 %v2009
        %2073 = vmatpush1.bf16.msra.mxu0 %v2008
        %2074 = vmatprep.subr.bf16.mxu0 %v2013
        %2075 = vmatpush1.bf16.msra.mxu0 %v2012
        %2076 = vmatprep.subr.bf16.mxu0 %v2017
        %2077 = vmatpush1.bf16.msra.mxu0 %v2016
        %2078 = vmatprep.subr.bf16.mxu0 %v2021
        %2079 = vmatpush1.bf16.msra.mxu0 %v2020
        %2080 = vmatprep.subr.bf16.mxu0 %v2025
        %2081 = vmatpush1.bf16.msra.mxu0 %v2024
        %2082 = vmatprep.subr.bf16.mxu0 %v2029
        %2083 = vmatpush1.bf16.msra.mxu0 %v2028
        %2084 = vmatprep.subr.bf16.mxu0 %v2033
        %2085 = vmatpush1.bf16.msra.mxu0 %v2032
        %2086 = vmatprep.subr.bf16.mxu0 %v2037
        %2087 = vmatpush1.bf16.msra.mxu0 %v2036
        %2088 = vmatprep.subr.bf16.mxu0 0
        %2089 = vmatpush1.bf16.msra.mxu0 0
        %2090 = vmatprep.subr.bf16.mxu0 0
        %2091 = vmatpush1.bf16.msra.mxu0 0
        %2092 = vmatprep.subr.bf16.mxu0 0
        %2093 = vmatpush1.bf16.msra.mxu0 0
        %2094 = vmatprep.subr.bf16.mxu0 0
        %2095 = vmatpush1.bf16.msra.mxu0 0
        %2096 = vmatprep.subr.bf16.mxu0 0
        %2097 = vmatpush1.bf16.msra.mxu0 0
        %2098 = vmatprep.subr.bf16.mxu0 0
        %2099 = vmatpush1.bf16.msra.mxu0 0
        %2100 = vmatprep.subr.bf16.mxu0 0
        %2101 = vmatpush1.bf16.msra.mxu0 0
        %2102 = vmatprep.subr.bf16.mxu0 0
        %2103 = vmatpush1.bf16.msra.mxu0 0
        %2104 = vmatprep.mubr.bf16.mxu0 0
        %2105 = vmatmul.mubr.bf16.gmra.mrb[0].mxu0 %v1874
        %v2106 = vpop.f32.mrb[0].mxu0
        %v2107 = vadd.f32 0.0, %v2106
        %v2108 = vpop.f32.mrb[0].mxu0
        %v2109 = vadd.f32 0.0, %v2108
        %v2110 = vpop.f32.mrb[0].mxu0
        %v2111 = vpop.f32.mrb[0].mxu0
        %2112 = vdwg.mxu0
        %2113 = vmatprep.subr.bf16.mxu0 %v2011
        %2114 = vmatpush1.bf16.msra.mxu0 %v2010
        %2115 = vmatprep.subr.bf16.mxu0 %v2015
        %2116 = vmatpush1.bf16.msra.mxu0 %v2014
        %2117 = vmatprep.subr.bf16.mxu0 %v2019
        %2118 = vmatpush1.bf16.msra.mxu0 %v2018
        %2119 = vmatprep.subr.bf16.mxu0 %v2023
        %2120 = vmatpush1.bf16.msra.mxu0 %v2022
        %2121 = vmatprep.subr.bf16.mxu0 %v2027
        %2122 = vmatpush1.bf16.msra.mxu0 %v2026
        %2123 = vmatprep.subr.bf16.mxu0 %v2031
        %2124 = vmatpush1.bf16.msra.mxu0 %v2030
        %2125 = vmatprep.subr.bf16.mxu0 %v2035
        %2126 = vmatpush1.bf16.msra.mxu0 %v2034
        %2127 = vmatprep.subr.bf16.mxu0 %v2039
        %2128 = vmatpush1.bf16.msra.mxu0 %v2038
        %2129 = vmatprep.subr.bf16.mxu0 0
        %2130 = vmatpush1.bf16.msra.mxu0 0
        %2131 = vmatprep.subr.bf16.mxu0 0
        %2132 = vmatpush1.bf16.msra.mxu0 0
        %2133 = vmatprep.subr.bf16.mxu0 0
        %2134 = vmatpush1.bf16.msra.mxu0 0
        %2135 = vmatprep.subr.bf16.mxu0 0
        %2136 = vmatpush1.bf16.msra.mxu0 0
        %2137 = vmatprep.subr.bf16.mxu0 0
        %2138 = vmatpush1.bf16.msra.mxu0 0
        %2139 = vmatprep.subr.bf16.mxu0 0
        %2140 = vmatpush1.bf16.msra.mxu0 0
        %2141 = vmatprep.subr.bf16.mxu0 0
        %2142 = vmatpush1.bf16.msra.mxu0 0
        %2143 = vmatprep.subr.bf16.mxu0 0
        %2144 = vmatpush1.bf16.msra.mxu0 0
        %2145 = vmatprep.mubr.bf16.mxu0 0
        %2146 = vmatmul.mubr.bf16.gmra.mrb[0].mxu0 %v1874
        %v2147 = vpop.f32.mrb[0].mxu0
        %v2148 = vadd.f32 0.0, %v2147
        %v2149 = vpop.f32.mrb[0].mxu0
        %v2150 = vadd.f32 0.0, %v2149
        %v2151 = vpop.f32.mrb[0].mxu0
        %v2152 = vpop.f32.mrb[0].mxu0
        %2153 = vdwg.mxu0
        %v2154 = vadd.f32 %v1876, %v2107
        %v2155 = vadd.f32 %v1877, %v2109
        %v2156 = vadd.f32 %v1878, %v2148
        %v2157 = vadd.f32 %v1879, %v2150
        %v2158 = vxor.u32 %v2154, 2147483648
        %v2159 = vmul.f32 %v2158, 1.442695
        %v2160 = vpow.pop %v2159
        %v2161 = vadd.f32 %v2160, 1.0
        %v2162 = vrcp.pop %v2161
        %v2163 = vmul.f32 1.0, %v2162
        %v2164 = vxor.u32 %v2155, 2147483648
        %v2165 = vmul.f32 %v2164, 1.442695
        %v2166 = vpow.pop %v2165
        %v2167 = vadd.f32 %v2166, 1.0
        %v2168 = vrcp.pop %v2167
        %v2169 = vmul.f32 1.0, %v2168
        %v2170 = vxor.u32 %v2156, 2147483648
        %v2171 = vmul.f32 %v2170, 1.442695
        %v2172 = vpow.pop %v2171
        %v2173 = vadd.f32 %v2172, 1.0
        %v2174 = vrcp.pop %v2173
        %v2175 = vmul.f32 1.0, %v2174
        %v2176 = vtanh.pop %v2157
        %v2177 = vmul.f32 %v2169, %v1871
        %v2178 = vmul.f32 %v2163, %v2176
        %v2179 = vadd.f32 %v2177, %v2178
        %v2180 = vtanh.pop %v2179
        %v2181 = vmul.f32 %v2175, %v2180
        %v2182 = vpack.c.bf16 %v2181, %v2181
        %2183 = vst [vmem:[%s331 + $0x10] sm:$0xf] %v2182
        %v2184 = vld [vmem:[#allocation2 + $0xa0] sm:$0xff]
        %v2185 = vld [vmem:[#allocation2 + $0xa8] sm:$0xff]
        %v2186 = vld [vmem:[#allocation2 + $0xb0] sm:$0xff]
        %v2187 = vld [vmem:[#allocation2 + $0xb8] sm:$0xff]
        %v2188 = vld [vmem:[#allocation3] sm:$0xff]
        %v2189 = vld [vmem:[#allocation3 + $0x8] sm:$0xff]
        %v2190 = vld [vmem:[#allocation3 + $0x10] sm:$0xff]
        %v2191 = vld [vmem:[#allocation3 + $0x18] sm:$0xff]
        %v2192 = vld [vmem:[#allocation3 + $0x20] sm:$0xff]
        %v2193 = vld [vmem:[#allocation3 + $0x28] sm:$0xff]
        %v2194 = vld [vmem:[#allocation3 + $0x30] sm:$0xff]
        %v2195 = vld [vmem:[#allocation3 + $0x38] sm:$0xff]
        %v2196 = vld [vmem:[#allocation3 + $0x40] sm:$0xff]
        %v2197 = vld [vmem:[#allocation3 + $0x48] sm:$0xff]
        %v2198 = vld [vmem:[#allocation3 + $0x50] sm:$0xff]
        %v2199 = vld [vmem:[#allocation3 + $0x58] sm:$0xff]
        %v2200 = vld [vmem:[#allocation3 + $0x60] sm:$0xff]
        %v2201 = vld [vmem:[#allocation3 + $0x68] sm:$0xff]
        %v2202 = vld [vmem:[#allocation3 + $0x70] sm:$0xff]
        %v2203 = vld [vmem:[#allocation3 + $0x78] sm:$0xff]
        %v2204 = vld [vmem:[#allocation3 + $0x80] sm:$0xff]
        %v2205 = vld [vmem:[#allocation3 + $0x88] sm:$0xff]
        %v2206 = vld [vmem:[#allocation3 + $0x90] sm:$0xff]
        %v2207 = vld [vmem:[#allocation3 + $0x98] sm:$0xff]
        %v2208 = vld [vmem:[#allocation3 + $0xa0] sm:$0xff]
        %v2209 = vld [vmem:[#allocation3 + $0xa8] sm:$0xff]
        %v2210 = vld [vmem:[#allocation3 + $0xb0] sm:$0xff]
        %v2211 = vld [vmem:[#allocation3 + $0xb8] sm:$0xff]
        %v2212 = vld [vmem:[#allocation3 + $0xc0] sm:$0xff]
        %v2213 = vld [vmem:[#allocation3 + $0xc8] sm:$0xff]
        %v2214 = vld [vmem:[#allocation3 + $0xd0] sm:$0xff]
        %v2215 = vld [vmem:[#allocation3 + $0xd8] sm:$0xff]
        %v2216 = vld [vmem:[#allocation3 + $0xe0] sm:$0xff]
        %v2217 = vld [vmem:[#allocation3 + $0xe8] sm:$0xff]
        %v2218 = vld [vmem:[#allocation3 + $0xf0] sm:$0xff]
        %v2219 = vld [vmem:[#allocation3 + $0xf8] sm:$0xff]
        %v2252 = vunpack.c.l.b16 %v2188
        %v2253 = vunpack.c.h.b16 %v2188
        %v2254 = vunpack.c.l.b16 %v2189
        %v2255 = vunpack.c.h.b16 %v2189
        %v2256 = vunpack.c.l.b16 %v2190
        %v2257 = vunpack.c.h.b16 %v2190
        %v2258 = vunpack.c.l.b16 %v2191
        %v2259 = vunpack.c.h.b16 %v2191
        %v2260 = vunpack.c.l.b16 %v2192
        %v2261 = vunpack.c.h.b16 %v2192
        %v2262 = vunpack.c.l.b16 %v2193
        %v2263 = vunpack.c.h.b16 %v2193
        %v2264 = vunpack.c.l.b16 %v2194
        %v2265 = vunpack.c.h.b16 %v2194
        %v2266 = vunpack.c.l.b16 %v2195
        %v2267 = vunpack.c.h.b16 %v2195
        %v2268 = vunpack.c.l.b16 %v2196
        %v2269 = vunpack.c.h.b16 %v2196
        %v2270 = vunpack.c.l.b16 %v2197
        %v2271 = vunpack.c.h.b16 %v2197
        %v2272 = vunpack.c.l.b16 %v2198
        %v2273 = vunpack.c.h.b16 %v2198
        %v2274 = vunpack.c.l.b16 %v2199
        %v2275 = vunpack.c.h.b16 %v2199
        %v2276 = vunpack.c.l.b16 %v2200
        %v2277 = vunpack.c.h.b16 %v2200
        %v2278 = vunpack.c.l.b16 %v2201
        %v2279 = vunpack.c.h.b16 %v2201
        %v2280 = vunpack.c.l.b16 %v2202
        %v2281 = vunpack.c.h.b16 %v2202
        %v2282 = vunpack.c.l.b16 %v2203
        %v2283 = vunpack.c.h.b16 %v2203
        %v2284 = vunpack.c.l.b16 %v2204
        %v2285 = vunpack.c.h.b16 %v2204
        %v2286 = vunpack.c.l.b16 %v2205
        %v2287 = vunpack.c.h.b16 %v2205
        %v2288 = vunpack.c.l.b16 %v2206
        %v2289 = vunpack.c.h.b16 %v2206
        %v2290 = vunpack.c.l.b16 %v2207
        %v2291 = vunpack.c.h.b16 %v2207
        %v2292 = vunpack.c.l.b16 %v2208
        %v2293 = vunpack.c.h.b16 %v2208
        %v2294 = vunpack.c.l.b16 %v2209
        %v2295 = vunpack.c.h.b16 %v2209
        %v2296 = vunpack.c.l.b16 %v2210
        %v2297 = vunpack.c.h.b16 %v2210
        %v2298 = vunpack.c.l.b16 %v2211
        %v2299 = vunpack.c.h.b16 %v2211
        %v2300 = vunpack.c.l.b16 %v2212
        %v2301 = vunpack.c.h.b16 %v2212
        %v2302 = vunpack.c.l.b16 %v2213
        %v2303 = vunpack.c.h.b16 %v2213
        %v2304 = vunpack.c.l.b16 %v2214
        %v2305 = vunpack.c.h.b16 %v2214
        %v2306 = vunpack.c.l.b16 %v2215
        %v2307 = vunpack.c.h.b16 %v2215
        %v2308 = vunpack.c.l.b16 %v2216
        %v2309 = vunpack.c.h.b16 %v2216
        %v2310 = vunpack.c.l.b16 %v2217
        %v2311 = vunpack.c.h.b16 %v2217
        %v2312 = vunpack.c.l.b16 %v2218
        %v2313 = vunpack.c.h.b16 %v2218
        %v2314 = vunpack.c.l.b16 %v2219
        %v2315 = vunpack.c.h.b16 %v2219
        %v2316 = vpack.c.b16 %v2256, %v2252
        %v2317 = vpack.c.b16 %v2257, %v2253
        %v2318 = vpack.c.b16 %v2258, %v2254
        %v2319 = vpack.c.b16 %v2259, %v2255
        %v2320 = vpack.c.b16 %v2264, %v2260
        %v2321 = vpack.c.b16 %v2265, %v2261
        %v2322 = vpack.c.b16 %v2266, %v2262
        %v2323 = vpack.c.b16 %v2267, %v2263
        %v2324 = vpack.c.b16 %v2272, %v2268
        %v2325 = vpack.c.b16 %v2273, %v2269
        %v2326 = vpack.c.b16 %v2274, %v2270
        %v2327 = vpack.c.b16 %v2275, %v2271
        %v2328 = vpack.c.b16 %v2280, %v2276
        %v2329 = vpack.c.b16 %v2281, %v2277
        %v2330 = vpack.c.b16 %v2282, %v2278
        %v2331 = vpack.c.b16 %v2283, %v2279
        %v2332 = vpack.c.b16 %v2288, %v2284
        %v2333 = vpack.c.b16 %v2289, %v2285
        %v2334 = vpack.c.b16 %v2290, %v2286
        %v2335 = vpack.c.b16 %v2291, %v2287
        %v2336 = vpack.c.b16 %v2296, %v2292
        %v2337 = vpack.c.b16 %v2297, %v2293
        %v2338 = vpack.c.b16 %v2298, %v2294
        %v2339 = vpack.c.b16 %v2299, %v2295
        %v2340 = vpack.c.b16 %v2304, %v2300
        %v2341 = vpack.c.b16 %v2305, %v2301
        %v2342 = vpack.c.b16 %v2306, %v2302
        %v2343 = vpack.c.b16 %v2307, %v2303
        %v2344 = vpack.c.b16 %v2312, %v2308
        %v2345 = vpack.c.b16 %v2313, %v2309
        %v2346 = vpack.c.b16 %v2314, %v2310
        %v2347 = vpack.c.b16 %v2315, %v2311
        %2380 = vmatprep.subr.bf16.mxu0 %v2317
        %2381 = vmatpush1.bf16.msra.mxu0 %v2316
        %2382 = vmatprep.subr.bf16.mxu0 %v2321
        %2383 = vmatpush1.bf16.msra.mxu0 %v2320
        %2384 = vmatprep.subr.bf16.mxu0 %v2325
        %2385 = vmatpush1.bf16.msra.mxu0 %v2324
        %2386 = vmatprep.subr.bf16.mxu0 %v2329
        %2387 = vmatpush1.bf16.msra.mxu0 %v2328
        %2388 = vmatprep.subr.bf16.mxu0 %v2333
        %2389 = vmatpush1.bf16.msra.mxu0 %v2332
        %2390 = vmatprep.subr.bf16.mxu0 %v2337
        %2391 = vmatpush1.bf16.msra.mxu0 %v2336
        %2392 = vmatprep.subr.bf16.mxu0 %v2341
        %2393 = vmatpush1.bf16.msra.mxu0 %v2340
        %2394 = vmatprep.subr.bf16.mxu0 %v2345
        %2395 = vmatpush1.bf16.msra.mxu0 %v2344
        %2396 = vmatprep.subr.bf16.mxu0 0
        %2397 = vmatpush1.bf16.msra.mxu0 0
        %2398 = vmatprep.subr.bf16.mxu0 0
        %2399 = vmatpush1.bf16.msra.mxu0 0
        %2400 = vmatprep.subr.bf16.mxu0 0
        %2401 = vmatpush1.bf16.msra.mxu0 0
        %2402 = vmatprep.subr.bf16.mxu0 0
        %2403 = vmatpush1.bf16.msra.mxu0 0
        %2404 = vmatprep.subr.bf16.mxu0 0
        %2405 = vmatpush1.bf16.msra.mxu0 0
        %2406 = vmatprep.subr.bf16.mxu0 0
        %2407 = vmatpush1.bf16.msra.mxu0 0
        %2408 = vmatprep.subr.bf16.mxu0 0
        %2409 = vmatpush1.bf16.msra.mxu0 0
        %2410 = vmatprep.subr.bf16.mxu0 0
        %2411 = vmatpush1.bf16.msra.mxu0 0
        %2412 = vmatprep.mubr.bf16.mxu0 0
        %2413 = vmatmul.mubr.bf16.gmra.mrb[0].mxu0 %v2182
        %v2414 = vpop.f32.mrb[0].mxu0
        %v2415 = vadd.f32 0.0, %v2414
        %v2416 = vpop.f32.mrb[0].mxu0
        %v2417 = vadd.f32 0.0, %v2416
        %v2418 = vpop.f32.mrb[0].mxu0
        %v2419 = vpop.f32.mrb[0].mxu0
        %2420 = vdwg.mxu0
        %2421 = vmatprep.subr.bf16.mxu0 %v2319
        %2422 = vmatpush1.bf16.msra.mxu0 %v2318
        %2423 = vmatprep.subr.bf16.mxu0 %v2323
        %2424 = vmatpush1.bf16.msra.mxu0 %v2322
        %2425 = vmatprep.subr.bf16.mxu0 %v2327
        %2426 = vmatpush1.bf16.msra.mxu0 %v2326
        %2427 = vmatprep.subr.bf16.mxu0 %v2331
        %2428 = vmatpush1.bf16.msra.mxu0 %v2330
        %2429 = vmatprep.subr.bf16.mxu0 %v2335
        %2430 = vmatpush1.bf16.msra.mxu0 %v2334
        %2431 = vmatprep.subr.bf16.mxu0 %v2339
        %2432 = vmatpush1.bf16.msra.mxu0 %v2338
        %2433 = vmatprep.subr.bf16.mxu0 %v2343
        %2434 = vmatpush1.bf16.msra.mxu0 %v2342
        %2435 = vmatprep.subr.bf16.mxu0 %v2347
        %2436 = vmatpush1.bf16.msra.mxu0 %v2346
        %2437 = vmatprep.subr.bf16.mxu0 0
        %2438 = vmatpush1.bf16.msra.mxu0 0
        %2439 = vmatprep.subr.bf16.mxu0 0
        %2440 = vmatpush1.bf16.msra.mxu0 0
        %2441 = vmatprep.subr.bf16.mxu0 0
        %2442 = vmatpush1.bf16.msra.mxu0 0
        %2443 = vmatprep.subr.bf16.mxu0 0
        %2444 = vmatpush1.bf16.msra.mxu0 0
        %2445 = vmatprep.subr.bf16.mxu0 0
        %2446 = vmatpush1.bf16.msra.mxu0 0
        %2447 = vmatprep.subr.bf16.mxu0 0
        %2448 = vmatpush1.bf16.msra.mxu0 0
        %2449 = vmatprep.subr.bf16.mxu0 0
        %2450 = vmatpush1.bf16.msra.mxu0 0
        %2451 = vmatprep.subr.bf16.mxu0 0
        %2452 = vmatpush1.bf16.msra.mxu0 0
        %2453 = vmatprep.mubr.bf16.mxu0 0
        %2454 = vmatmul.mubr.bf16.gmra.mrb[0].mxu0 %v2182
        %v2455 = vpop.f32.mrb[0].mxu0
        %v2456 = vadd.f32 0.0, %v2455
        %v2457 = vpop.f32.mrb[0].mxu0
        %v2458 = vadd.f32 0.0, %v2457
        %v2459 = vpop.f32.mrb[0].mxu0
        %v2460 = vpop.f32.mrb[0].mxu0
        %2461 = vdwg.mxu0
        %v2462 = vadd.f32 %v2184, %v2415
        %v2463 = vadd.f32 %v2185, %v2417
        %v2464 = vadd.f32 %v2186, %v2456
        %v2465 = vadd.f32 %v2187, %v2458
        %v2466 = vxor.u32 %v2462, 2147483648
        %v2467 = vmul.f32 %v2466, 1.442695
        %v2468 = vpow.pop %v2467
        %v2469 = vadd.f32 %v2468, 1.0
        %v2470 = vrcp.pop %v2469
        %v2471 = vmul.f32 1.0, %v2470
        %v2472 = vxor.u32 %v2463, 2147483648
        %v2473 = vmul.f32 %v2472, 1.442695
        %v2474 = vpow.pop %v2473
        %v2475 = vadd.f32 %v2474, 1.0
        %v2476 = vrcp.pop %v2475
        %v2477 = vmul.f32 1.0, %v2476
        %v2478 = vxor.u32 %v2464, 2147483648
        %v2479 = vmul.f32 %v2478, 1.442695
        %v2480 = vpow.pop %v2479
        %v2481 = vadd.f32 %v2480, 1.0
        %v2482 = vrcp.pop %v2481
        %v2483 = vmul.f32 1.0, %v2482
        %v2484 = vtanh.pop %v2465
        %v2485 = vmul.f32 %v2477, %v2179
        %v2486 = vmul.f32 %v2471, %v2484
        %v2487 = vadd.f32 %v2485, %v2486
        %v2488 = vtanh.pop %v2487
        %v2489 = vmul.f32 %v2483, %v2488
        %v2490 = vpack.c.bf16 %v2489, %v2489
        %2491 = vst [vmem:[%s331 + $0x14] sm:$0xf] %v2490
        %v2492 = vld [vmem:[#allocation2 + $0xc0] sm:$0xff]
        %v2493 = vld [vmem:[#allocation2 + $0xc8] sm:$0xff]
        %v2494 = vld [vmem:[#allocation2 + $0xd0] sm:$0xff]
        %v2495 = vld [vmem:[#allocation2 + $0xd8] sm:$0xff]
        %v2496 = vld [vmem:[#allocation3] sm:$0xff]
        %v2497 = vld [vmem:[#allocation3 + $0x8] sm:$0xff]
        %v2498 = vld [vmem:[#allocation3 + $0x10] sm:$0xff]
        %v2499 = vld [vmem:[#allocation3 + $0x18] sm:$0xff]
        %v2500 = vld [vmem:[#allocation3 + $0x20] sm:$0xff]
        %v2501 = vld [vmem:[#allocation3 + $0x28] sm:$0xff]
        %v2502 = vld [vmem:[#allocation3 + $0x30] sm:$0xff]
        %v2503 = vld [vmem:[#allocation3 + $0x38] sm:$0xff]
        %v2504 = vld [vmem:[#allocation3 + $0x40] sm:$0xff]
        %v2505 = vld [vmem:[#allocation3 + $0x48] sm:$0xff]
        %v2506 = vld [vmem:[#allocation3 + $0x50] sm:$0xff]
        %v2507 = vld [vmem:[#allocation3 + $0x58] sm:$0xff]
        %v2508 = vld [vmem:[#allocation3 + $0x60] sm:$0xff]
        %v2509 = vld [vmem:[#allocation3 + $0x68] sm:$0xff]
        %v2510 = vld [vmem:[#allocation3 + $0x70] sm:$0xff]
        %v2511 = vld [vmem:[#allocation3 + $0x78] sm:$0xff]
        %v2512 = vld [vmem:[#allocation3 + $0x80] sm:$0xff]
        %v2513 = vld [vmem:[#allocation3 + $0x88] sm:$0xff]
        %v2514 = vld [vmem:[#allocation3 + $0x90] sm:$0xff]
        %v2515 = vld [vmem:[#allocation3 + $0x98] sm:$0xff]
        %v2516 = vld [vmem:[#allocation3 + $0xa0] sm:$0xff]
        %v2517 = vld [vmem:[#allocation3 + $0xa8] sm:$0xff]
        %v2518 = vld [vmem:[#allocation3 + $0xb0] sm:$0xff]
        %v2519 = vld [vmem:[#allocation3 + $0xb8] sm:$0xff]
        %v2520 = vld [vmem:[#allocation3 + $0xc0] sm:$0xff]
        %v2521 = vld [vmem:[#allocation3 + $0xc8] sm:$0xff]
        %v2522 = vld [vmem:[#allocation3 + $0xd0] sm:$0xff]
        %v2523 = vld [vmem:[#allocation3 + $0xd8] sm:$0xff]
        %v2524 = vld [vmem:[#allocation3 + $0xe0] sm:$0xff]
        %v2525 = vld [vmem:[#allocation3 + $0xe8] sm:$0xff]
        %v2526 = vld [vmem:[#allocation3 + $0xf0] sm:$0xff]
        %v2527 = vld [vmem:[#allocation3 + $0xf8] sm:$0xff]
        %v2560 = vunpack.c.l.b16 %v2496
        %v2561 = vunpack.c.h.b16 %v2496
        %v2562 = vunpack.c.l.b16 %v2497
        %v2563 = vunpack.c.h.b16 %v2497
        %v2564 = vunpack.c.l.b16 %v2498
        %v2565 = vunpack.c.h.b16 %v2498
        %v2566 = vunpack.c.l.b16 %v2499
        %v2567 = vunpack.c.h.b16 %v2499
        %v2568 = vunpack.c.l.b16 %v2500
        %v2569 = vunpack.c.h.b16 %v2500
        %v2570 = vunpack.c.l.b16 %v2501
        %v2571 = vunpack.c.h.b16 %v2501
        %v2572 = vunpack.c.l.b16 %v2502
        %v2573 = vunpack.c.h.b16 %v2502
        %v2574 = vunpack.c.l.b16 %v2503
        %v2575 = vunpack.c.h.b16 %v2503
        %v2576 = vunpack.c.l.b16 %v2504
        %v2577 = vunpack.c.h.b16 %v2504
        %v2578 = vunpack.c.l.b16 %v2505
        %v2579 = vunpack.c.h.b16 %v2505
        %v2580 = vunpack.c.l.b16 %v2506
        %v2581 = vunpack.c.h.b16 %v2506
        %v2582 = vunpack.c.l.b16 %v2507
        %v2583 = vunpack.c.h.b16 %v2507
        %v2584 = vunpack.c.l.b16 %v2508
        %v2585 = vunpack.c.h.b16 %v2508
        %v2586 = vunpack.c.l.b16 %v2509
        %v2587 = vunpack.c.h.b16 %v2509
        %v2588 = vunpack.c.l.b16 %v2510
        %v2589 = vunpack.c.h.b16 %v2510
        %v2590 = vunpack.c.l.b16 %v2511
        %v2591 = vunpack.c.h.b16 %v2511
        %v2592 = vunpack.c.l.b16 %v2512
        %v2593 = vunpack.c.h.b16 %v2512
        %v2594 = vunpack.c.l.b16 %v2513
        %v2595 = vunpack.c.h.b16 %v2513
        %v2596 = vunpack.c.l.b16 %v2514
        %v2597 = vunpack.c.h.b16 %v2514
        %v2598 = vunpack.c.l.b16 %v2515
        %v2599 = vunpack.c.h.b16 %v2515
        %v2600 = vunpack.c.l.b16 %v2516
        %v2601 = vunpack.c.h.b16 %v2516
        %v2602 = vunpack.c.l.b16 %v2517
        %v2603 = vunpack.c.h.b16 %v2517
        %v2604 = vunpack.c.l.b16 %v2518
        %v2605 = vunpack.c.h.b16 %v2518
        %v2606 = vunpack.c.l.b16 %v2519
        %v2607 = vunpack.c.h.b16 %v2519
        %v2608 = vunpack.c.l.b16 %v2520
        %v2609 = vunpack.c.h.b16 %v2520
        %v2610 = vunpack.c.l.b16 %v2521
        %v2611 = vunpack.c.h.b16 %v2521
        %v2612 = vunpack.c.l.b16 %v2522
        %v2613 = vunpack.c.h.b16 %v2522
        %v2614 = vunpack.c.l.b16 %v2523
        %v2615 = vunpack.c.h.b16 %v2523
        %v2616 = vunpack.c.l.b16 %v2524
        %v2617 = vunpack.c.h.b16 %v2524
        %v2618 = vunpack.c.l.b16 %v2525
        %v2619 = vunpack.c.h.b16 %v2525
        %v2620 = vunpack.c.l.b16 %v2526
        %v2621 = vunpack.c.h.b16 %v2526
        %v2622 = vunpack.c.l.b16 %v2527
        %v2623 = vunpack.c.h.b16 %v2527
        %v2624 = vpack.c.b16 %v2564, %v2560
        %v2625 = vpack.c.b16 %v2565, %v2561
        %v2626 = vpack.c.b16 %v2566, %v2562
        %v2627 = vpack.c.b16 %v2567, %v2563
        %v2628 = vpack.c.b16 %v2572, %v2568
        %v2629 = vpack.c.b16 %v2573, %v2569
        %v2630 = vpack.c.b16 %v2574, %v2570
        %v2631 = vpack.c.b16 %v2575, %v2571
        %v2632 = vpack.c.b16 %v2580, %v2576
        %v2633 = vpack.c.b16 %v2581, %v2577
        %v2634 = vpack.c.b16 %v2582, %v2578
        %v2635 = vpack.c.b16 %v2583, %v2579
        %v2636 = vpack.c.b16 %v2588, %v2584
        %v2637 = vpack.c.b16 %v2589, %v2585
        %v2638 = vpack.c.b16 %v2590, %v2586
        %v2639 = vpack.c.b16 %v2591, %v2587
        %v2640 = vpack.c.b16 %v2596, %v2592
        %v2641 = vpack.c.b16 %v2597, %v2593
        %v2642 = vpack.c.b16 %v2598, %v2594
        %v2643 = vpack.c.b16 %v2599, %v2595
        %v2644 = vpack.c.b16 %v2604, %v2600
        %v2645 = vpack.c.b16 %v2605, %v2601
        %v2646 = vpack.c.b16 %v2606, %v2602
        %v2647 = vpack.c.b16 %v2607, %v2603
        %v2648 = vpack.c.b16 %v2612, %v2608
        %v2649 = vpack.c.b16 %v2613, %v2609
        %v2650 = vpack.c.b16 %v2614, %v2610
        %v2651 = vpack.c.b16 %v2615, %v2611
        %v2652 = vpack.c.b16 %v2620, %v2616
        %v2653 = vpack.c.b16 %v2621, %v2617
        %v2654 = vpack.c.b16 %v2622, %v2618
        %v2655 = vpack.c.b16 %v2623, %v2619
        %2688 = vmatprep.subr.bf16.mxu0 %v2625
        %2689 = vmatpush1.bf16.msra.mxu0 %v2624
        %2690 = vmatprep.subr.bf16.mxu0 %v2629
        %2691 = vmatpush1.bf16.msra.mxu0 %v2628
        %2692 = vmatprep.subr.bf16.mxu0 %v2633
        %2693 = vmatpush1.bf16.msra.mxu0 %v2632
        %2694 = vmatprep.subr.bf16.mxu0 %v2637
        %2695 = vmatpush1.bf16.msra.mxu0 %v2636
        %2696 = vmatprep.subr.bf16.mxu0 %v2641
        %2697 = vmatpush1.bf16.msra.mxu0 %v2640
        %2698 = vmatprep.subr.bf16.mxu0 %v2645
        %2699 = vmatpush1.bf16.msra.mxu0 %v2644
        %2700 = vmatprep.subr.bf16.mxu0 %v2649
        %2701 = vmatpush1.bf16.msra.mxu0 %v2648
        %2702 = vmatprep.subr.bf16.mxu0 %v2653
        %2703 = vmatpush1.bf16.msra.mxu0 %v2652
        %2704 = vmatprep.subr.bf16.mxu0 0
        %2705 = vmatpush1.bf16.msra.mxu0 0
        %2706 = vmatprep.subr.bf16.mxu0 0
        %2707 = vmatpush1.bf16.msra.mxu0 0
        %2708 = vmatprep.subr.bf16.mxu0 0
        %2709 = vmatpush1.bf16.msra.mxu0 0
        %2710 = vmatprep.subr.bf16.mxu0 0
        %2711 = vmatpush1.bf16.msra.mxu0 0
        %2712 = vmatprep.subr.bf16.mxu0 0
        %2713 = vmatpush1.bf16.msra.mxu0 0
        %2714 = vmatprep.subr.bf16.mxu0 0
        %2715 = vmatpush1.bf16.msra.mxu0 0
        %2716 = vmatprep.subr.bf16.mxu0 0
        %2717 = vmatpush1.bf16.msra.mxu0 0
        %2718 = vmatprep.subr.bf16.mxu0 0
        %2719 = vmatpush1.bf16.msra.mxu0 0
        %2720 = vmatprep.mubr.bf16.mxu0 0
        %2721 = vmatmul.mubr.bf16.gmra.mrb[0].mxu0 %v2490
        %v2722 = vpop.f32.mrb[0].mxu0
        %v2723 = vadd.f32 0.0, %v2722
        %v2724 = vpop.f32.mrb[0].mxu0
        %v2725 = vadd.f32 0.0, %v2724
        %v2726 = vpop.f32.mrb[0].mxu0
        %v2727 = vpop.f32.mrb[0].mxu0
        %2728 = vdwg.mxu0
        %2729 = vmatprep.subr.bf16.mxu0 %v2627
        %2730 = vmatpush1.bf16.msra.mxu0 %v2626
        %2731 = vmatprep.subr.bf16.mxu0 %v2631
        %2732 = vmatpush1.bf16.msra.mxu0 %v2630
        %2733 = vmatprep.subr.bf16.mxu0 %v2635
        %2734 = vmatpush1.bf16.msra.mxu0 %v2634
        %2735 = vmatprep.subr.bf16.mxu0 %v2639
        %2736 = vmatpush1.bf16.msra.mxu0 %v2638
        %2737 = vmatprep.subr.bf16.mxu0 %v2643
        %2738 = vmatpush1.bf16.msra.mxu0 %v2642
        %2739 = vmatprep.subr.bf16.mxu0 %v2647
        %2740 = vmatpush1.bf16.msra.mxu0 %v2646
        %2741 = vmatprep.subr.bf16.mxu0 %v2651
        %2742 = vmatpush1.bf16.msra.mxu0 %v2650
        %2743 = vmatprep.subr.bf16.mxu0 %v2655
        %2744 = vmatpush1.bf16.msra.mxu0 %v2654
        %2745 = vmatprep.subr.bf16.mxu0 0
        %2746 = vmatpush1.bf16.msra.mxu0 0
        %2747 = vmatprep.subr.bf16.mxu0 0
        %2748 = vmatpush1.bf16.msra.mxu0 0
        %2749 = vmatprep.subr.bf16.mxu0 0
        %2750 = vmatpush1.bf16.msra.mxu0 0
        %2751 = vmatprep.subr.bf16.mxu0 0
        %2752 = vmatpush1.bf16.msra.mxu0 0
        %2753 = vmatprep.subr.bf16.mxu0 0
        %2754 = vmatpush1.bf16.msra.mxu0 0
        %2755 = vmatprep.subr.bf16.mxu0 0
        %2756 = vmatpush1.bf16.msra.mxu0 0
        %2757 = vmatprep.subr.bf16.mxu0 0
        %2758 = vmatpush1.bf16.msra.mxu0 0
        %2759 = vmatprep.subr.bf16.mxu0 0
        %2760 = vmatpush1.bf16.msra.mxu0 0
        %2761 = vmatprep.mubr.bf16.mxu0 0
        %2762 = vmatmul.mubr.bf16.gmra.mrb[0].mxu0 %v2490
        %v2763 = vpop.f32.mrb[0].mxu0
        %v2764 = vadd.f32 0.0, %v2763
        %v2765 = vpop.f32.mrb[0].mxu0
        %v2766 = vadd.f32 0.0, %v2765
        %v2767 = vpop.f32.mrb[0].mxu0
        %v2768 = vpop.f32.mrb[0].mxu0
        %2769 = vdwg.mxu0
        %v2770 = vadd.f32 %v2492, %v2723
        %v2771 = vadd.f32 %v2493, %v2725
        %v2772 = vadd.f32 %v2494, %v2764
        %v2773 = vadd.f32 %v2495, %v2766
        %v2774 = vxor.u32 %v2770, 2147483648
        %v2775 = vmul.f32 %v2774, 1.442695
        %v2776 = vpow.pop %v2775
        %v2777 = vadd.f32 %v2776, 1.0
        %v2778 = vrcp.pop %v2777
        %v2779 = vmul.f32 1.0, %v2778
        %v2780 = vxor.u32 %v2771, 2147483648
        %v2781 = vmul.f32 %v2780, 1.442695
        %v2782 = vpow.pop %v2781
        %v2783 = vadd.f32 %v2782, 1.0
        %v2784 = vrcp.pop %v2783
        %v2785 = vmul.f32 1.0, %v2784
        %v2786 = vxor.u32 %v2772, 2147483648
        %v2787 = vmul.f32 %v2786, 1.442695
        %v2788 = vpow.pop %v2787
        %v2789 = vadd.f32 %v2788, 1.0
        %v2790 = vrcp.pop %v2789
        %v2791 = vmul.f32 1.0, %v2790
        %v2792 = vtanh.pop %v2773
        %v2793 = vmul.f32 %v2785, %v2487
        %v2794 = vmul.f32 %v2779, %v2792
        %v2795 = vadd.f32 %v2793, %v2794
        %v2796 = vtanh.pop %v2795
        %v2797 = vmul.f32 %v2791, %v2796
        %v2798 = vpack.c.bf16 %v2797, %v2797
        %2799 = vst [vmem:[%s331 + $0x18] sm:$0xf] %v2798
        %v2800 = vld [vmem:[#allocation2 + $0xe0] sm:$0xff]
        %v2801 = vld [vmem:[#allocation2 + $0xe8] sm:$0xff]
        %v2802 = vld [vmem:[#allocation2 + $0xf0] sm:$0xff]
        %v2803 = vld [vmem:[#allocation2 + $0xf8] sm:$0xff]
        %v2804 = vld [vmem:[#allocation3] sm:$0xff]
        %v2805 = vld [vmem:[#allocation3 + $0x8] sm:$0xff]
        %v2806 = vld [vmem:[#allocation3 + $0x10] sm:$0xff]
        %v2807 = vld [vmem:[#allocation3 + $0x18] sm:$0xff]
        %v2808 = vld [vmem:[#allocation3 + $0x20] sm:$0xff]
        %v2809 = vld [vmem:[#allocation3 + $0x28] sm:$0xff]
        %v2810 = vld [vmem:[#allocation3 + $0x30] sm:$0xff]
        %v2811 = vld [vmem:[#allocation3 + $0x38] sm:$0xff]
        %v2812 = vld [vmem:[#allocation3 + $0x40] sm:$0xff]
        %v2813 = vld [vmem:[#allocation3 + $0x48] sm:$0xff]
        %v2814 = vld [vmem:[#allocation3 + $0x50] sm:$0xff]
        %v2815 = vld [vmem:[#allocation3 + $0x58] sm:$0xff]
        %v2816 = vld [vmem:[#allocation3 + $0x60] sm:$0xff]
        %v2817 = vld [vmem:[#allocation3 + $0x68] sm:$0xff]
        %v2818 = vld [vmem:[#allocation3 + $0x70] sm:$0xff]
        %v2819 = vld [vmem:[#allocation3 + $0x78] sm:$0xff]
        %v2820 = vld [vmem:[#allocation3 + $0x80] sm:$0xff]
        %v2821 = vld [vmem:[#allocation3 + $0x88] sm:$0xff]
        %v2822 = vld [vmem:[#allocation3 + $0x90] sm:$0xff]
        %v2823 = vld [vmem:[#allocation3 + $0x98] sm:$0xff]
        %v2824 = vld [vmem:[#allocation3 + $0xa0] sm:$0xff]
        %v2825 = vld [vmem:[#allocation3 + $0xa8] sm:$0xff]
        %v2826 = vld [vmem:[#allocation3 + $0xb0] sm:$0xff]
        %v2827 = vld [vmem:[#allocation3 + $0xb8] sm:$0xff]
        %v2828 = vld [vmem:[#allocation3 + $0xc0] sm:$0xff]
        %v2829 = vld [vmem:[#allocation3 + $0xc8] sm:$0xff]
        %v2830 = vld [vmem:[#allocation3 + $0xd0] sm:$0xff]
        %v2831 = vld [vmem:[#allocation3 + $0xd8] sm:$0xff]
        %v2832 = vld [vmem:[#allocation3 + $0xe0] sm:$0xff]
        %v2833 = vld [vmem:[#allocation3 + $0xe8] sm:$0xff]
        %v2834 = vld [vmem:[#allocation3 + $0xf0] sm:$0xff]
        %v2835 = vld [vmem:[#allocation3 + $0xf8] sm:$0xff]
        %v2868 = vunpack.c.l.b16 %v2804
        %v2869 = vunpack.c.h.b16 %v2804
        %v2870 = vunpack.c.l.b16 %v2805
        %v2871 = vunpack.c.h.b16 %v2805
        %v2872 = vunpack.c.l.b16 %v2806
        %v2873 = vunpack.c.h.b16 %v2806
        %v2874 = vunpack.c.l.b16 %v2807
        %v2875 = vunpack.c.h.b16 %v2807
        %v2876 = vunpack.c.l.b16 %v2808
        %v2877 = vunpack.c.h.b16 %v2808
        %v2878 = vunpack.c.l.b16 %v2809
        %v2879 = vunpack.c.h.b16 %v2809
        %v2880 = vunpack.c.l.b16 %v2810
        %v2881 = vunpack.c.h.b16 %v2810
        %v2882 = vunpack.c.l.b16 %v2811
        %v2883 = vunpack.c.h.b16 %v2811
        %v2884 = vunpack.c.l.b16 %v2812
        %v2885 = vunpack.c.h.b16 %v2812
        %v2886 = vunpack.c.l.b16 %v2813
        %v2887 = vunpack.c.h.b16 %v2813
        %v2888 = vunpack.c.l.b16 %v2814
        %v2889 = vunpack.c.h.b16 %v2814
        %v2890 = vunpack.c.l.b16 %v2815
        %v2891 = vunpack.c.h.b16 %v2815
        %v2892 = vunpack.c.l.b16 %v2816
        %v2893 = vunpack.c.h.b16 %v2816
        %v2894 = vunpack.c.l.b16 %v2817
        %v2895 = vunpack.c.h.b16 %v2817
        %v2896 = vunpack.c.l.b16 %v2818
        %v2897 = vunpack.c.h.b16 %v2818
        %v2898 = vunpack.c.l.b16 %v2819
        %v2899 = vunpack.c.h.b16 %v2819
        %v2900 = vunpack.c.l.b16 %v2820
        %v2901 = vunpack.c.h.b16 %v2820
        %v2902 = vunpack.c.l.b16 %v2821
        %v2903 = vunpack.c.h.b16 %v2821
        %v2904 = vunpack.c.l.b16 %v2822
        %v2905 = vunpack.c.h.b16 %v2822
        %v2906 = vunpack.c.l.b16 %v2823
        %v2907 = vunpack.c.h.b16 %v2823
        %v2908 = vunpack.c.l.b16 %v2824
        %v2909 = vunpack.c.h.b16 %v2824
        %v2910 = vunpack.c.l.b16 %v2825
        %v2911 = vunpack.c.h.b16 %v2825
        %v2912 = vunpack.c.l.b16 %v2826
        %v2913 = vunpack.c.h.b16 %v2826
        %v2914 = vunpack.c.l.b16 %v2827
        %v2915 = vunpack.c.h.b16 %v2827
        %v2916 = vunpack.c.l.b16 %v2828
        %v2917 = vunpack.c.h.b16 %v2828
        %v2918 = vunpack.c.l.b16 %v2829
        %v2919 = vunpack.c.h.b16 %v2829
        %v2920 = vunpack.c.l.b16 %v2830
        %v2921 = vunpack.c.h.b16 %v2830
        %v2922 = vunpack.c.l.b16 %v2831
        %v2923 = vunpack.c.h.b16 %v2831
        %v2924 = vunpack.c.l.b16 %v2832
        %v2925 = vunpack.c.h.b16 %v2832
        %v2926 = vunpack.c.l.b16 %v2833
        %v2927 = vunpack.c.h.b16 %v2833
        %v2928 = vunpack.c.l.b16 %v2834
        %v2929 = vunpack.c.h.b16 %v2834
        %v2930 = vunpack.c.l.b16 %v2835
        %v2931 = vunpack.c.h.b16 %v2835
        %v2932 = vpack.c.b16 %v2872, %v2868
        %v2933 = vpack.c.b16 %v2873, %v2869
        %v2934 = vpack.c.b16 %v2874, %v2870
        %v2935 = vpack.c.b16 %v2875, %v2871
        %v2936 = vpack.c.b16 %v2880, %v2876
        %v2937 = vpack.c.b16 %v2881, %v2877
        %v2938 = vpack.c.b16 %v2882, %v2878
        %v2939 = vpack.c.b16 %v2883, %v2879
        %v2940 = vpack.c.b16 %v2888, %v2884
        %v2941 = vpack.c.b16 %v2889, %v2885
        %v2942 = vpack.c.b16 %v2890, %v2886
        %v2943 = vpack.c.b16 %v2891, %v2887
        %v2944 = vpack.c.b16 %v2896, %v2892
        %v2945 = vpack.c.b16 %v2897, %v2893
        %v2946 = vpack.c.b16 %v2898, %v2894
        %v2947 = vpack.c.b16 %v2899, %v2895
        %v2948 = vpack.c.b16 %v2904, %v2900
        %v2949 = vpack.c.b16 %v2905, %v2901
        %v2950 = vpack.c.b16 %v2906, %v2902
        %v2951 = vpack.c.b16 %v2907, %v2903
        %v2952 = vpack.c.b16 %v2912, %v2908
        %v2953 = vpack.c.b16 %v2913, %v2909
        %v2954 = vpack.c.b16 %v2914, %v2910
        %v2955 = vpack.c.b16 %v2915, %v2911
        %v2956 = vpack.c.b16 %v2920, %v2916
        %v2957 = vpack.c.b16 %v2921, %v2917
        %v2958 = vpack.c.b16 %v2922, %v2918
        %v2959 = vpack.c.b16 %v2923, %v2919
        %v2960 = vpack.c.b16 %v2928, %v2924
        %v2961 = vpack.c.b16 %v2929, %v2925
        %v2962 = vpack.c.b16 %v2930, %v2926
        %v2963 = vpack.c.b16 %v2931, %v2927
        %2996 = vmatprep.subr.bf16.mxu0 %v2933
        %2997 = vmatpush1.bf16.msra.mxu0 %v2932
        %2998 = vmatprep.subr.bf16.mxu0 %v2937
        %2999 = vmatpush1.bf16.msra.mxu0 %v2936
        %3000 = vmatprep.subr.bf16.mxu0 %v2941
        %3001 = vmatpush1.bf16.msra.mxu0 %v2940
        %3002 = vmatprep.subr.bf16.mxu0 %v2945
        %3003 = vmatpush1.bf16.msra.mxu0 %v2944
        %3004 = vmatprep.subr.bf16.mxu0 %v2949
        %3005 = vmatpush1.bf16.msra.mxu0 %v2948
        %3006 = vmatprep.subr.bf16.mxu0 %v2953
        %3007 = vmatpush1.bf16.msra.mxu0 %v2952
        %3008 = vmatprep.subr.bf16.mxu0 %v2957
        %3009 = vmatpush1.bf16.msra.mxu0 %v2956
        %3010 = vmatprep.subr.bf16.mxu0 %v2961
        %3011 = vmatpush1.bf16.msra.mxu0 %v2960
        %3012 = vmatprep.subr.bf16.mxu0 0
        %3013 = vmatpush1.bf16.msra.mxu0 0
        %3014 = vmatprep.subr.bf16.mxu0 0
        %3015 = vmatpush1.bf16.msra.mxu0 0
        %3016 = vmatprep.subr.bf16.mxu0 0
        %3017 = vmatpush1.bf16.msra.mxu0 0
        %3018 = vmatprep.subr.bf16.mxu0 0
        %3019 = vmatpush1.bf16.msra.mxu0 0
        %3020 = vmatprep.subr.bf16.mxu0 0
        %3021 = vmatpush1.bf16.msra.mxu0 0
        %3022 = vmatprep.subr.bf16.mxu0 0
        %3023 = vmatpush1.bf16.msra.mxu0 0
        %3024 = vmatprep.subr.bf16.mxu0 0
        %3025 = vmatpush1.bf16.msra.mxu0 0
        %3026 = vmatprep.subr.bf16.mxu0 0
        %3027 = vmatpush1.bf16.msra.mxu0 0
        %3028 = vmatprep.mubr.bf16.mxu0 0
        %3029 = vmatmul.mubr.bf16.gmra.mrb[0].mxu0 %v2798
        %v3030 = vpop.f32.mrb[0].mxu0
        %v3031 = vadd.f32 0.0, %v3030
        %v3032 = vpop.f32.mrb[0].mxu0
        %v3033 = vadd.f32 0.0, %v3032
        %v3034 = vpop.f32.mrb[0].mxu0
        %v3035 = vpop.f32.mrb[0].mxu0
        %3036 = vdwg.mxu0
        %3037 = vmatprep.subr.bf16.mxu0 %v2935
        %3038 = vmatpush1.bf16.msra.mxu0 %v2934
        %3039 = vmatprep.subr.bf16.mxu0 %v2939
        %3040 = vmatpush1.bf16.msra.mxu0 %v2938
        %3041 = vmatprep.subr.bf16.mxu0 %v2943
        %3042 = vmatpush1.bf16.msra.mxu0 %v2942
        %3043 = vmatprep.subr.bf16.mxu0 %v2947
        %3044 = vmatpush1.bf16.msra.mxu0 %v2946
        %3045 = vmatprep.subr.bf16.mxu0 %v2951
        %3046 = vmatpush1.bf16.msra.mxu0 %v2950
        %3047 = vmatprep.subr.bf16.mxu0 %v2955
        %3048 = vmatpush1.bf16.msra.mxu0 %v2954
        %3049 = vmatprep.subr.bf16.mxu0 %v2959
        %3050 = vmatpush1.bf16.msra.mxu0 %v2958
        %3051 = vmatprep.subr.bf16.mxu0 %v2963
        %3052 = vmatpush1.bf16.msra.mxu0 %v2962
        %3053 = vmatprep.subr.bf16.mxu0 0
        %3054 = vmatpush1.bf16.msra.mxu0 0
        %3055 = vmatprep.subr.bf16.mxu0 0
        %3056 = vmatpush1.bf16.msra.mxu0 0
        %3057 = vmatprep.subr.bf16.mxu0 0
        %3058 = vmatpush1.bf16.msra.mxu0 0
        %3059 = vmatprep.subr.bf16.mxu0 0
        %3060 = vmatpush1.bf16.msra.mxu0 0
        %3061 = vmatprep.subr.bf16.mxu0 0
        %3062 = vmatpush1.bf16.msra.mxu0 0
        %3063 = vmatprep.subr.bf16.mxu0 0
        %3064 = vmatpush1.bf16.msra.mxu0 0
        %3065 = vmatprep.subr.bf16.mxu0 0
        %3066 = vmatpush1.bf16.msra.mxu0 0
        %3067 = vmatprep.subr.bf16.mxu0 0
        %3068 = vmatpush1.bf16.msra.mxu0 0
        %3069 = vmatprep.mubr.bf16.mxu0 0
        %3070 = vmatmul.mubr.bf16.gmra.mrb[0].mxu0 %v2798
        %v3071 = vpop.f32.mrb[0].mxu0
        %v3072 = vadd.f32 0.0, %v3071
        %v3073 = vpop.f32.mrb[0].mxu0
        %v3074 = vadd.f32 0.0, %v3073
        %v3075 = vpop.f32.mrb[0].mxu0
        %v3076 = vpop.f32.mrb[0].mxu0
        %3077 = vdwg.mxu0
        %v3078 = vadd.f32 %v2800, %v3031
        %v3079 = vadd.f32 %v2801, %v3033
        %v3080 = vadd.f32 %v2802, %v3072
        %v3081 = vadd.f32 %v2803, %v3074
        %v3082 = vxor.u32 %v3078, 2147483648
        %v3083 = vmul.f32 %v3082, 1.442695
        %v3084 = vpow.pop %v3083
        %v3085 = vadd.f32 %v3084, 1.0
        %v3086 = vrcp.pop %v3085
        %v3087 = vmul.f32 1.0, %v3086
        %v3088 = vxor.u32 %v3079, 2147483648
        %v3089 = vmul.f32 %v3088, 1.442695
        %v3090 = vpow.pop %v3089
        %v3091 = vadd.f32 %v3090, 1.0
        %v3092 = vrcp.pop %v3091
        %v3093 = vmul.f32 1.0, %v3092
        %v3094 = vxor.u32 %v3080, 2147483648
        %v3095 = vmul.f32 %v3094, 1.442695
        %v3096 = vpow.pop %v3095
        %v3097 = vadd.f32 %v3096, 1.0
        %v3098 = vrcp.pop %v3097
        %v3099 = vmul.f32 1.0, %v3098
        %v3100 = vtanh.pop %v3081
        %v3101 = vmul.f32 %v3093, %v2795
        %v3102 = vmul.f32 %v3087, %v3100
        %v3103 = vadd.f32 %v3101, %v3102
        %v3104 = vtanh.pop %v3103
        %v3105 = vmul.f32 %v3099, %v3104
        %v3106 = vpack.c.bf16 %v3105, %v3105
        %3107 = vst [vmem:[%s331 + $0x1c] sm:$0xf] %v3106
        %3108 = vst [vmem:[#allocation10] sm:$0xff] %v3105
        %3109 = vst [vmem:[#allocation12] sm:$0xff] %v3103
        %s3110 = sand.u32 %s165, 1
        %s3111 = scalar_lea.sflag [#allocation5], %s3110
        %s3112 = sand.u32 %s165, 1
        %s3113 = smul.addr %s3112, 32
        %s3114 = scalar_lea.vmem [#allocation9], %s3113
        // Predicated region
        $region61: #{tpu_custom_call.1} parent=43 // pred_check
          %p3115 = pneg %p175
        $region62: #{tpu_custom_call.1} parent=43 // pred_check_branch
          %3117 = sbr.rel (%p3115) target = $region64
        $region63: #{tpu_custom_call.1} parent=43 // pred_region
          %s3118 = smul.u32 8, %s26
          %s3120 = ssub.s32 512, 512
          %3121 = vsyncadd %s3111, %s3120
          %s3122 = smul.addr %s3118, 64
          %s3123 = scalar_lea.hbm %s6, %s3122
          %s3124 = sshll.u32 %s3114, 4
          %s3125 = int_to_ptr.vmem [resolvable:$true] %s3124
          %3130 = dma.vmem_to_hbm [thread:$0]  %s3125, 512, %s3123, %s3111, 64, 64, 4
        $region64: #{tpu_custom_call.1} parent=43 // pred_fallthru
          _
        // Predicated region
        $region65: #{tpu_custom_call.1} parent=43 // pred_check
          %p3131 = pneg %p196
        $region66: #{tpu_custom_call.1} parent=43 // pred_check_branch
          %3133 = sbr.rel (%p3131) target = $region68
        $region67: #{tpu_custom_call.1} parent=43 // pred_region
          %s3135 = ssub.s32 128, 128
          %3136 = vsyncadd [#allocation11], %s3135
          %s3138 = sshll.u32 [#allocation10], 4
          %s3139 = int_to_ptr.vmem [resolvable:$true] %s3138
          %3141 = dma.vmem_to_hbm [thread:$0]  %s3139, 128, %s7, [#allocation11]
        $region68: #{tpu_custom_call.1} parent=43 // pred_fallthru
          _
        // Predicated region
        $region69: #{tpu_custom_call.1} parent=43 // pred_check
          %p3142 = pneg %p217
        $region70: #{tpu_custom_call.1} parent=43 // pred_check_branch
          %3144 = sbr.rel (%p3142) target = $region72
        $region71: #{tpu_custom_call.1} parent=43 // pred_region
          %s3146 = ssub.s32 128, 128
          %3147 = vsyncadd [#allocation11], %s3146
          %s3149 = sshll.u32 [#allocation12], 4
          %s3150 = int_to_ptr.vmem [resolvable:$true] %s3149
          %3152 = dma.vmem_to_hbm [thread:$0]  %s3150, 128, %s8, [#allocation11]
        $region72: #{tpu_custom_call.1} parent=43 // pred_fallthru
          _
        // Predicated region
        $region73: #{tpu_custom_call.1} parent=43 // pred_check
          %p3153 = pneg %p196
        $region74: #{tpu_custom_call.1} parent=43 // pred_check_branch
          %3155 = sbr.rel (%p3153) target = $region76
        $region75: #{tpu_custom_call.1} parent=43 // pred_region
          %3156 = dma.done [#allocation11], 128
        $region76: #{tpu_custom_call.1} parent=43 // pred_fallthru
          _
        // Predicated region
        $region77: #{tpu_custom_call.1} parent=43 // pred_check
          %p3157 = pneg %p217
        $region78: #{tpu_custom_call.1} parent=43 // pred_check_branch
          %3159 = sbr.rel (%p3157) target = $region80
        $region79: #{tpu_custom_call.1} parent=43 // pred_region
          %3160 = dma.done [#allocation11], 128
        $region80: #{tpu_custom_call.1} parent=43 // pred_fallthru
          _
      $region44: #{tpu_custom_call.1} parent=5 // pred_fallthru
        _
      %p3161 = scmp.le.s32.totalorder 2, %s21
      // Predicated region
      $region81: #{tpu_custom_call.1} parent=5 // pred_check
        %p3162 = pneg %p3161
      $region82: #{tpu_custom_call.1} parent=5 // pred_check_branch
        %3164 = sbr.rel (%p3162) target = $region84
      $region83: #{tpu_custom_call.1} parent=5 // pred_region
        %s3165 = ssub.s32 %s21, 2
        // Predicated region
        $region85: #{tpu_custom_call.1} parent=83 // pred_check
          %p3166 = pneg %p181
        $region86: #{tpu_custom_call.1} parent=83 // pred_check_branch
          %3168 = sbr.rel (%p3166) target = $region88
        $region87: #{tpu_custom_call.1} parent=83 // pred_region
          %s3169 = sand.u32 %s166, 1
          %s3170 = scalar_lea.sflag [#allocation5], %s3169
          %s3171 = sand.u32 %s166, 1
          %s3172 = smul.addr %s3171, 32
          %s3173 = scalar_lea.vmem [#allocation9], %s3172
          %3174 = dma.done %s3170, 512
        $region88: #{tpu_custom_call.1} parent=83 // pred_fallthru
          _
      $region84: #{tpu_custom_call.1} parent=5 // pred_fallthru
        _
    $region6: #{tpu_custom_call.1} parent=1 // loop_footer
      %s25 = sadd.s32 1, %s21
    $region7: #{tpu_custom_call.1} parent=1 // loop_footer_branch
      %20 = sbr.rel target = $region3
    $region8: #{tpu_custom_call.1} parent=1 // loop_exit
      _
    %3175 = vsyncpa [#allocation4], 1
    %s3176 = scalar_lea.sflag [#allocation4], 1
    %3177 = vsyncpa %s3176, 1
    %3178 = vsyncpa [#allocation7], 1
    %3179 = vsyncpa [#allocation5], 1
    %s3180 = scalar_lea.sflag [#allocation5], 1
    %3181 = vsyncpa %s3180, 1
    %3182 = vsyncpa [#allocation11], 1

</llo_original>
